<compile_context>
chip_gen: v6e
topology: v6e:2x2x1
jax: 0.10.0
libtpu: 0.0.40
codegen_flags: <defaults>
</compile_context>

<pallas_src>
import functools

import jax
import jax.numpy as jnp
from jax.experimental import pallas as pl
from jax.experimental.pallas import tpu as pltpu


# ----------------------------------------------------------------------------
# Generation-aware tiling / VMEM budget
# ----------------------------------------------------------------------------

def _vmem_capacity():
    try:
        info = pltpu.get_tpu_info()
        for attr in ("vmem_capacity_bytes", "vmem_size_bytes"):
            v = getattr(info, attr, None)
            if v:
                return int(v)
    except Exception:
        pass
    return 64 * 1024 * 1024           # conservative default (v7x-sized)


_VMEM_CAP = _vmem_capacity()
_VMEM_LIMIT = int(min(96 * 1024 * 1024, max(32 * 1024 * 1024, (_VMEM_CAP * 3) // 4)))
_TM_CAP = 1024 if _VMEM_CAP >= 128 * 1024 * 1024 else 512


def _cparams(*sems):
    kwargs = dict(vmem_limit_bytes=_VMEM_LIMIT)
    if sems:
        kwargs["dimension_semantics"] = tuple(sems)
    return pltpu.CompilerParams(**kwargs)


def _round_up(x, m):
    return ((x + m - 1) // m) * m


def _m_tiles(m):
    """Padded M and tile TM (multiple of 128, capped generation-aware)."""
    mp = _round_up(m, 128)
    if mp <= _TM_CAP:
        return mp, mp
    mp = _round_up(m, _TM_CAP)
    return mp, _TM_CAP


# ----------------------------------------------------------------------------
# Pallas kernels (all channel-major / lane-dense outputs)
# ----------------------------------------------------------------------------

def _convT_bias_act_kernel(x_ref, w_ref, b_ref, o_ref, *, act):
    """One M-tile of y = w @ x + b (+activation), y is (cout, TM) lane-dense."""
    y = jnp.dot(w_ref[0], x_ref[0], preferred_element_type=jnp.float32)
    y = y + b_ref[0]                               # (cout, TM) + (cout, 1)
    if act == "leaky":
        y = jnp.where(y >= 0.0, y, 0.2 * y)
    elif act == "sigmoid":
        y = 0.5 * (jnp.tanh(0.5 * y) + 1.0)
    o_ref[0] = y.astype(o_ref.dtype)


def _convT_bn_lrelu_fused_kernel(x_ref, w_ref, g_ref, be_ref, o_ref, *, m_true):
    """Conv + BatchNorm(batch stats) + LeakyReLU fused (whole M in one tile)."""
    y = jnp.dot(w_ref[0], x_ref[0], preferred_element_type=jnp.float32)  # (cout, Mp)
    inv_m = 1.0 / m_true
    mean = jnp.sum(y, axis=1, keepdims=True) * inv_m
    lane = jax.lax.broadcasted_iota(jnp.int32, y.shape, 1)
    yc = jnp.where(lane < m_true, y - mean, 0.0)   # centered, padding masked
    var = jnp.sum(yc * yc, axis=1, keepdims=True) * inv_m
    scale = g_ref[0] * jax.lax.rsqrt(var + 1e-5)
    ybn = yc * scale + be_ref[0]
    o_ref[0] = jnp.where(ybn >= 0.0, ybn, 0.2 * ybn).astype(o_ref.dtype)


def _convT_stats_kernel(x_ref, w_ref, y_ref, s1_ref, s2_ref):
    """Pass 1 of the nM>1 fallback: matmul + per-channel sum / sumsq accum."""
    i = pl.program_id(1)
    y = jnp.dot(w_ref[0], x_ref[0], preferred_element_type=jnp.float32)

    @pl.when(i == 0)
    def _():
        s1_ref[...] = jnp.zeros_like(s1_ref)
        s2_ref[...] = jnp.zeros_like(s2_ref)

    s1_ref[0] += jnp.sum(y, axis=1, keepdims=True)
    s2_ref[0] += jnp.sum(y * y, axis=1, keepdims=True)
    y_ref[0] = y.astype(y_ref.dtype)


def _bnT_lrelu_kernel(y_ref, sc_ref, sh_ref, o_ref):
    """Pass 2 of the fallback: per-channel affine + LeakyReLU(0.2)."""
    y = y_ref[0].astype(jnp.float32) * sc_ref[0] + sh_ref[0]
    o_ref[0] = jnp.where(y >= 0.0, y, 0.2 * y).astype(o_ref.dtype)


def _pam_kernel(x_ref, w_ref, b_ref, gm_ref, o_ref, *, c8, n, nb):
    """Position attention for one stream; x channel-major (C, B*N)."""
    s = pl.program_id(0)
    x = x_ref[0]                                                     # (C, B*N) bf16
    qkv = jnp.dot(w_ref[0], x, preferred_element_type=jnp.float32) + b_ref[0]
    outs = []
    for bi in range(nb):                                             # static batch loop
        lo, hi = bi * n, (bi + 1) * n
        q = qkv[:c8, lo:hi]                                          # (c8, N)
        k = qkv[c8:2 * c8, lo:hi]                                    # (c8, N)
        v = qkv[2 * c8:, lo:hi]                                      # (C,  N)
        energy = jax.lax.dot_general(                                # q^T k -> (N, N)
            q.astype(jnp.bfloat16), k.astype(jnp.bfloat16),
            (((0,), (0,)), ((), ())), preferred_element_type=jnp.float32)
        m = jnp.max(energy, axis=-1, keepdims=True)
        e = jnp.exp(energy - m)
        att = e * pl.reciprocal(jnp.sum(e, axis=-1, keepdims=True), approx=True)
        out = jax.lax.dot_general(                                   # v att^T -> (C, N)
            v.astype(jnp.bfloat16), att.astype(jnp.bfloat16),
            (((1,), (1,)), ((), ())), preferred_element_type=jnp.float32)
        outs.append(out)
    out_all = outs[0] if nb == 1 else jnp.concatenate(outs, axis=1)  # (C, B*N)
    o_ref[0] = (gm_ref[s, 0] * out_all + x.astype(jnp.float32)).astype(o_ref.dtype)


def _saT_kernel(w_ref, p_ref, x_ref, o_ref):
    """Fused spatial attention: x * sigmoid(w @ patches); (1,TM) map stays in VMEM."""
    att = jnp.dot(w_ref[0], p_ref[0], preferred_element_type=jnp.float32)  # (1, TM)
    scale = 0.5 * (jnp.tanh(0.5 * att) + 1.0)
    o_ref[0] = (x_ref[0].astype(jnp.float32) * scale).astype(o_ref.dtype)


def _ca_kernel(x_ref, w1_ref, w2_ref, o_ref, *, hw, nb):
    """CBAM channel attention, channel-major (2C, Mp), per-batch masked pooling."""
    x = x_ref[...].astype(jnp.float32)                               # (2C, Mp)
    lane = jax.lax.broadcasted_iota(jnp.int32, x.shape, 1)
    avg_cols, max_cols = [], []
    for bi in range(nb):
        in_b = (lane >= bi * hw) & (lane < (bi + 1) * hw)
        avg_cols.append(jnp.sum(jnp.where(in_b, x, 0.0), axis=1, keepdims=True)
                        * (1.0 / hw))
        max_cols.append(jnp.max(jnp.where(in_b, x, -jnp.inf), axis=1, keepdims=True))
    avg = avg_cols[0] if nb == 1 else jnp.concatenate(avg_cols, axis=1)  # (2C, B)
    mx = max_cols[0] if nb == 1 else jnp.concatenate(max_cols, axis=1)

    def fc(v):
        h = jnp.maximum(jnp.dot(w1_ref[...], v, preferred_element_type=jnp.float32), 0.0)
        return jnp.dot(w2_ref[...], h, preferred_element_type=jnp.float32)

    att = 0.5 * (jnp.tanh(0.5 * (fc(avg) + fc(mx))) + 1.0)           # (2C, B)
    scale = jnp.zeros_like(x)
    for bi in range(nb):
        in_b = (lane >= bi * hw) & (lane < (bi + 1) * hw)
        scale = jnp.where(in_b, att[:, bi:bi + 1], scale)
    o_ref[...] = (x * scale).astype(o_ref.dtype)


def _fuse_kernel(w_ref, x_ref, b_ref, o_ref):
    """Final 1-out-channel conv: (1,K)@(K,TM) -> lane-dense (1,TM); bias in SMEM."""
    y = jnp.dot(w_ref[...], x_ref[...], preferred_element_type=jnp.float32)
    o_ref[...] = y + b_ref[0, 0]


# ----------------------------------------------------------------------------
# Glue / wrappers (channel-major throughout)
# ----------------------------------------------------------------------------

def reflect_pad_cm(x, p):
    """x: (C, B, H, W) -> reflect-padded spatially."""
    return jnp.pad(x, ((0, 0), (0, 0), (p, p), (p, p)), mode="reflect")


def im2col_cm(x, kh, kw, stride):
    """x: padded (C, B, Hp, Wp) -> (kh*kw*C, B*Ho*Wo) patches, rows ordered (i,j,c).

    TODO(synk): replace with in-kernel windowed reads (sum of shifted matmuls)
    to kill the kh*kw x HBM traffic inflation at real resolutions.
    """
    C, B, Hp, Wp = x.shape
    ho = (Hp - kh) // stride + 1
    wo = (Wp - kw) // stride + 1
    rows = []
    for i in range(kh):
        for j in range(kw):
            rows.append(x[:, :, i:i + (ho - 1) * stride + 1:stride,
                             j:j + (wo - 1) * stride + 1:stride])
    patches = jnp.concatenate(rows, axis=0)                 # (kh*kw*C, B, ho, wo)
    return patches.reshape(kh * kw * C, B * ho * wo), (B, ho, wo)


def init_conv_pair(x2, x1, p):
    """Both init convs (stride 2, reflect pad, LeakyReLU) in ONE pallas_call."""
    p2, (B, ho, wo) = im2col_cm(reflect_pad_cm(x2, 1), 4, 4, 2)      # (K2, M)
    p1, _ = im2col_cm(reflect_pad_cm(x1, 1), 4, 4, 2)                # (K1, M)
    K2, M = p2.shape
    K1 = p1.shape[0]
    K = max(K2, K1)
    Mp, TM = _m_tiles(M)
    nM = Mp // TM
    cout = p["s2_init_w"].shape[0]

    def prep(patch, k):
        return jnp.pad(patch, ((0, K - k), (0, Mp - M)))

    x = jnp.stack([prep(p2, K2), prep(p1, K1)]).astype(jnp.bfloat16)          # (2,K,Mp)
    w = jnp.stack([jnp.pad(p["s2_init_w"], ((0, 0), (0, K - K2))),
                   jnp.pad(p["s1_init_w"], ((0, 0), (0, K - K1)))]
                  ).astype(jnp.bfloat16)                                       # (2,cout,K)
    b = jnp.stack([p["s2_init_b"], p["s1_init_b"]])                            # (2,cout,1)

    y = pl.pallas_call(
        functools.partial(_convT_bias_act_kernel, act="leaky"),
        out_shape=jax.ShapeDtypeStruct((2, cout, Mp), jnp.bfloat16),
        grid=(2, nM),
        in_specs=[pl.BlockSpec((1, K, TM), lambda s, i: (s, 0, i)),
                  pl.BlockSpec((1, cout, K), lambda s, i: (s, 0, 0)),
                  pl.BlockSpec((1, cout, 1), lambda s, i: (s, 0, 0))],
        out_specs=pl.BlockSpec((1, cout, TM), lambda s, i: (s, 0, i)),
        compiler_params=_cparams("parallel", "parallel"),
    )(x, w, b)
    return (y[0, :, :M].reshape(cout, B, ho, wo),
            y[1, :, :M].reshape(cout, B, ho, wo))


def conv_bn_lrelu_pair(p2, p1, blk2, blk1):
    """Conv -> BatchNorm(batch stats) -> LeakyReLU for both streams at once."""
    K, M = p2.shape
    cout = blk2["w"].shape[0]
    Mp, TM = _m_tiles(M)
    nM = Mp // TM
    x = jnp.stack([jnp.pad(p2, ((0, 0), (0, Mp - M))),
                   jnp.pad(p1, ((0, 0), (0, Mp - M)))]).astype(jnp.bfloat16)   # (2,K,Mp)
    w = jnp.stack([blk2["w"], blk1["w"]]).astype(jnp.bfloat16)                 # (2,cout,K)
    gamma = jnp.stack([blk2["gamma"], blk1["gamma"]])                          # (2,cout,1)
    beta = jnp.stack([blk2["beta"], blk1["beta"]])

    if nM == 1:
        out = pl.pallas_call(
            functools.partial(_convT_bn_lrelu_fused_kernel, m_true=int(M)),
            out_shape=jax.ShapeDtypeStruct((2, cout, Mp), jnp.bfloat16),
            grid=(2,),
            in_specs=[pl.BlockSpec((1, K, Mp), lambda s: (s, 0, 0)),
                      pl.BlockSpec((1, cout, K), lambda s: (s, 0, 0)),
                      pl.BlockSpec((1, cout, 1), lambda s: (s, 0, 0)),
                      pl.BlockSpec((1, cout, 1), lambda s: (s, 0, 0))],
            out_specs=pl.BlockSpec((1, cout, Mp), lambda s: (s, 0, 0)),
            compiler_params=_cparams("parallel"),
        )(x, w, gamma, beta)
        return out[0, :, :M], out[1, :, :M]

    # General (nM > 1) fallback: two passes, bf16 intermediate y.
    y, ssum, ssq = pl.pallas_call(
        _convT_stats_kernel,
        out_shape=(jax.ShapeDtypeStruct((2, cout, Mp), jnp.bfloat16),
                   jax.ShapeDtypeStruct((2, cout, 1), jnp.float32),
                   jax.ShapeDtypeStruct((2, cout, 1), jnp.float32)),
        grid=(2, nM),
        in_specs=[pl.BlockSpec((1, K, TM), lambda s, i: (s, 0, i)),
                  pl.BlockSpec((1, cout, K), lambda s, i: (s, 0, 0))],
        out_specs=(pl.BlockSpec((1, cout, TM), lambda s, i: (s, 0, i)),
                   pl.BlockSpec((1, cout, 1), lambda s, i: (s, 0, 0)),
                   pl.BlockSpec((1, cout, 1), lambda s, i: (s, 0, 0))),
        compiler_params=_cparams("parallel", "arbitrary"),
    )(x, w)
    mean = ssum / float(M)
    var = ssq / float(M) - mean * mean   # TODO(synk): shifted sumsq for robustness
    scale = gamma * jax.lax.rsqrt(var + 1e-5)
    shift = beta - mean * scale
    out = pl.pallas_call(
        _bnT_lrelu_kernel,
        out_shape=jax.ShapeDtypeStruct((2, cout, Mp), jnp.bfloat16),
        grid=(2, nM),
        in_specs=[pl.BlockSpec((1, cout, TM), lambda s, i: (s, 0, i)),
                  pl.BlockSpec((1, cout, 1), lambda s, i: (s, 0, 0)),
                  pl.BlockSpec((1, cout, 1), lambda s, i: (s, 0, 0))],
        out_specs=pl.BlockSpec((1, cout, TM), lambda s, i: (s, 0, i)),
        compiler_params=_cparams("parallel", "parallel"),
    )(y, scale, shift)
    return out[0, :, :M], out[1, :, :M]


def middle_pair(x2, x1, blocks2, blocks1):
    for blk2, blk1 in zip(blocks2, blocks1):
        stride = blk2["stride"]
        p2, (B, ho, wo) = im2col_cm(reflect_pad_cm(x2, 1), 4, 4, stride)
        p1, _ = im2col_cm(reflect_pad_cm(x1, 1), 4, 4, stride)
        y2, y1 = conv_bn_lrelu_pair(p2, p1, blk2, blk1)
        cout = blk2["w"].shape[0]
        x2 = y2.reshape(cout, B, ho, wo)
        x1 = y1.reshape(cout, B, ho, wo)
    return x2, x1


def pam_pair(x2, x1, pp2, pp1):
    """Position attention for both streams; one block per stream (batch folded)."""
    C, B, H, W = x2.shape
    N = H * W
    c8 = pp2["wq"].shape[0]
    c8p = max(c8, 8)                       # zero-pad q/k rows to 8 (layout friendly)

    def fuse_qkv(pp):
        wq = jnp.pad(pp["wq"], ((0, c8p - c8), (0, 0)))
        wk = jnp.pad(pp["wk"], ((0, c8p - c8), (0, 0)))
        bq = jnp.pad(pp["bq"], ((0, c8p - c8), (0, 0)))
        bk = jnp.pad(pp["bk"], ((0, c8p - c8), (0, 0)))
        return (jnp.concatenate([wq, wk, pp["wv"]], axis=0),
                jnp.concatenate([bq, bk, pp["bv"]], axis=0))

    w2f, b2f = fuse_qkv(pp2)
    w1f, b1f = fuse_qkv(pp1)
    Ct = 2 * c8p + C
    w = jnp.stack([w2f, w1f]).astype(jnp.bfloat16)                   # (2, Ct, C)
    b = jnp.stack([b2f, b1f])                                        # (2, Ct, 1)
    gm = jnp.concatenate([pp2["gamma"], pp1["gamma"]], axis=0)       # (2, 1)
    xs = jnp.stack([x2.reshape(C, B * N),
                    x1.reshape(C, B * N)]).astype(jnp.bfloat16)      # (2, C, B*N)
    BN = B * N

    # TODO(synk): KV-tiled online-softmax for large N (v7x 64 MiB VMEM budget).
    out = pl.pallas_call(
        functools.partial(_pam_kernel, c8=c8p, n=N, nb=B),
        out_shape=jax.ShapeDtypeStruct((2, C, BN), jnp.bfloat16),
        grid=(2,),
        in_specs=[pl.BlockSpec((1, C, BN), lambda s: (s, 0, 0)),
                  pl.BlockSpec((1, Ct, C), lambda s: (s, 0, 0)),
                  pl.BlockSpec((1, Ct, 1), lambda s: (s, 0, 0)),
                  pl.BlockSpec(memory_space=pltpu.MemorySpace.SMEM)],
        out_specs=pl.BlockSpec((1, C, BN), lambda s: (s, 0, 0)),
        compiler_params=_cparams("parallel"),
    )(xs, w, b, gm)
    return out[0].reshape(C, B, H, W), out[1].reshape(C, B, H, W)


def spatial_attention_pair(x2, x1, w2, w1):
    C, B, H, W = x2.shape
    M = B * H * W
    Mp, TM = _m_tiles(M)
    nM = Mp // TM

    def pooled_patches(x):
        # Channel mean/max pooling + 7x7 patch build left to XLA (tiny glue).
        xf = x.astype(jnp.float32)
        avg = jnp.mean(xf, axis=0, keepdims=True)
        mx = jnp.max(xf, axis=0, keepdims=True)
        pooled = jnp.concatenate([avg, mx], axis=0)                  # (2, B, H, W)
        pooled = jnp.pad(pooled, ((0, 0), (0, 0), (3, 3), (3, 3)))   # zero pad
        pch, _ = im2col_cm(pooled, 7, 7, 1)                          # (98, M)
        return jnp.pad(pch, ((0, 0), (0, Mp - M)))

    patches = jnp.stack([pooled_patches(x2),
                         pooled_patches(x1)]).astype(jnp.bfloat16)   # (2, 98, Mp)
    wsa = jnp.stack([w2, w1]).astype(jnp.bfloat16)                   # (2, 1, 98)
    xf = jnp.stack([jnp.pad(x2.reshape(C, M), ((0, 0), (0, Mp - M))),
                    jnp.pad(x1.reshape(C, M), ((0, 0), (0, Mp - M)))]
                   ).astype(jnp.bfloat16)                            # (2, C, Mp)
    K = patches.shape[1]

    out = pl.pallas_call(
        _saT_kernel,
        out_shape=jax.ShapeDtypeStruct((2, C, Mp), jnp.bfloat16),
        grid=(2, nM),
        in_specs=[pl.BlockSpec((1, 1, K), lambda s, i: (s, 0, 0)),
                  pl.BlockSpec((1, K, TM), lambda s, i: (s, 0, i)),
                  pl.BlockSpec((1, C, TM), lambda s, i: (s, 0, i))],
        out_specs=pl.BlockSpec((1, C, TM), lambda s, i: (s, 0, i)),
        compiler_params=_cparams("parallel", "parallel"),
    )(wsa, patches, xf)
    return (out[0, :, :M].reshape(C, B, H, W),
            out[1, :, :M].reshape(C, B, H, W))


def channel_attention(x, w1, w2):
    """x: (2C, B, H, W) channel-major; single whole-array kernel (tiny stage)."""
    C2, B, H, W = x.shape
    HW = H * W
    M = B * HW
    Mp = _round_up(M, 128)
    xf = jnp.pad(x.reshape(C2, M), ((0, 0), (0, Mp - M)))
    out = pl.pallas_call(
        functools.partial(_ca_kernel, hw=HW, nb=B),
        out_shape=jax.ShapeDtypeStruct((C2, Mp), jnp.bfloat16),
        compiler_params=_cparams(),
    )(xf, w1.astype(jnp.float32), w2.astype(jnp.float32))
    return out[:, :M].reshape(C2, B, H, W)


def fuse_conv(x, w, b):
    """Final Conv2d(2*fl -> 1, 4x4, stride 1, reflect pad); lane-dense output."""
    patches, (B, ho, wo) = im2col_cm(reflect_pad_cm(x, 1), 4, 4, 1)  # (K, M)
    K, M = patches.shape
    Mp, TM = _m_tiles(M)
    nM = Mp // TM
    xp = jnp.pad(patches, ((0, 0), (0, Mp - M))).astype(jnp.bfloat16)
    wt = w.astype(jnp.bfloat16)                                      # (1, K)
    y = pl.pallas_call(
        _fuse_kernel,
        out_shape=jax.ShapeDtypeStruct((1, Mp), jnp.float32),
        grid=(nM,),
        in_specs=[pl.BlockSpec((1, K), lambda i: (0, 0)),
                  pl.BlockSpec((K, TM), lambda i: (0, i)),
                  pl.BlockSpec(memory_space=pltpu.MemorySpace.SMEM)],
        out_specs=pl.BlockSpec((1, TM), lambda i: (0, i)),
        compiler_params=_cparams("parallel"),
    )(wt, xp, b)
    return y[0, :M].reshape(B, ho, wo)[:, None, :, :]                # NCHW (B,1,ho,wo)


# ----------------------------------------------------------------------------
# Parameter init + full forward
# ----------------------------------------------------------------------------

class _KeyGen:
    def __init__(self, key):
        self._key = key

    def __call__(self):
        self._key, sub = jax.random.split(self._key)
        return sub


def init_params(key, s2_in_channels=7, s1_in_channels=1, s1_out_channels=1,
                features=(16, 16)):
    kg = _KeyGen(key)

    def nrm(shape, scale=0.05):
        return (scale * jax.random.normal(kg(), shape)).astype(jnp.float32)

    s2c = s2_in_channels + s1_out_channels
    s1c = s1_in_channels + s1_out_channels
    f0, fl = features[0], features[-1]
    c8 = max(f0 // 8, 1)

    # Weights are stored transposed / channel-major: conv w is (cout, kh*kw*cin).
    # (PyTorch (cout, cin, kh, kw) checkpoints would need an explicit repack.)
    p = {
        "s2_init_w": nrm((f0, 4 * 4 * s2c)), "s2_init_b": nrm((f0, 1)),
        "s1_init_w": nrm((f0, 4 * 4 * s1c)), "s1_init_b": nrm((f0, 1)),
    }
    for name in ("s2_pam", "s1_pam"):
        p[name] = {
            "wq": nrm((c8, f0)), "bq": nrm((c8, 1)),
            "wk": nrm((c8, f0)), "bk": nrm((c8, 1)),
            "wv": nrm((f0, f0)), "bv": nrm((f0, 1)),
            "gamma": jnp.full((1, 1), 0.1, jnp.float32),
        }
    for name in ("mid_s2", "mid_s1"):
        blocks, in_c = [], f0
        for feat in features[1:]:
            blocks.append({
                "w": nrm((feat, 4 * 4 * in_c)),
                "gamma": jnp.ones((feat, 1), jnp.float32),
                "beta": jnp.zeros((feat, 1), jnp.float32),
                "stride": 1 if feat == features[-1] else 2,
            })
            in_c = feat
        p[name] = blocks
    p["sa_s2_w"] = nrm((1, 7 * 7 * 2))
    p["sa_s1_w"] = nrm((1, 7 * 7 * 2))
    hidden = max((2 * fl) // 8, 1)
    p["ca_w1"] = nrm((hidden, 2 * fl))
    p["ca_w2"] = nrm((2 * fl, hidden))
    p["fuse_w"] = nrm((1, 4 * 4 * 2 * fl))
    p["fuse_b"] = nrm((1, 1))
    return p


def discriminator_forward(p, s2_in, s1_in, s1_out):
    # NCHW inputs -> channel-major (C, B, H, W) f32.
    cm = lambda t: jnp.transpose(t, (1, 0, 2, 3)).astype(jnp.float32)
    s2 = jnp.concatenate([cm(s2_in), cm(s1_out)], axis=0)
    s1 = jnp.concatenate([cm(s1_in), cm(s1_out)], axis=0)

    s2, s1 = init_conv_pair(s2, s1, p)
    s2, s1 = pam_pair(s2, s1, p["s2_pam"], p["s1_pam"])

    s2, s1 = middle_pair(s2, s1, p["mid_s2"], p["mid_s1"])
    # reference forward applies `middle` a second time before spatial attention
    s2, s1 = middle_pair(s2, s1, p["mid_s2"], p["mid_s1"])
    s2, s1 = spatial_attention_pair(s2, s1, p["sa_s2_w"], p["sa_s1_w"])

    concat = jnp.concatenate([s2, s1], axis=0)          # channel concat
    concat = channel_attention(concat, p["ca_w1"], p["ca_w2"])
    return fuse_conv(concat, p["fuse_w"], p["fuse_b"])


# ----------------------------------------------------------------------------

if __name__ == "__main__":
    key = jax.random.PRNGKey(0)
    k_param, k1, k2, k3 = jax.random.split(key, 4)

    B, H, W = 2, 16, 16
    s2_in = jax.random.normal(k1, (B, 7, H, W), dtype=jnp.float32)
    s1_in = jax.random.normal(k2, (B, 1, H, W), dtype=jnp.float32)
    s1_out = jax.random.normal(k3, (B, 1, H, W), dtype=jnp.float32)

    params = init_params(k_param, features=(16, 16))

    fwd = jax.jit(lambda a, b, c: discriminator_forward(params, a, b, c))
    out = fwd(s2_in, s1_in, s1_out)
    jax.block_until_ready(out)

    assert out.shape == (B, 1, 5, 5), out.shape
    assert bool(jnp.all(jnp.isfinite(out)))
    print("KERNEL_OK")
</pallas_src>

<mosaic_0001>
module attributes {stable_mosaic.version = 11 : i64} {
  func.func @_convT_bias_act_kernel(%arg0: i32, %arg1: i32, %arg2: memref<1x128x128xbf16, #tpu.memory_space<vmem>>, %arg3: memref<1x16x128xbf16, #tpu.memory_space<vmem>>, %arg4: memref<1x16x1xf32, #tpu.memory_space<vmem>>, %arg5: memref<1x16x128xbf16, #tpu.memory_space<vmem>>) attributes {dimension_semantics = [#tpu.dimension_semantics<parallel>, #tpu.dimension_semantics<parallel>], iteration_bounds = array<i64: 2, 1>, scalar_prefetch = 0 : i64, scratch_operands = 0 : i64, tpu.core_type = #tpu.core_type<tc>, window_params = [{transform_indices = @transform_0, window_bounds = array<i64: 1, 128, 128>}, {transform_indices = @transform_1, window_bounds = array<i64: 1, 16, 128>}, {transform_indices = @transform_2, window_bounds = array<i64: 1, 16, 1>}, {transform_indices = @transform_3, window_bounds = array<i64: 1, 16, 128>}]} {
    %c0 = arith.constant 0 : index
    %c0_0 = arith.constant 0 : index
    %c0_1 = arith.constant 0 : index
    %0 = vector.load %arg3[%c0, %c0_0, %c0_1] : memref<1x16x128xbf16, #tpu.memory_space<vmem>>, vector<1x16x128xbf16>
    %1 = vector.shape_cast %0 : vector<1x16x128xbf16> to vector<16x128xbf16>
    %c0_2 = arith.constant 0 : index
    %c0_3 = arith.constant 0 : index
    %c0_4 = arith.constant 0 : index
    %2 = vector.load %arg2[%c0_2, %c0_3, %c0_4] : memref<1x128x128xbf16, #tpu.memory_space<vmem>>, vector<1x128x128xbf16>
    %3 = vector.shape_cast %2 : vector<1x128x128xbf16> to vector<128x128xbf16>
    %cst = arith.constant dense<0.000000e+00> : vector<16x128xf32>
    %4 = tpu.matmul %1, %3, %cst {dimension_numbers = #tpu.dot_dimension_numbers<[1], [0], [0], [1], [0, 0, 1, 1], [], []>} : vector<16x128xbf16>, vector<128x128xbf16>, vector<16x128xf32> -> vector<16x128xf32>
    %c0_5 = arith.constant 0 : index
    %c0_6 = arith.constant 0 : index
    %c0_7 = arith.constant 0 : index
    %5 = vector.load %arg4[%c0_5, %c0_6, %c0_7] : memref<1x16x1xf32, #tpu.memory_space<vmem>>, vector<1x16x1xf32>
    %6 = vector.shape_cast %5 : vector<1x16x1xf32> to vector<16x1xf32>
    %7 = vector.broadcast %6 : vector<16x1xf32> to vector<16x128xf32>
    %8 = arith.addf %4, %7 : vector<16x128xf32>
    %cst_8 = arith.constant 0.000000e+00 : f32
    %9 = vector.broadcast %cst_8 : f32 to vector<16x128xf32>
    %10 = arith.cmpf oge, %8, %9 : vector<16x128xf32>
    %cst_9 = arith.constant 2.000000e-01 : f32
    %11 = vector.broadcast %cst_9 : f32 to vector<16x128xf32>
    %12 = arith.mulf %11, %8 : vector<16x128xf32>
    %13 = arith.select %10, %8, %12 : vector<16x128xi1>, vector<16x128xf32>
    %14 = arith.truncf %13 : vector<16x128xf32> to vector<16x128xbf16>
    %c0_10 = arith.constant 0 : index
    %c0_11 = arith.constant 0 : index
    %c0_12 = arith.constant 0 : index
    %15 = vector.load %arg5[%c0_10, %c0_11, %c0_12] : memref<1x16x128xbf16, #tpu.memory_space<vmem>>, vector<1x16x128xbf16>
    %16 = vector.shape_cast %15 : vector<1x16x128xbf16> to vector<16x128xbf16>
    %17 = vector.shape_cast %14 : vector<16x128xbf16> to vector<1x16x128xbf16>
    tpu.vector_store %arg5[%c0_10, %c0_11, %c0_12], %17 {strides = array<i32>} : memref<1x16x128xbf16, #tpu.memory_space<vmem>>, vector<1x16x128xbf16>,
    return
  }
  func.func @transform_0(%arg0: i32, %arg1: i32) -> (i32, i32, i32) {
    %c0_i32 = arith.constant 0 : i32
    %c0_i32_0 = arith.constant 0 : i32
    return %arg0, %c0_i32, %arg1 : i32, i32, i32
  }
  func.func @transform_1(%arg0: i32, %arg1: i32) -> (i32, i32, i32) {
    %c0_i32 = arith.constant 0 : i32
    %c0_i32_0 = arith.constant 0 : i32
    %c0_i32_1 = arith.constant 0 : i32
    return %arg0, %c0_i32, %c0_i32_0 : i32, i32, i32
  }
  func.func @transform_2(%arg0: i32, %arg1: i32) -> (i32, i32, i32) {
    %c0_i32 = arith.constant 0 : i32
    %c0_i32_0 = arith.constant 0 : i32
    %c0_i32_1 = arith.constant 0 : i32
    return %arg0, %c0_i32, %c0_i32_0 : i32, i32, i32
  }
  func.func @transform_3(%arg0: i32, %arg1: i32) -> (i32, i32, i32) {
    %c0_i32 = arith.constant 0 : i32
    %c0_i32_0 = arith.constant 0 : i32
    return %arg0, %c0_i32, %arg1 : i32, i32, i32
  }
}

module attributes {stable_mosaic.version = 11 : i64} {
  func.func @_pam_kernel(%arg0: i32, %arg1: memref<1x16x128xbf16, #tpu.memory_space<vmem>>, %arg2: memref<1x32x16xbf16, #tpu.memory_space<vmem>>, %arg3: memref<1x32x1xf32, #tpu.memory_space<vmem>>, %arg4: memref<2x1xf32, #tpu.memory_space<smem>>, %arg5: memref<1x16x128xbf16, #tpu.memory_space<vmem>>) attributes {dimension_semantics = [#tpu.dimension_semantics<parallel>], iteration_bounds = array<i64: 2>, scalar_prefetch = 0 : i64, scratch_operands = 0 : i64, tpu.core_type = #tpu.core_type<tc>, window_params = [{transform_indices = @transform_0, window_bounds = array<i64: 1, 16, 128>}, {transform_indices = @transform_1, window_bounds = array<i64: 1, 32, 16>}, {transform_indices = @transform_2, window_bounds = array<i64: 1, 32, 1>}, {transform_indices = @transform_3, window_bounds = array<i64: 2, 1>}, {transform_indices = @transform_4, window_bounds = array<i64: 1, 16, 128>}]} {
    %c0 = arith.constant 0 : index
    %c0_0 = arith.constant 0 : index
    %c0_1 = arith.constant 0 : index
    %0 = vector.load %arg1[%c0, %c0_0, %c0_1] : memref<1x16x128xbf16, #tpu.memory_space<vmem>>, vector<1x16x128xbf16>
    %1 = vector.shape_cast %0 : vector<1x16x128xbf16> to vector<16x128xbf16>
    %c0_2 = arith.constant 0 : index
    %c0_3 = arith.constant 0 : index
    %c0_4 = arith.constant 0 : index
    %2 = vector.load %arg2[%c0_2, %c0_3, %c0_4] : memref<1x32x16xbf16, #tpu.memory_space<vmem>>, vector<1x32x16xbf16>
    %3 = vector.shape_cast %2 : vector<1x32x16xbf16> to vector<32x16xbf16>
    %cst = arith.constant dense<0.000000e+00> : vector<32x128xf32>
    %4 = tpu.matmul %3, %1, %cst {dimension_numbers = #tpu.dot_dimension_numbers<[1], [0], [0], [1], [0, 0, 1, 1], [], []>} : vector<32x16xbf16>, vector<16x128xbf16>, vector<32x128xf32> -> vector<32x128xf32>
    %c0_5 = arith.constant 0 : index
    %c0_6 = arith.constant 0 : index
    %c0_7 = arith.constant 0 : index
    %5 = vector.load %arg3[%c0_5, %c0_6, %c0_7] : memref<1x32x1xf32, #tpu.memory_space<vmem>>, vector<1x32x1xf32>
    %6 = vector.shape_cast %5 : vector<1x32x1xf32> to vector<32x1xf32>
    %7 = vector.broadcast %6 : vector<32x1xf32> to vector<32x128xf32>
    %8 = arith.addf %4, %7 : vector<32x128xf32>
    %9 = vector.extract_strided_slice %8 {offsets = [0, 0], sizes = [8, 64], strides = [1, 1]} : vector<32x128xf32> to vector<8x64xf32>
    %10 = vector.extract_strided_slice %8 {offsets = [8, 0], sizes = [8, 64], strides = [1, 1]} : vector<32x128xf32> to vector<8x64xf32>
    %11 = vector.extract_strided_slice %8 {offsets = [16, 0], sizes = [16, 64], strides = [1, 1]} : vector<32x128xf32> to vector<16x64xf32>
    %12 = arith.truncf %9 : vector<8x64xf32> to vector<8x64xbf16>
    %13 = arith.truncf %10 : vector<8x64xf32> to vector<8x64xbf16>
    %cst_8 = arith.constant dense<0.000000e+00> : vector<64x64xf32>
    %14 = tpu.matmul %12, %13, %cst_8 {dimension_numbers = #tpu.dot_dimension_numbers<[0], [0], [1], [1], [0, 1, 1, 1], [], []>} : vector<8x64xbf16>, vector<8x64xbf16>, vector<64x64xf32> -> vector<64x64xf32>
    %cst_9 = arith.constant dense<0xFF800000> : vector<64xf32>
    %15 = vector.multi_reduction <maximumf>, %14, %cst_9 [1] : vector<64x64xf32> to vector<64xf32>
    %16 = vector.shape_cast %15 : vector<64xf32> to vector<64x1xf32>
    %17 = vector.broadcast %16 : vector<64x1xf32> to vector<64x64xf32>
    %18 = arith.subf %14, %17 : vector<64x64xf32>
    %19 = math.exp %18 : vector<64x64xf32>
    %cst_10 = arith.constant dense<0.000000e+00> : vector<64xf32>
    %20 = vector.multi_reduction <add>, %19, %cst_10 [1] : vector<64x64xf32> to vector<64xf32>
    %21 = vector.shape_cast %20 : vector<64xf32> to vector<64x1xf32>
    %22 = tpu.reciprocal %21 {approx = true} : vector<64x1xf32> -> vector<64x1xf32>
    %23 = vector.broadcast %22 : vector<64x1xf32> to vector<64x64xf32>
    %24 = arith.mulf %19, %23 : vector<64x64xf32>
    %25 = arith.truncf %11 : vector<16x64xf32> to vector<16x64xbf16>
    %26 = arith.truncf %24 : vector<64x64xf32> to vector<64x64xbf16>
    %cst_11 = arith.constant dense<0.000000e+00> : vector<16x64xf32>
    %27 = tpu.matmul %25, %26, %cst_11 {dimension_numbers = #tpu.dot_dimension_numbers<[1], [1], [0], [0], [0, 0, 1, 0], [], []>} : vector<16x64xbf16>, vector<64x64xbf16>, vector<16x64xf32> -> vector<16x64xf32>
    %28 = vector.extract_strided_slice %8 {offsets = [0, 64], sizes = [8, 64], strides = [1, 1]} : vector<32x128xf32> to vector<8x64xf32>
    %29 = vector.extract_strided_slice %8 {offsets = [8, 64], sizes = [8, 64], strides = [1, 1]} : vector<32x128xf32> to vector<8x64xf32>
    %30 = vector.extract_strided_slice %8 {offsets = [16, 64], sizes = [16, 64], strides = [1, 1]} : vector<32x128xf32> to vector<16x64xf32>
    %31 = arith.truncf %28 : vector<8x64xf32> to vector<8x64xbf16>
    %32 = arith.truncf %29 : vector<8x64xf32> to vector<8x64xbf16>
    %cst_12 = arith.constant dense<0.000000e+00> : vector<64x64xf32>
    %33 = tpu.matmul %31, %32, %cst_12 {dimension_numbers = #tpu.dot_dimension_numbers<[0], [0], [1], [1], [0, 1, 1, 1], [], []>} : vector<8x64xbf16>, vector<8x64xbf16>, vector<64x64xf32> -> vector<64x64xf32>
    %cst_13 = arith.constant dense<0xFF800000> : vector<64xf32>
    %34 = vector.multi_reduction <maximumf>, %33, %cst_13 [1] : vector<64x64xf32> to vector<64xf32>
    %35 = vector.shape_cast %34 : vector<64xf32> to vector<64x1xf32>
    %36 = vector.broadcast %35 : vector<64x1xf32> to vector<64x64xf32>
    %37 = arith.subf %33, %36 : vector<64x64xf32>
    %38 = math.exp %37 : vector<64x64xf32>
    %cst_14 = arith.constant dense<0.000000e+00> : vector<64xf32>
    %39 = vector.multi_reduction <add>, %38, %cst_14 [1] : vector<64x64xf32> to vector<64xf32>
    %40 = vector.shape_cast %39 : vector<64xf32> to vector<64x1xf32>
    %41 = tpu.reciprocal %40 {approx = true} : vector<64x1xf32> -> vector<64x1xf32>
    %42 = vector.broadcast %41 : vector<64x1xf32> to vector<64x64xf32>
    %43 = arith.mulf %38, %42 : vector<64x64xf32>
    %44 = arith.truncf %30 : vector<16x64xf32> to vector<16x64xbf16>
    %45 = arith.truncf %43 : vector<64x64xf32> to vector<64x64xbf16>
    %cst_15 = arith.constant dense<0.000000e+00> : vector<16x64xf32>
    %46 = tpu.matmul %44, %45, %cst_15 {dimension_numbers = #tpu.dot_dimension_numbers<[1], [1], [0], [0], [0, 0, 1, 0], [], []>} : vector<16x64xbf16>, vector<64x64xbf16>, vector<16x64xf32> -> vector<16x64xf32>
    %47 = tpu.concatenate %27, %46 in 1 : vector<16x64xf32>, vector<16x64xf32> -> vector<16x128xf32>
    %48 = arith.index_cast %arg0 : i32 to index
    %c0_16 = arith.constant 0 : index
    %49 = memref.load %arg4[%48, %c0_16] : memref<2x1xf32, #tpu.memory_space<smem>>
    %50 = vector.broadcast %49 : f32 to vector<16x128xf32>
    %51 = arith.mulf %50, %47 : vector<16x128xf32>
    %52 = arith.extf %1 : vector<16x128xbf16> to vector<16x128xf32>
    %53 = arith.addf %51, %52 : vector<16x128xf32>
    %54 = arith.truncf %53 : vector<16x128xf32> to vector<16x128xbf16>
    %c0_17 = arith.constant 0 : index
    %c0_18 = arith.constant 0 : index
    %c0_19 = arith.constant 0 : index
    %55 = vector.load %arg5[%c0_17, %c0_18, %c0_19] : memref<1x16x128xbf16, #tpu.memory_space<vmem>>, vector<1x16x128xbf16>
    %56 = vector.shape_cast %55 : vector<1x16x128xbf16> to vector<16x128xbf16>
    %57 = vector.shape_cast %54 : vector<16x128xbf16> to vector<1x16x128xbf16>
    tpu.vector_store %arg5[%c0_17, %c0_18, %c0_19], %57 {strides = array<i32>} : memref<1x16x128xbf16, #tpu.memory_space<vmem>>, vector<1x16x128xbf16>,
    return
  }
  func.func @transform_0(%arg0: i32) -> (i32, i32, i32) {
    %c0_i32 = arith.constant 0 : i32
    %c0_i32_0 = arith.constant 0 : i32
    %c0_i32_1 = arith.constant 0 : i32
    return %arg0, %c0_i32, %c0_i32_0 : i32, i32, i32
  }
  func.func @transform_1(%arg0: i32) -> (i32, i32, i32) {
    %c0_i32 = arith.constant 0 : i32
    %c0_i32_0 = arith.constant 0 : i32
    %c0_i32_1 = arith.constant 0 : i32
    return %arg0, %c0_i32, %c0_i32_0 : i32, i32, i32
  }
  func.func @transform_2(%arg0: i32) -> (i32, i32, i32) {
    %c0_i32 = arith.constant 0 : i32
    %c0_i32_0 = arith.constant 0 : i32
    %c0_i32_1 = arith.constant 0 : i32
    return %arg0, %c0_i32, %c0_i32_0 : i32, i32, i32
  }
  func.func @transform_3(%arg0: i32) -> (i32, i32) {
    %c0_i32 = arith.constant 0 : i32
    %c0_i32_0 = arith.constant 0 : i32
    %c0_i32_1 = arith.constant 0 : i32
    return %c0_i32, %c0_i32_0 : i32, i32
  }
  func.func @transform_4(%arg0: i32) -> (i32, i32, i32) {
    %c0_i32 = arith.constant 0 : i32
    %c0_i32_0 = arith.constant 0 : i32
    %c0_i32_1 = arith.constant 0 : i32
    return %arg0, %c0_i32, %c0_i32_0 : i32, i32, i32
  }
}

module attributes {stable_mosaic.version = 11 : i64} {
  func.func @_convT_bn_lrelu_fused_kernel(%arg0: i32, %arg1: memref<1x256x128xbf16, #tpu.memory_space<vmem>>, %arg2: memref<1x16x256xbf16, #tpu.memory_space<vmem>>, %arg3: memref<1x16x1xf32, #tpu.memory_space<vmem>>, %arg4: memref<1x16x1xf32, #tpu.memory_space<vmem>>, %arg5: memref<1x16x128xbf16, #tpu.memory_space<vmem>>) attributes {dimension_semantics = [#tpu.dimension_semantics<parallel>], iteration_bounds = array<i64: 2>, scalar_prefetch = 0 : i64, scratch_operands = 0 : i64, tpu.core_type = #tpu.core_type<tc>, window_params = [{transform_indices = @transform_0, window_bounds = array<i64: 1, 256, 128>}, {transform_indices = @transform_1, window_bounds = array<i64: 1, 16, 256>}, {transform_indices = @transform_2, window_bounds = array<i64: 1, 16, 1>}, {transform_indices = @transform_3, window_bounds = array<i64: 1, 16, 1>}, {transform_indices = @transform_4, window_bounds = array<i64: 1, 16, 128>}]} {
    %c0 = arith.constant 0 : index
    %c0_0 = arith.constant 0 : index
    %c0_1 = arith.constant 0 : index
    %0 = vector.load %arg2[%c0, %c0_0, %c0_1] : memref<1x16x256xbf16, #tpu.memory_space<vmem>>, vector<1x16x256xbf16>
    %1 = vector.shape_cast %0 : vector<1x16x256xbf16> to vector<16x256xbf16>
    %c0_2 = arith.constant 0 : index
    %c0_3 = arith.constant 0 : index
    %c0_4 = arith.constant 0 : index
    %2 = vector.load %arg1[%c0_2, %c0_3, %c0_4] : memref<1x256x128xbf16, #tpu.memory_space<vmem>>, vector<1x256x128xbf16>
    %3 = vector.shape_cast %2 : vector<1x256x128xbf16> to vector<256x128xbf16>
    %cst = arith.constant dense<0.000000e+00> : vector<16x128xf32>
    %4 = tpu.matmul %1, %3, %cst {dimension_numbers = #tpu.dot_dimension_numbers<[1], [0], [0], [1], [0, 0, 1, 1], [], []>} : vector<16x256xbf16>, vector<256x128xbf16>, vector<16x128xf32> -> vector<16x128xf32>
    %cst_5 = arith.constant dense<0.000000e+00> : vector<16xf32>
    %5 = vector.multi_reduction <add>, %4, %cst_5 [1] : vector<16x128xf32> to vector<16xf32>
    %6 = vector.shape_cast %5 : vector<16xf32> to vector<16x1xf32>
    %cst_6 = arith.constant 0.0102040814 : f32
    %7 = vector.broadcast %cst_6 : f32 to vector<16x1xf32>
    %8 = arith.mulf %6, %7 : vector<16x1xf32>
    %9 = tpu.iota {dimensions = array<i32: 1>} : vector<16x128xi32>
    %c98_i32 = arith.constant 98 : i32
    %10 = vector.broadcast %c98_i32 : i32 to vector<16x128xi32>
    %11 = arith.cmpi slt, %9, %10 : vector<16x128xi32>
    %12 = vector.broadcast %8 : vector<16x1xf32> to vector<16x128xf32>
    %13 = arith.subf %4, %12 : vector<16x128xf32>
    %cst_7 = arith.constant 0.000000e+00 : f32
    %14 = vector.broadcast %cst_7 : f32 to vector<16x128xf32>
    %15 = arith.select %11, %13, %14 : vector<16x128xi1>, vector<16x128xf32>
    %16 = arith.mulf %15, %15 : vector<16x128xf32>
    %cst_8 = arith.constant dense<0.000000e+00> : vector<16xf32>
    %17 = vector.multi_reduction <add>, %16, %cst_8 [1] : vector<16x128xf32> to vector<16xf32>
    %18 = vector.shape_cast %17 : vector<16xf32> to vector<16x1xf32>
    %cst_9 = arith.constant 0.0102040814 : f32
    %19 = vector.broadcast %cst_9 : f32 to vector<16x1xf32>
    %20 = arith.mulf %18, %19 : vector<16x1xf32>
    %c0_10 = arith.constant 0 : index
    %c0_11 = arith.constant 0 : index
    %c0_12 = arith.constant 0 : index
    %21 = vector.load %arg3[%c0_10, %c0_11, %c0_12] : memref<1x16x1xf32, #tpu.memory_space<vmem>>, vector<1x16x1xf32>
    %22 = vector.shape_cast %21 : vector<1x16x1xf32> to vector<16x1xf32>
    %cst_13 = arith.constant 9.99999974E-6 : f32
    %23 = vector.broadcast %cst_13 : f32 to vector<16x1xf32>
    %24 = arith.addf %20, %23 : vector<16x1xf32>
    %25 = math.rsqrt %24 : vector<16x1xf32>
    %26 = arith.mulf %22, %25 : vector<16x1xf32>
    %27 = vector.broadcast %26 : vector<16x1xf32> to vector<16x128xf32>
    %28 = arith.mulf %15, %27 : vector<16x128xf32>
    %c0_14 = arith.constant 0 : index
    %c0_15 = arith.constant 0 : index
    %c0_16 = arith.constant 0 : index
    %29 = vector.load %arg4[%c0_14, %c0_15, %c0_16] : memref<1x16x1xf32, #tpu.memory_space<vmem>>, vector<1x16x1xf32>
    %30 = vector.shape_cast %29 : vector<1x16x1xf32> to vector<16x1xf32>
    %31 = vector.broadcast %30 : vector<16x1xf32> to vector<16x128xf32>
    %32 = arith.addf %28, %31 : vector<16x128xf32>
    %cst_17 = arith.constant 0.000000e+00 : f32
    %33 = vector.broadcast %cst_17 : f32 to vector<16x128xf32>
    %34 = arith.cmpf oge, %32, %33 : vector<16x128xf32>
    %cst_18 = arith.constant 2.000000e-01 : f32
    %35 = vector.broadcast %cst_18 : f32 to vector<16x128xf32>
    %36 = arith.mulf %35, %32 : vector<16x128xf32>
    %37 = arith.select %34, %32, %36 : vector<16x128xi1>, vector<16x128xf32>
    %38 = arith.truncf %37 : vector<16x128xf32> to vector<16x128xbf16>
    %c0_19 = arith.constant 0 : index
    %c0_20 = arith.constant 0 : index
    %c0_21 = arith.constant 0 : index
    %39 = vector.load %arg5[%c0_19, %c0_20, %c0_21] : memref<1x16x128xbf16, #tpu.memory_space<vmem>>, vector<1x16x128xbf16>
    %40 = vector.shape_cast %39 : vector<1x16x128xbf16> to vector<16x128xbf16>
    %41 = vector.shape_cast %38 : vector<16x128xbf16> to vector<1x16x128xbf16>
    tpu.vector_store %arg5[%c0_19, %c0_20, %c0_21], %41 {strides = array<i32>} : memref<1x16x128xbf16, #tpu.memory_space<vmem>>, vector<1x16x128xbf16>,
    return
  }
  func.func @transform_0(%arg0: i32) -> (i32, i32, i32) {
    %c0_i32 = arith.constant 0 : i32
    %c0_i32_0 = arith.constant 0 : i32
    %c0_i32_1 = arith.constant 0 : i32
    return %arg0, %c0_i32, %c0_i32_0 : i32, i32, i32
  }
  func.func @transform_1(%arg0: i32) -> (i32, i32, i32) {
    %c0_i32 = arith.constant 0 : i32
    %c0_i32_0 = arith.constant 0 : i32
    %c0_i32_1 = arith.constant 0 : i32
    return %arg0, %c0_i32, %c0_i32_0 : i32, i32, i32
  }
  func.func @transform_2(%arg0: i32) -> (i32, i32, i32) {
    %c0_i32 = arith.constant 0 : i32
    %c0_i32_0 = arith.constant 0 : i32
    %c0_i32_1 = arith.constant 0 : i32
    return %arg0, %c0_i32, %c0_i32_0 : i32, i32, i32
  }
  func.func @transform_3(%arg0: i32) -> (i32, i32, i32) {
    %c0_i32 = arith.constant 0 : i32
    %c0_i32_0 = arith.constant 0 : i32
    %c0_i32_1 = arith.constant 0 : i32
    return %arg0, %c0_i32, %c0_i32_0 : i32, i32, i32
  }
  func.func @transform_4(%arg0: i32) -> (i32, i32, i32) {
    %c0_i32 = arith.constant 0 : i32
    %c0_i32_0 = arith.constant 0 : i32
    %c0_i32_1 = arith.constant 0 : i32
    return %arg0, %c0_i32, %c0_i32_0 : i32, i32, i32
  }
}

module attributes {stable_mosaic.version = 11 : i64} {
  func.func @_convT_bn_lrelu_fused_kernel(%arg0: i32, %arg1: memref<1x256x128xbf16, #tpu.memory_space<vmem>>, %arg2: memref<1x16x256xbf16, #tpu.memory_space<vmem>>, %arg3: memref<1x16x1xf32, #tpu.memory_space<vmem>>, %arg4: memref<1x16x1xf32, #tpu.memory_space<vmem>>, %arg5: memref<1x16x128xbf16, #tpu.memory_space<vmem>>) attributes {dimension_semantics = [#tpu.dimension_semantics<parallel>], iteration_bounds = array<i64: 2>, scalar_prefetch = 0 : i64, scratch_operands = 0 : i64, tpu.core_type = #tpu.core_type<tc>, window_params = [{transform_indices = @transform_0, window_bounds = array<i64: 1, 256, 128>}, {transform_indices = @transform_1, window_bounds = array<i64: 1, 16, 256>}, {transform_indices = @transform_2, window_bounds = array<i64: 1, 16, 1>}, {transform_indices = @transform_3, window_bounds = array<i64: 1, 16, 1>}, {transform_indices = @transform_4, window_bounds = array<i64: 1, 16, 128>}]} {
    %c0 = arith.constant 0 : index
    %c0_0 = arith.constant 0 : index
    %c0_1 = arith.constant 0 : index
    %0 = vector.load %arg2[%c0, %c0_0, %c0_1] : memref<1x16x256xbf16, #tpu.memory_space<vmem>>, vector<1x16x256xbf16>
    %1 = vector.shape_cast %0 : vector<1x16x256xbf16> to vector<16x256xbf16>
    %c0_2 = arith.constant 0 : index
    %c0_3 = arith.constant 0 : index
    %c0_4 = arith.constant 0 : index
    %2 = vector.load %arg1[%c0_2, %c0_3, %c0_4] : memref<1x256x128xbf16, #tpu.memory_space<vmem>>, vector<1x256x128xbf16>
    %3 = vector.shape_cast %2 : vector<1x256x128xbf16> to vector<256x128xbf16>
    %cst = arith.constant dense<0.000000e+00> : vector<16x128xf32>
    %4 = tpu.matmul %1, %3, %cst {dimension_numbers = #tpu.dot_dimension_numbers<[1], [0], [0], [1], [0, 0, 1, 1], [], []>} : vector<16x256xbf16>, vector<256x128xbf16>, vector<16x128xf32> -> vector<16x128xf32>
    %cst_5 = arith.constant dense<0.000000e+00> : vector<16xf32>
    %5 = vector.multi_reduction <add>, %4, %cst_5 [1] : vector<16x128xf32> to vector<16xf32>
    %6 = vector.shape_cast %5 : vector<16xf32> to vector<16x1xf32>
    %cst_6 = arith.constant 0.013888889 : f32
    %7 = vector.broadcast %cst_6 : f32 to vector<16x1xf32>
    %8 = arith.mulf %6, %7 : vector<16x1xf32>
    %9 = tpu.iota {dimensions = array<i32: 1>} : vector<16x128xi32>
    %c72_i32 = arith.constant 72 : i32
    %10 = vector.broadcast %c72_i32 : i32 to vector<16x128xi32>
    %11 = arith.cmpi slt, %9, %10 : vector<16x128xi32>
    %12 = vector.broadcast %8 : vector<16x1xf32> to vector<16x128xf32>
    %13 = arith.subf %4, %12 : vector<16x128xf32>
    %cst_7 = arith.constant 0.000000e+00 : f32
    %14 = vector.broadcast %cst_7 : f32 to vector<16x128xf32>
    %15 = arith.select %11, %13, %14 : vector<16x128xi1>, vector<16x128xf32>
    %16 = arith.mulf %15, %15 : vector<16x128xf32>
    %cst_8 = arith.constant dense<0.000000e+00> : vector<16xf32>
    %17 = vector.multi_reduction <add>, %16, %cst_8 [1] : vector<16x128xf32> to vector<16xf32>
    %18 = vector.shape_cast %17 : vector<16xf32> to vector<16x1xf32>
    %cst_9 = arith.constant 0.013888889 : f32
    %19 = vector.broadcast %cst_9 : f32 to vector<16x1xf32>
    %20 = arith.mulf %18, %19 : vector<16x1xf32>
    %c0_10 = arith.constant 0 : index
    %c0_11 = arith.constant 0 : index
    %c0_12 = arith.constant 0 : index
    %21 = vector.load %arg3[%c0_10, %c0_11, %c0_12] : memref<1x16x1xf32, #tpu.memory_space<vmem>>, vector<1x16x1xf32>
    %22 = vector.shape_cast %21 : vector<1x16x1xf32> to vector<16x1xf32>
    %cst_13 = arith.constant 9.99999974E-6 : f32
    %23 = vector.broadcast %cst_13 : f32 to vector<16x1xf32>
    %24 = arith.addf %20, %23 : vector<16x1xf32>
    %25 = math.rsqrt %24 : vector<16x1xf32>
    %26 = arith.mulf %22, %25 : vector<16x1xf32>
    %27 = vector.broadcast %26 : vector<16x1xf32> to vector<16x128xf32>
    %28 = arith.mulf %15, %27 : vector<16x128xf32>
    %c0_14 = arith.constant 0 : index
    %c0_15 = arith.constant 0 : index
    %c0_16 = arith.constant 0 : index
    %29 = vector.load %arg4[%c0_14, %c0_15, %c0_16] : memref<1x16x1xf32, #tpu.memory_space<vmem>>, vector<1x16x1xf32>
    %30 = vector.shape_cast %29 : vector<1x16x1xf32> to vector<16x1xf32>
    %31 = vector.broadcast %30 : vector<16x1xf32> to vector<16x128xf32>
    %32 = arith.addf %28, %31 : vector<16x128xf32>
    %cst_17 = arith.constant 0.000000e+00 : f32
    %33 = vector.broadcast %cst_17 : f32 to vector<16x128xf32>
    %34 = arith.cmpf oge, %32, %33 : vector<16x128xf32>
    %cst_18 = arith.constant 2.000000e-01 : f32
    %35 = vector.broadcast %cst_18 : f32 to vector<16x128xf32>
    %36 = arith.mulf %35, %32 : vector<16x128xf32>
    %37 = arith.select %34, %32, %36 : vector<16x128xi1>, vector<16x128xf32>
    %38 = arith.truncf %37 : vector<16x128xf32> to vector<16x128xbf16>
    %c0_19 = arith.constant 0 : index
    %c0_20 = arith.constant 0 : index
    %c0_21 = arith.constant 0 : index
    %39 = vector.load %arg5[%c0_19, %c0_20, %c0_21] : memref<1x16x128xbf16, #tpu.memory_space<vmem>>, vector<1x16x128xbf16>
    %40 = vector.shape_cast %39 : vector<1x16x128xbf16> to vector<16x128xbf16>
    %41 = vector.shape_cast %38 : vector<16x128xbf16> to vector<1x16x128xbf16>
    tpu.vector_store %arg5[%c0_19, %c0_20, %c0_21], %41 {strides = array<i32>} : memref<1x16x128xbf16, #tpu.memory_space<vmem>>, vector<1x16x128xbf16>,
    return
  }
  func.func @transform_0(%arg0: i32) -> (i32, i32, i32) {
    %c0_i32 = arith.constant 0 : i32
    %c0_i32_0 = arith.constant 0 : i32
    %c0_i32_1 = arith.constant 0 : i32
    return %arg0, %c0_i32, %c0_i32_0 : i32, i32, i32
  }
  func.func @transform_1(%arg0: i32) -> (i32, i32, i32) {
    %c0_i32 = arith.constant 0 : i32
    %c0_i32_0 = arith.constant 0 : i32
    %c0_i32_1 = arith.constant 0 : i32
    return %arg0, %c0_i32, %c0_i32_0 : i32, i32, i32
  }
  func.func @transform_2(%arg0: i32) -> (i32, i32, i32) {
    %c0_i32 = arith.constant 0 : i32
    %c0_i32_0 = arith.constant 0 : i32
    %c0_i32_1 = arith.constant 0 : i32
    return %arg0, %c0_i32, %c0_i32_0 : i32, i32, i32
  }
  func.func @transform_3(%arg0: i32) -> (i32, i32, i32) {
    %c0_i32 = arith.constant 0 : i32
    %c0_i32_0 = arith.constant 0 : i32
    %c0_i32_1 = arith.constant 0 : i32
    return %arg0, %c0_i32, %c0_i32_0 : i32, i32, i32
  }
  func.func @transform_4(%arg0: i32) -> (i32, i32, i32) {
    %c0_i32 = arith.constant 0 : i32
    %c0_i32_0 = arith.constant 0 : i32
    %c0_i32_1 = arith.constant 0 : i32
    return %arg0, %c0_i32, %c0_i32_0 : i32, i32, i32
  }
}

module attributes {stable_mosaic.version = 11 : i64} {
  func.func @_saT_kernel(%arg0: i32, %arg1: i32, %arg2: memref<1x1x98xbf16, #tpu.memory_space<vmem>>, %arg3: memref<1x98x128xbf16, #tpu.memory_space<vmem>>, %arg4: memref<1x16x128xbf16, #tpu.memory_space<vmem>>, %arg5: memref<1x16x128xbf16, #tpu.memory_space<vmem>>) attributes {dimension_semantics = [#tpu.dimension_semantics<parallel>, #tpu.dimension_semantics<parallel>], iteration_bounds = array<i64: 2, 1>, scalar_prefetch = 0 : i64, scratch_operands = 0 : i64, tpu.core_type = #tpu.core_type<tc>, window_params = [{transform_indices = @transform_0, window_bounds = array<i64: 1, 1, 98>}, {transform_indices = @transform_1, window_bounds = array<i64: 1, 98, 128>}, {transform_indices = @transform_2, window_bounds = array<i64: 1, 16, 128>}, {transform_indices = @transform_3, window_bounds = array<i64: 1, 16, 128>}]} {
    %c0 = arith.constant 0 : index
    %c0_0 = arith.constant 0 : index
    %c0_1 = arith.constant 0 : index
    %0 = vector.load %arg2[%c0, %c0_0, %c0_1] : memref<1x1x98xbf16, #tpu.memory_space<vmem>>, vector<1x1x98xbf16>
    %1 = vector.shape_cast %0 : vector<1x1x98xbf16> to vector<1x98xbf16>
    %c0_2 = arith.constant 0 : index
    %c0_3 = arith.constant 0 : index
    %c0_4 = arith.constant 0 : index
    %2 = vector.load %arg3[%c0_2, %c0_3, %c0_4] : memref<1x98x128xbf16, #tpu.memory_space<vmem>>, vector<1x98x128xbf16>
    %3 = vector.shape_cast %2 : vector<1x98x128xbf16> to vector<98x128xbf16>
    %cst = arith.constant dense<0.000000e+00> : vector<1x128xf32>
    %4 = tpu.matmul %1, %3, %cst {dimension_numbers = #tpu.dot_dimension_numbers<[1], [0], [0], [1], [0, 0, 1, 1], [], []>} : vector<1x98xbf16>, vector<98x128xbf16>, vector<1x128xf32> -> vector<1x128xf32>
    %cst_5 = arith.constant 5.000000e-01 : f32
    %5 = vector.broadcast %cst_5 : f32 to vector<1x128xf32>
    %6 = arith.mulf %5, %4 : vector<1x128xf32>
    %7 = math.tanh %6 : vector<1x128xf32>
    %cst_6 = arith.constant 1.000000e+00 : f32
    %8 = vector.broadcast %cst_6 : f32 to vector<1x128xf32>
    %9 = arith.addf %7, %8 : vector<1x128xf32>
    %cst_7 = arith.constant 5.000000e-01 : f32
    %10 = vector.broadcast %cst_7 : f32 to vector<1x128xf32>
    %11 = arith.mulf %10, %9 : vector<1x128xf32>
    %c0_8 = arith.constant 0 : index
    %c0_9 = arith.constant 0 : index
    %c0_10 = arith.constant 0 : index
    %12 = vector.load %arg4[%c0_8, %c0_9, %c0_10] : memref<1x16x128xbf16, #tpu.memory_space<vmem>>, vector<1x16x128xbf16>
    %13 = vector.shape_cast %12 : vector<1x16x128xbf16> to vector<16x128xbf16>
    %14 = arith.extf %13 : vector<16x128xbf16> to vector<16x128xf32>
    %15 = vector.broadcast %11 : vector<1x128xf32> to vector<16x128xf32>
    %16 = arith.mulf %14, %15 : vector<16x128xf32>
    %17 = arith.truncf %16 : vector<16x128xf32> to vector<16x128xbf16>
    %c0_11 = arith.constant 0 : index
    %c0_12 = arith.constant 0 : index
    %c0_13 = arith.constant 0 : index
    %18 = vector.load %arg5[%c0_11, %c0_12, %c0_13] : memref<1x16x128xbf16, #tpu.memory_space<vmem>>, vector<1x16x128xbf16>
    %19 = vector.shape_cast %18 : vector<1x16x128xbf16> to vector<16x128xbf16>
    %20 = vector.shape_cast %17 : vector<16x128xbf16> to vector<1x16x128xbf16>
    tpu.vector_store %arg5[%c0_11, %c0_12, %c0_13], %20 {strides = array<i32>} : memref<1x16x128xbf16, #tpu.memory_space<vmem>>, vector<1x16x128xbf16>,
    return
  }
  func.func @transform_0(%arg0: i32, %arg1: i32) -> (i32, i32, i32) {
    %c0_i32 = arith.constant 0 : i32
    %c0_i32_0 = arith.constant 0 : i32
    %c0_i32_1 = arith.constant 0 : i32
    return %arg0, %c0_i32, %c0_i32_0 : i32, i32, i32
  }
  func.func @transform_1(%arg0: i32, %arg1: i32) -> (i32, i32, i32) {
    %c0_i32 = arith.constant 0 : i32
    %c0_i32_0 = arith.constant 0 : i32
    return %arg0, %c0_i32, %arg1 : i32, i32, i32
  }
  func.func @transform_2(%arg0: i32, %arg1: i32) -> (i32, i32, i32) {
    %c0_i32 = arith.constant 0 : i32
    %c0_i32_0 = arith.constant 0 : i32
    return %arg0, %c0_i32, %arg1 : i32, i32, i32
  }
  func.func @transform_3(%arg0: i32, %arg1: i32) -> (i32, i32, i32) {
    %c0_i32 = arith.constant 0 : i32
    %c0_i32_0 = arith.constant 0 : i32
    return %arg0, %c0_i32, %arg1 : i32, i32, i32
  }
}

module attributes {stable_mosaic.version = 11 : i64} {
  func.func @_ca_kernel(%arg0: memref<32x128xbf16, #tpu.memory_space<vmem>>, %arg1: memref<4x32xf32, #tpu.memory_space<vmem>>, %arg2: memref<32x4xf32, #tpu.memory_space<vmem>>, %arg3: memref<32x128xbf16, #tpu.memory_space<vmem>>) attributes {dimension_semantics = [], scalar_prefetch = 0 : i64, scratch_operands = 0 : i64, tpu.core_type = #tpu.core_type<tc>} {
    %c0 = arith.constant 0 : index
    %c0_0 = arith.constant 0 : index
    %0 = vector.load %arg0[%c0, %c0_0] : memref<32x128xbf16, #tpu.memory_space<vmem>>, vector<32x128xbf16>
    %1 = arith.extf %0 : vector<32x128xbf16> to vector<32x128xf32>
    %2 = tpu.iota {dimensions = array<i32: 1>} : vector<32x128xi32>
    %c0_i32 = arith.constant 0 : i32
    %3 = vector.broadcast %c0_i32 : i32 to vector<32x128xi32>
    %4 = arith.cmpi sge, %2, %3 : vector<32x128xi32>
    %c36_i32 = arith.constant 36 : i32
    %5 = vector.broadcast %c36_i32 : i32 to vector<32x128xi32>
    %6 = arith.cmpi slt, %2, %5 : vector<32x128xi32>
    %7 = arith.andi %4, %6 : vector<32x128xi1>
    %cst = arith.constant 0.000000e+00 : f32
    %8 = vector.broadcast %cst : f32 to vector<32x128xf32>
    %9 = arith.select %7, %1, %8 : vector<32x128xi1>, vector<32x128xf32>
    %cst_1 = arith.constant dense<0.000000e+00> : vector<32xf32>
    %10 = vector.multi_reduction <add>, %9, %cst_1 [1] : vector<32x128xf32> to vector<32xf32>
    %11 = vector.shape_cast %10 : vector<32xf32> to vector<32x1xf32>
    %cst_2 = arith.constant 0.027777778 : f32
    %12 = vector.broadcast %cst_2 : f32 to vector<32x1xf32>
    %13 = arith.mulf %11, %12 : vector<32x1xf32>
    %cst_3 = arith.constant 0xFF800000 : f32
    %14 = vector.broadcast %cst_3 : f32 to vector<32x128xf32>
    %15 = arith.select %7, %1, %14 : vector<32x128xi1>, vector<32x128xf32>
    %cst_4 = arith.constant dense<0xFF800000> : vector<32xf32>
    %16 = vector.multi_reduction <maximumf>, %15, %cst_4 [1] : vector<32x128xf32> to vector<32xf32>
    %17 = vector.shape_cast %16 : vector<32xf32> to vector<32x1xf32>
    %c36_i32_5 = arith.constant 36 : i32
    %18 = vector.broadcast %c36_i32_5 : i32 to vector<32x128xi32>
    %19 = arith.cmpi sge, %2, %18 : vector<32x128xi32>
    %c72_i32 = arith.constant 72 : i32
    %20 = vector.broadcast %c72_i32 : i32 to vector<32x128xi32>
    %21 = arith.cmpi slt, %2, %20 : vector<32x128xi32>
    %22 = arith.andi %19, %21 : vector<32x128xi1>
    %cst_6 = arith.constant 0.000000e+00 : f32
    %23 = vector.broadcast %cst_6 : f32 to vector<32x128xf32>
    %24 = arith.select %22, %1, %23 : vector<32x128xi1>, vector<32x128xf32>
    %cst_7 = arith.constant dense<0.000000e+00> : vector<32xf32>
    %25 = vector.multi_reduction <add>, %24, %cst_7 [1] : vector<32x128xf32> to vector<32xf32>
    %26 = vector.shape_cast %25 : vector<32xf32> to vector<32x1xf32>
    %cst_8 = arith.constant 0.027777778 : f32
    %27 = vector.broadcast %cst_8 : f32 to vector<32x1xf32>
    %28 = arith.mulf %26, %27 : vector<32x1xf32>
    %cst_9 = arith.constant 0xFF800000 : f32
    %29 = vector.broadcast %cst_9 : f32 to vector<32x128xf32>
    %30 = arith.select %22, %1, %29 : vector<32x128xi1>, vector<32x128xf32>
    %cst_10 = arith.constant dense<0xFF800000> : vector<32xf32>
    %31 = vector.multi_reduction <maximumf>, %30, %cst_10 [1] : vector<32x128xf32> to vector<32xf32>
    %32 = vector.shape_cast %31 : vector<32xf32> to vector<32x1xf32>
    %33 = tpu.concatenate %13, %28 in 1 : vector<32x1xf32>, vector<32x1xf32> -> vector<32x2xf32>
    %34 = tpu.concatenate %17, %32 in 1 : vector<32x1xf32>, vector<32x1xf32> -> vector<32x2xf32>
    %c0_11 = arith.constant 0 : index
    %c0_12 = arith.constant 0 : index
    %35 = vector.load %arg1[%c0_11, %c0_12] : memref<4x32xf32, #tpu.memory_space<vmem>>, vector<4x32xf32>
    %cst_13 = arith.constant dense<0.000000e+00> : vector<4x2xf32>
    %36 = tpu.matmul %35, %33, %cst_13 {dimension_numbers = #tpu.dot_dimension_numbers<[1], [0], [0], [1], [0, 0, 1, 1], [], []>} : vector<4x32xf32>, vector<32x2xf32>, vector<4x2xf32> -> vector<4x2xf32>
    %cst_14 = arith.constant 0.000000e+00 : f32
    %37 = vector.broadcast %cst_14 : f32 to vector<4x2xf32>
    %38 = arith.maximumf %36, %37 : vector<4x2xf32>
    %c0_15 = arith.constant 0 : index
    %c0_16 = arith.constant 0 : index
    %39 = vector.load %arg2[%c0_15, %c0_16] : memref<32x4xf32, #tpu.memory_space<vmem>>, vector<32x4xf32>
    %cst_17 = arith.constant dense<0.000000e+00> : vector<32x2xf32>
    %40 = tpu.matmul %39, %38, %cst_17 {dimension_numbers = #tpu.dot_dimension_numbers<[1], [0], [0], [1], [0, 0, 1, 1], [], []>} : vector<32x4xf32>, vector<4x2xf32>, vector<32x2xf32> -> vector<32x2xf32>
    %c0_18 = arith.constant 0 : index
    %c0_19 = arith.constant 0 : index
    %41 = vector.load %arg1[%c0_18, %c0_19] : memref<4x32xf32, #tpu.memory_space<vmem>>, vector<4x32xf32>
    %cst_20 = arith.constant dense<0.000000e+00> : vector<4x2xf32>
    %42 = tpu.matmul %41, %34, %cst_20 {dimension_numbers = #tpu.dot_dimension_numbers<[1], [0], [0], [1], [0, 0, 1, 1], [], []>} : vector<4x32xf32>, vector<32x2xf32>, vector<4x2xf32> -> vector<4x2xf32>
    %cst_21 = arith.constant 0.000000e+00 : f32
    %43 = vector.broadcast %cst_21 : f32 to vector<4x2xf32>
    %44 = arith.maximumf %42, %43 : vector<4x2xf32>
    %c0_22 = arith.constant 0 : index
    %c0_23 = arith.constant 0 : index
    %45 = vector.load %arg2[%c0_22, %c0_23] : memref<32x4xf32, #tpu.memory_space<vmem>>, vector<32x4xf32>
    %cst_24 = arith.constant dense<0.000000e+00> : vector<32x2xf32>
    %46 = tpu.matmul %45, %44, %cst_24 {dimension_numbers = #tpu.dot_dimension_numbers<[1], [0], [0], [1], [0, 0, 1, 1], [], []>} : vector<32x4xf32>, vector<4x2xf32>, vector<32x2xf32> -> vector<32x2xf32>
    %47 = arith.addf %40, %46 : vector<32x2xf32>
    %cst_25 = arith.constant 5.000000e-01 : f32
    %48 = vector.broadcast %cst_25 : f32 to vector<32x2xf32>
    %49 = arith.mulf %48, %47 : vector<32x2xf32>
    %50 = math.tanh %49 : vector<32x2xf32>
    %cst_26 = arith.constant 1.000000e+00 : f32
    %51 = vector.broadcast %cst_26 : f32 to vector<32x2xf32>
    %52 = arith.addf %50, %51 : vector<32x2xf32>
    %cst_27 = arith.constant 5.000000e-01 : f32
    %53 = vector.broadcast %cst_27 : f32 to vector<32x2xf32>
    %54 = arith.mulf %53, %52 : vector<32x2xf32>
    %cst_28 = arith.constant 0.000000e+00 : f32
    %55 = vector.broadcast %cst_28 : f32 to vector<32x128xf32>
    %c0_i32_29 = arith.constant 0 : i32
    %56 = vector.broadcast %c0_i32_29 : i32 to vector<32x128xi32>
    %57 = arith.cmpi sge, %2, %56 : vector<32x128xi32>
    %c36_i32_30 = arith.constant 36 : i32
    %58 = vector.broadcast %c36_i32_30 : i32 to vector<32x128xi32>
    %59 = arith.cmpi slt, %2, %58 : vector<32x128xi32>
    %60 = arith.andi %57, %59 : vector<32x128xi1>
    %61 = vector.extract_strided_slice %54 {offsets = [0, 0], sizes = [32, 1], strides = [1, 1]} : vector<32x2xf32> to vector<32x1xf32>
    %62 = vector.shape_cast %61 : vector<32x1xf32> to vector<32x1xf32>
    %63 = vector.broadcast %62 : vector<32x1xf32> to vector<32x128xf32>
    %64 = arith.select %60, %63, %55 : vector<32x128xi1>, vector<32x128xf32>
    %c36_i32_31 = arith.constant 36 : i32
    %65 = vector.broadcast %c36_i32_31 : i32 to vector<32x128xi32>
    %66 = arith.cmpi sge, %2, %65 : vector<32x128xi32>
    %c72_i32_32 = arith.constant 72 : i32
    %67 = vector.broadcast %c72_i32_32 : i32 to vector<32x128xi32>
    %68 = arith.cmpi slt, %2, %67 : vector<32x128xi32>
    %69 = arith.andi %66, %68 : vector<32x128xi1>
    %70 = vector.extract_strided_slice %54 {offsets = [0, 1], sizes = [32, 1], strides = [1, 1]} : vector<32x2xf32> to vector<32x1xf32>
    %71 = vector.shape_cast %70 : vector<32x1xf32> to vector<32x1xf32>
    %72 = vector.broadcast %71 : vector<32x1xf32> to vector<32x128xf32>
    %73 = arith.select %69, %72, %64 : vector<32x128xi1>, vector<32x128xf32>
    %74 = arith.mulf %1, %73 : vector<32x128xf32>
    %75 = arith.truncf %74 : vector<32x128xf32> to vector<32x128xbf16>
    %c0_33 = arith.constant 0 : index
    %c0_34 = arith.constant 0 : index
    %76 = vector.load %arg3[%c0_33, %c0_34] : memref<32x128xbf16, #tpu.memory_space<vmem>>, vector<32x128xbf16>
    tpu.vector_store %arg3[%c0_33, %c0_34], %75 {strides = array<i32>} : memref<32x128xbf16, #tpu.memory_space<vmem>>, vector<32x128xbf16>,
    return
  }
}

module attributes {stable_mosaic.version = 11 : i64} {
  func.func @_fuse_kernel(%arg0: i32, %arg1: memref<1x512xbf16, #tpu.memory_space<vmem>>, %arg2: memref<512x128xbf16, #tpu.memory_space<vmem>>, %arg3: memref<1x1xf32, #tpu.memory_space<smem>>, %arg4: memref<1x128xf32, #tpu.memory_space<vmem>>) attributes {dimension_semantics = [#tpu.dimension_semantics<parallel>], iteration_bounds = array<i64: 1>, scalar_prefetch = 0 : i64, scratch_operands = 0 : i64, tpu.core_type = #tpu.core_type<tc>, window_params = [{pipeline_mode = #tpu.pipeline_mode<synchronous>, transform_indices = @transform_0, window_bounds = array<i64: 1, 512>}, {transform_indices = @transform_1, window_bounds = array<i64: 512, 128>}, {transform_indices = @transform_2, window_bounds = array<i64: 1, 1>}, {transform_indices = @transform_3, window_bounds = array<i64: 1, 128>}]} {
    %c0 = arith.constant 0 : index
    %c0_0 = arith.constant 0 : index
    %0 = vector.load %arg1[%c0, %c0_0] : memref<1x512xbf16, #tpu.memory_space<vmem>>, vector<1x512xbf16>
    %c0_1 = arith.constant 0 : index
    %c0_2 = arith.constant 0 : index
    %1 = vector.load %arg2[%c0_1, %c0_2] : memref<512x128xbf16, #tpu.memory_space<vmem>>, vector<512x128xbf16>
    %cst = arith.constant dense<0.000000e+00> : vector<1x128xf32>
    %2 = tpu.matmul %0, %1, %cst {dimension_numbers = #tpu.dot_dimension_numbers<[1], [0], [0], [1], [0, 0, 1, 1], [], []>} : vector<1x512xbf16>, vector<512x128xbf16>, vector<1x128xf32> -> vector<1x128xf32>
    %c0_3 = arith.constant 0 : index
    %c0_4 = arith.constant 0 : index
    %3 = memref.load %arg3[%c0_3, %c0_4] : memref<1x1xf32, #tpu.memory_space<smem>>
    %4 = vector.broadcast %3 : f32 to vector<1x128xf32>
    %5 = arith.addf %2, %4 : vector<1x128xf32>
    %c0_5 = arith.constant 0 : index
    %c0_6 = arith.constant 0 : index
    %6 = vector.load %arg4[%c0_5, %c0_6] : memref<1x128xf32, #tpu.memory_space<vmem>>, vector<1x128xf32>
    tpu.vector_store %arg4[%c0_5, %c0_6], %5 {strides = array<i32>} : memref<1x128xf32, #tpu.memory_space<vmem>>, vector<1x128xf32>,
    return
  }
  func.func @transform_0(%arg0: i32) -> (i32, i32) {
    %c0_i32 = arith.constant 0 : i32
    %c0_i32_0 = arith.constant 0 : i32
    %c0_i32_1 = arith.constant 0 : i32
    return %c0_i32, %c0_i32_0 : i32, i32
  }
  func.func @transform_1(%arg0: i32) -> (i32, i32) {
    %c0_i32 = arith.constant 0 : i32
    %c0_i32_0 = arith.constant 0 : i32
    return %c0_i32, %arg0 : i32, i32
  }
  func.func @transform_2(%arg0: i32) -> (i32, i32) {
    %c0_i32 = arith.constant 0 : i32
    %c0_i32_0 = arith.constant 0 : i32
    %c0_i32_1 = arith.constant 0 : i32
    return %c0_i32, %c0_i32_0 : i32, i32
  }
  func.func @transform_3(%arg0: i32) -> (i32, i32) {
    %c0_i32 = arith.constant 0 : i32
    %c0_i32_0 = arith.constant 0 : i32
    return %c0_i32, %arg0 : i32, i32
  }
}

</mosaic_0001>

<llo_original>
// kernel: _lambda_.7
$region0: #{_lambda_.7}
  #allocation0 [shape = 'u32[]', space=smem, size = 0x4, offset = 0x4, fixed_abs, tag = 'smem constant byte address 0x4 - core index']
  #allocation1 [shape = 'u32[144,128]{1,0:T(1,128)}', space=vmem, size = 0x12000, scoped, tag = 'internal scratch']
  %s0 = inlined_call_operand.vmem [shape: bf16[2,128,128], index: 0, kind: input, shape index: {}]
  %s1 = inlined_call_operand.vmem [shape: bf16[2,16,128], index: 1, kind: input, shape index: {}]
  %s2 = inlined_call_operand.vmem [shape: f32[2,16,1], index: 2, kind: input, shape index: {}]
  %s3 = inlined_call_operand.vmem [shape: bf16[2,16,128], index: 3, kind: output, shape index: {}]
  %s4 = sld [smem:[#allocation0]]
  $region45: #{_lambda_.7} parent=0
    _
  %s6 = ssub.s32 1, %s4
  %s7 = scalar_select 0, %s6, %s4
  loop: start=0, step=1, limit=4
  $region2: #{_lambda_.7} parent=0 // loop_pre_header
    _
  $region3: #{_lambda_.7} parent=0 // loop_header
    %s9 = sphi 0, %s13
    %p10 = scmp.ge.s32.totalorder %s9, 4
    %s16 = sphi 0, %s28
    %s17 = sphi 0, %s24
    %s18 = sphi 0, %s16
    %s19 = sphi 0, %s17
    %s20 = sphi 0, %s18
    %s21 = sphi 0, %s19
    %s33 = sphi 0, %s35
    %s36 = sphi 0, %s33
    %s37 = sphi 0, %s36
    %s53 = sphi 0, %s37
    %s59 = sphi 0, %s61
    %s62 = sphi 0, %s59
    %s63 = sphi 0, %s62
    %s79 = sphi 0, %s63
    %s85 = sphi 0, %s87
    %s88 = sphi 0, %s85
    %s89 = sphi 0, %s88
    %s105 = sphi 0, %s89
    %s113 = sphi 0, %s115
    %s116 = sphi 0, %s113
    %s117 = sphi 0, %s116
    %s133 = sphi 0, %s117
  $region4: #{_lambda_.7} parent=0 // loop_header_branch
    %12 = sbr.rel (%p10) target = $region8
  $region5: #{_lambda_.7} parent=0 // loop_body
    %s14 = ssub.s32 %s9, 1
    %s15 = ssub.s32 %s9, 2
    %s22 = sadd.s32 1, %s17
    %p23 = scmp.ge.s32.totalorder %s22, 1
    %s24 = scalar_select %p23, 0, %s22
    %s25 = sadd.s32 1, %s16
    %s26 = scalar_select %p23, %s25, %s16
    %p27 = scmp.ge.s32.totalorder %s26, 2
    %s28 = scalar_select %p27, 0, %s26
    %s29 = ssub.s32 %s16, %s28
    %s30 = ssub.s32 %s17, %s24
    %s31 = sor.u32 %s29, %s30
    %p32 = scmp.eq.s32.totalorder %s31, 0
    %s34 = sadd.s32 %s33, 1
    %s35 = scalar_select %p32, %s33, %s34
    %p38 = pneg %p32
    %p39 = scmp.eq.s32.totalorder %s9, 1
    %p40 = por %p38, %p39
    %p41 = scmp.ne.s32.totalorder %s33, %s36
    %p42 = scmp.eq.s32.totalorder %s9, 0
    %p43 = por %p41, %p42
    %p44 = scmp.ne.s32.totalorder %s33, %s36
    %p45 = scmp.eq.s32.totalorder %s14, 1
    %p46 = por %p44, %p45
    %p47 = scmp.ne.s32.totalorder %s36, %s37
    %p48 = scmp.eq.s32.totalorder %s14, 0
    %p49 = por %p47, %p48
    %p50 = scmp.ne.s32.totalorder %s36, %s37
    %p51 = scmp.eq.s32.totalorder %s15, 1
    %p52 = por %p50, %p51
    %p54 = scmp.ne.s32.totalorder %s37, %s53
    %p55 = scmp.eq.s32.totalorder %s15, 0
    %p56 = por %p54, %p55
    %s57 = ssub.s32 %s16, %s28
    %p58 = scmp.eq.s32.totalorder %s57, 0
    %s60 = sadd.s32 %s59, 1
    %s61 = scalar_select %p58, %s59, %s60
    %p64 = pneg %p58
    %p65 = scmp.eq.s32.totalorder %s9, 1
    %p66 = por %p64, %p65
    %p67 = scmp.ne.s32.totalorder %s59, %s62
    %p68 = scmp.eq.s32.totalorder %s9, 0
    %p69 = por %p67, %p68
    %p70 = scmp.ne.s32.totalorder %s59, %s62
    %p71 = scmp.eq.s32.totalorder %s14, 1
    %p72 = por %p70, %p71
    %p73 = scmp.ne.s32.totalorder %s62, %s63
    %p74 = scmp.eq.s32.totalorder %s14, 0
    %p75 = por %p73, %p74
    %p76 = scmp.ne.s32.totalorder %s62, %s63
    %p77 = scmp.eq.s32.totalorder %s15, 1
    %p78 = por %p76, %p77
    %p80 = scmp.ne.s32.totalorder %s63, %s79
    %p81 = scmp.eq.s32.totalorder %s15, 0
    %p82 = por %p80, %p81
    %s83 = ssub.s32 %s16, %s28
    %p84 = scmp.eq.s32.totalorder %s83, 0
    %s86 = sadd.s32 %s85, 1
    %s87 = scalar_select %p84, %s85, %s86
    %p90 = pneg %p84
    %p91 = scmp.eq.s32.totalorder %s9, 1
    %p92 = por %p90, %p91
    %p93 = scmp.ne.s32.totalorder %s85, %s88
    %p94 = scmp.eq.s32.totalorder %s9, 0
    %p95 = por %p93, %p94
    %p96 = scmp.ne.s32.totalorder %s85, %s88
    %p97 = scmp.eq.s32.totalorder %s14, 1
    %p98 = por %p96, %p97
    %p99 = scmp.ne.s32.totalorder %s88, %s89
    %p100 = scmp.eq.s32.totalorder %s14, 0
    %p101 = por %p99, %p100
    %p102 = scmp.ne.s32.totalorder %s88, %s89
    %p103 = scmp.eq.s32.totalorder %s15, 1
    %p104 = por %p102, %p103
    %p106 = scmp.ne.s32.totalorder %s89, %s105
    %p107 = scmp.eq.s32.totalorder %s15, 0
    %p108 = por %p106, %p107
    %s109 = ssub.s32 %s16, %s28
    %s110 = ssub.s32 %s17, %s24
    %s111 = sor.u32 %s109, %s110
    %p112 = scmp.eq.s32.totalorder %s111, 0
    %s114 = sadd.s32 %s113, 1
    %s115 = scalar_select %p112, %s113, %s114
    %p118 = pneg %p112
    %p119 = scmp.eq.s32.totalorder %s9, 1
    %p120 = por %p118, %p119
    %p121 = scmp.ne.s32.totalorder %s113, %s116
    %p122 = scmp.eq.s32.totalorder %s9, 0
    %p123 = por %p121, %p122
    %p124 = scmp.ne.s32.totalorder %s113, %s116
    %p125 = scmp.eq.s32.totalorder %s14, 1
    %p126 = por %p124, %p125
    %p127 = scmp.ne.s32.totalorder %s116, %s117
    %p128 = scmp.eq.s32.totalorder %s14, 0
    %p129 = por %p127, %p128
    %p130 = scmp.ne.s32.totalorder %s116, %s117
    %p131 = scmp.eq.s32.totalorder %s15, 1
    %p132 = por %p130, %p131
    %p134 = scmp.ne.s32.totalorder %s117, %s133
    %p135 = scmp.eq.s32.totalorder %s15, 0
    %p136 = por %p134, %p135
    %p137 = scmp.le.s32.totalorder 1, %s9
    %p138 = scmp.lt.s32.totalorder %s9, 3
    %p139 = pnand %p137, %p138
    %p140 = pneg %p139
    // Predicated region
    $region9: #{_lambda_.7} parent=5 // pred_check
      _
    $region10: #{_lambda_.7} parent=5 // pred_check_branch
      %142 = sbr.rel (%p139) target = $region12
    $region11: #{_lambda_.7} parent=5 // pred_region
      %s143 = ssub.s32 %s9, 1
    $region12: #{_lambda_.7} parent=5 // pred_fallthru
      _
    %p144 = scmp.lt.s32.totalorder %s9, 2
    // Predicated region
    $region13: #{_lambda_.7} parent=5 // pred_check
      %p145 = pneg %p144
    $region14: #{_lambda_.7} parent=5 // pred_check_branch
      %147 = sbr.rel (%p145) target = $region16
    $region15: #{_lambda_.7} parent=5 // pred_region
      // Predicated region
      $region17: #{_lambda_.7} parent=15 // pred_check
        %p148 = pneg %p43
      $region18: #{_lambda_.7} parent=15 // pred_check_branch
        %150 = sbr.rel (%p148) target = $region20
      $region19: #{_lambda_.7} parent=15 // pred_region
        %p151 = scmp.lt.s32.totalorder %s16, 1
        %s152 = scalar_select %p151, %s16, 1
        %p153 = scmp.lt.s32.totalorder %s17, 0
        %s154 = scalar_select %p153, %s17, 0
        %s155 = smul.addr %s152, 16
        %s156 = sadd.s32 %s154, %s155
        %s157 = smul.addr %s156, 4
        %s158 = scalar_lea.vmem %s0, %s157
      $region20: #{_lambda_.7} parent=15 // pred_fallthru
        _
      // Predicated region
      $region21: #{_lambda_.7} parent=15 // pred_check
        %p159 = pneg %p69
      $region22: #{_lambda_.7} parent=15 // pred_check_branch
        %161 = sbr.rel (%p159) target = $region24
      $region23: #{_lambda_.7} parent=15 // pred_region
        %p162 = scmp.lt.s32.totalorder %s16, 1
        %s163 = scalar_select %p162, %s16, 1
        %s164 = smul.addr %s163, 2
        %s165 = smul.addr %s164, 4
        %s166 = scalar_lea.vmem %s1, %s165
      $region24: #{_lambda_.7} parent=15 // pred_fallthru
        _
      // Predicated region
      $region25: #{_lambda_.7} parent=15 // pred_check
        %p167 = pneg %p95
      $region26: #{_lambda_.7} parent=15 // pred_check_branch
        %169 = sbr.rel (%p167) target = $region28
      $region27: #{_lambda_.7} parent=15 // pred_region
        %p170 = scmp.lt.s32.totalorder %s16, 1
        %s171 = scalar_select %p170, %s16, 1
        %s172 = smul.addr %s171, 2
        %s173 = smul.addr %s172, 8
        %s174 = scalar_lea.vmem %s2, %s173
      $region28: #{_lambda_.7} parent=15 // pred_fallthru
        _
    $region16: #{_lambda_.7} parent=5 // pred_fallthru
      _
    %p175 = scmp.le.s32.totalorder 1, %s9
    %p176 = scmp.lt.s32.totalorder %s9, 3
    %p177 = pnand %p175, %p176
    %p178 = pneg %p177
    // Predicated region
    $region29: #{_lambda_.7} parent=5 // pred_check
      _
    $region30: #{_lambda_.7} parent=5 // pred_check_branch
      %180 = sbr.rel (%p177) target = $region32
    $region31: #{_lambda_.7} parent=5 // pred_region
      %s181 = ssub.s32 %s9, 1
      %p182 = scmp.lt.s32.totalorder %s18, 1
      %s183 = scalar_select %p182, %s18, 1
      %p184 = scmp.lt.s32.totalorder %s19, 0
      %s185 = scalar_select %p184, %s19, 0
      %s186 = smul.addr %s183, 16
      %s187 = sadd.s32 %s185, %s186
      %s188 = smul.addr %s187, 4
      %s189 = scalar_lea.vmem %s0, %s188
      %p190 = pneg %p49
      %p191 = pneg %p46
      %p192 = scmp.lt.s32.totalorder %s18, 1
      %s193 = scalar_select %p192, %s18, 1
      %s194 = smul.addr %s193, 2
      %s195 = smul.addr %s194, 4
      %s196 = scalar_lea.vmem %s1, %s195
      %p197 = pneg %p75
      %p198 = pneg %p72
      %p199 = scmp.lt.s32.totalorder %s18, 1
      %s200 = scalar_select %p199, %s18, 1
      %s201 = smul.addr %s200, 2
      %s202 = smul.addr %s201, 8
      %s203 = scalar_lea.vmem %s2, %s202
      %p204 = pneg %p101
      %p205 = pneg %p98
      %p206 = pneg %p129
      %p207 = pneg %p126
      %p208 = scmp.lt.s32.totalorder %s18, 1
      %s209 = scalar_select %p208, %s18, 1
      %p210 = scmp.lt.s32.totalorder %s19, 0
      %s211 = scalar_select %p210, %s19, 0
      %s212 = smul.addr %s209, 2
      %s213 = sadd.s32 %s211, %s212
      %s214 = smul.addr %s213, 4
      %s215 = scalar_lea.vmem %s3, %s214
      %p216 = scmp.lt.s32.totalorder %s18, 1
      %s217 = scalar_select %p216, %s18, 1
      %p218 = scmp.lt.s32.totalorder %s19, 0
      %s219 = scalar_select %p218, %s19, 0
      %s220 = smul.addr %s217, 16
      %s221 = sadd.s32 %s219, %s220
      %s222 = smul.addr %s221, 4
      %s223 = scalar_lea.vmem %s0, %s222
      %p224 = scmp.lt.s32.totalorder %s18, 1
      %s225 = scalar_select %p224, %s18, 1
      %s226 = smul.addr %s225, 2
      %s227 = smul.addr %s226, 4
      %s228 = scalar_lea.vmem %s1, %s227
      %p229 = scmp.lt.s32.totalorder %s18, 1
      %s230 = scalar_select %p229, %s18, 1
      %s231 = smul.addr %s230, 2
      %s232 = smul.addr %s231, 8
      %s233 = scalar_lea.vmem %s2, %s232
      %p234 = scmp.lt.s32.totalorder %s18, 1
      %s235 = scalar_select %p234, %s18, 1
      %p236 = scmp.lt.s32.totalorder %s19, 0
      %s237 = scalar_select %p236, %s19, 0
      %s238 = smul.addr %s235, 2
      %s239 = sadd.s32 %s237, %s238
      %s240 = smul.addr %s239, 4
      %s241 = scalar_lea.vmem %s3, %s240
      %v243 = vld [vmem:[%s228] sm:$0xf]
      %v244 = vld [vmem:[%s228 + $0x4] sm:$0xf]
      %v245 = vld [vmem:[%s223] sm:$0xf]
      %v246 = vld [vmem:[%s223 + $0x4] sm:$0xf]
      %v247 = vld [vmem:[%s223 + $0x8] sm:$0xf]
      %v248 = vld [vmem:[%s223 + $0xc] sm:$0xf]
      %v249 = vld [vmem:[%s223 + $0x10] sm:$0xf]
      %v250 = vld [vmem:[%s223 + $0x14] sm:$0xf]
      %v251 = vld [vmem:[%s223 + $0x18] sm:$0xf]
      %v252 = vld [vmem:[%s223 + $0x1c] sm:$0xf]
      %v253 = vld [vmem:[%s223 + $0x20] sm:$0xf]
      %v254 = vld [vmem:[%s223 + $0x24] sm:$0xf]
      %v255 = vld [vmem:[%s223 + $0x28] sm:$0xf]
      %v256 = vld [vmem:[%s223 + $0x2c] sm:$0xf]
      %v257 = vld [vmem:[%s223 + $0x30] sm:$0xf]
      %v258 = vld [vmem:[%s223 + $0x34] sm:$0xf]
      %v259 = vld [vmem:[%s223 + $0x38] sm:$0xf]
      %v260 = vld [vmem:[%s223 + $0x3c] sm:$0xf]
      %v261 = vld [vmem:[%s233] sm:$0xff]
      %v262 = vld [vmem:[%s233 + $0x8] sm:$0xff]
      %264 = vset.pattern.permute.xlu0 0
      %265 = vperm.xlu0 %264, %v261
      %v266 = vpop.permute.xlu0 %265
      %269 = vset.pattern.permute.xlu0 0
      %270 = vperm.xlu0 %269, %v262
      %v271 = vpop.permute.xlu0 %270
      %v275 = vunpack.c.l.b16 %v243
      %v276 = vunpack.c.l.b16 %v244
      %v277 = vpack.c.b16 %v276, %v275
      %v295 = vunpack.c.l.b16 %v245
      %v296 = vunpack.c.l.b16 %v246
      %v297 = vunpack.c.l.b16 %v247
      %v298 = vunpack.c.l.b16 %v248
      %v299 = vunpack.c.l.b16 %v249
      %v300 = vunpack.c.l.b16 %v250
      %v301 = vunpack.c.l.b16 %v251
      %v302 = vunpack.c.l.b16 %v252
      %v303 = vunpack.c.l.b16 %v253
      %v304 = vunpack.c.l.b16 %v254
      %v305 = vunpack.c.l.b16 %v255
      %v306 = vunpack.c.l.b16 %v256
      %v307 = vunpack.c.l.b16 %v257
      %v308 = vunpack.c.l.b16 %v258
      %v309 = vunpack.c.l.b16 %v259
      %v310 = vunpack.c.l.b16 %v260
      %v311 = vpack.c.b16 %v296, %v295
      %v312 = vpack.c.b16 %v298, %v297
      %v313 = vpack.c.b16 %v300, %v299
      %v314 = vpack.c.b16 %v302, %v301
      %v315 = vpack.c.b16 %v304, %v303
      %v316 = vpack.c.b16 %v306, %v305
      %v317 = vpack.c.b16 %v308, %v307
      %v318 = vpack.c.b16 %v310, %v309
      %327 = vmatprep.subr.bf16.mxu0 0
      %328 = vmatpush1.bf16.msra.mxu0 %v318
      %329 = vmatprep.subr.bf16.mxu0 0
      %330 = vmatpush1.bf16.msra.mxu0 %v317
      %331 = vmatprep.subr.bf16.mxu0 0
      %332 = vmatpush1.bf16.msra.mxu0 %v316
      %333 = vmatprep.subr.bf16.mxu0 0
      %334 = vmatpush1.bf16.msra.mxu0 %v315
      %335 = vmatprep.subr.bf16.mxu0 0
      %336 = vmatpush1.bf16.msra.mxu0 %v314
      %337 = vmatprep.subr.bf16.mxu0 0
      %338 = vmatpush1.bf16.msra.mxu0 %v313
      %339 = vmatprep.subr.bf16.mxu0 0
      %340 = vmatpush1.bf16.msra.mxu0 %v312
      %341 = vmatprep.subr.bf16.mxu0 0
      %342 = vmatpush1.bf16.msra.mxu0 %v311
      %343 = vmatprep.subr.bf16.mxu0 0
      %344 = vmatpush2.bf16.msra.mxu0 0
      %345 = vmatprep.subr.bf16.mxu0 0
      %346 = vmatpush2.bf16.msra.mxu0 0
      %347 = vmatprep.subr.bf16.mxu0 0
      %348 = vmatpush2.bf16.msra.mxu0 0
      %349 = vmatprep.subr.bf16.mxu0 0
      %350 = vmatpush2.bf16.msra.mxu0 0
      %351 = vmatprep.subr.bf16.mxu0 0
      %352 = vmatpush2.bf16.msra.mxu0 0
      %353 = vmatprep.subr.bf16.mxu0 0
      %354 = vmatpush2.bf16.msra.mxu0 0
      %355 = vmatprep.subr.bf16.mxu0 0
      %356 = vmatpush2.bf16.msra.mxu0 0
      %357 = vmatprep.subr.bf16.mxu0 0
      %358 = vmatpush2.bf16.msra.mxu0 0
      %359 = vmatprep.mubr.bf16.mxu0 0
      %360 = vmatmul.mubr.bf16.gmra.mxu0 %v277
      %v361 = vpop.f32.mrf.mxu0
      %v362 = vadd.f32 %v266, %v361
      %v363 = vpop.f32.mrf.mxu0
      %v364 = vpop.f32.mrf.mxu0
      %v365 = vadd.f32 %v271, %v364
      %v366 = vpop.f32.mrf.mxu0
      %367 = vdwg.mxu0
      %vm368 = vcmp.ge.f32.partialorder %v362, 0.0
      %vm369 = vcmp.ge.f32.partialorder %v365, 0.0
      %v370 = vmul.f32 %v362, 0.2
      %v371 = vmul.f32 %v365, 0.2
      %v372 = vsel %vm368, %v362, %v370
      %v373 = vsel %vm369, %v365, %v371
      %v374 = vpack.c.bf16 %v373, %v372
      %v376 = vunpack.c.l.b16 %v374
      %v377 = vunpack.c.h.b16 %v374
      %v378 = vpack.c.b16 %v376, %v376
      %v379 = vpack.c.b16 %v377, %v377
      %382 = vst [vmem:[%s241] sm:$0xf] %v378
      %383 = vst [vmem:[%s241 + $0x4] sm:$0xf] %v379
      %p384 = scmp.lt.s32.totalorder %s18, 1
      %s385 = scalar_select %p384, %s18, 1
      %p386 = scmp.lt.s32.totalorder %s19, 0
      %s387 = scalar_select %p386, %s19, 0
      %s388 = smul.addr %s385, 2
      %s389 = sadd.s32 %s387, %s388
      %s390 = smul.addr %s389, 4
      %s391 = scalar_lea.vmem %s3, %s390
      // Predicated region
      $region33: #{_lambda_.7} parent=31 // pred_check
        %p392 = pneg %p126
      $region34: #{_lambda_.7} parent=31 // pred_check_branch
        %394 = sbr.rel (%p392) target = $region36
      $region35: #{_lambda_.7} parent=31 // pred_region
        _
      $region36: #{_lambda_.7} parent=31 // pred_fallthru
        _
    $region32: #{_lambda_.7} parent=5 // pred_fallthru
      _
    %p395 = scmp.le.s32.totalorder 2, %s9
    // Predicated region
    $region37: #{_lambda_.7} parent=5 // pred_check
      %p396 = pneg %p395
    $region38: #{_lambda_.7} parent=5 // pred_check_branch
      %398 = sbr.rel (%p396) target = $region40
    $region39: #{_lambda_.7} parent=5 // pred_region
      %s399 = ssub.s32 %s9, 2
      // Predicated region
      $region41: #{_lambda_.7} parent=39 // pred_check
        %p400 = pneg %p132
      $region42: #{_lambda_.7} parent=39 // pred_check_branch
        %402 = sbr.rel (%p400) target = $region44
      $region43: #{_lambda_.7} parent=39 // pred_region
        %p403 = scmp.lt.s32.totalorder %s20, 1
        %s404 = scalar_select %p403, %s20, 1
        %p405 = scmp.lt.s32.totalorder %s21, 0
        %s406 = scalar_select %p405, %s21, 0
        %s407 = smul.addr %s404, 2
        %s408 = sadd.s32 %s406, %s407
        %s409 = smul.addr %s408, 4
        %s410 = scalar_lea.vmem %s3, %s409
      $region44: #{_lambda_.7} parent=39 // pred_fallthru
        _
    $region40: #{_lambda_.7} parent=5 // pred_fallthru
      _
  $region6: #{_lambda_.7} parent=0 // loop_footer
    %s13 = sadd.s32 1, %s9
  $region7: #{_lambda_.7} parent=0 // loop_footer_branch
    %8 = sbr.rel target = $region3
  $region8: #{_lambda_.7} parent=0 // loop_exit
    _

// kernel: _lambda_.8
$region0: #{_lambda_.8}
  #allocation0 [shape = 'u32[]', space=smem, size = 0x4, offset = 0x4, fixed_abs, tag = 'smem constant byte address 0x4 - core index']
  #allocation1 [shape = 'u32[144,128]{1,0:T(1,128)}', space=vmem, size = 0x12000, scoped, tag = 'internal scratch']
  %s0 = inlined_call_operand.vmem [shape: bf16[2,16,128], index: 0, kind: input, shape index: {}]
  %s1 = inlined_call_operand.vmem [shape: bf16[2,32,16], index: 1, kind: input, shape index: {}]
  %s2 = inlined_call_operand.vmem [shape: f32[2,32,1], index: 2, kind: input, shape index: {}]
  %s3 = inlined_call_operand.vmem [shape: f32[2,1], index: 3, kind: input, shape index: {}]
  %s4 = inlined_call_operand.vmem [shape: bf16[2,16,128], index: 4, kind: output, shape index: {}]
  %s5 = sld [smem:[#allocation0]]
  $region53: #{_lambda_.8} parent=0
    _
  %s7 = ssub.s32 1, %s5
  %s8 = scalar_select 0, %s7, %s5
  $region1: #{_lambda_.8} parent=0
    #allocation2 [shape = 'u8[1024]{0}', space=smem, size = 0x400, scoped, tag = 'input window, operand 3, single buffered']
    #allocation3 [shape = 's32[2]{0}', space=sflag, size = 0x8, scoped, tag = 'scoped memory for _lambda_.8']
    %9 = vsyncpa [#allocation3], 0
    loop: start=0, step=1, limit=4
    $region2: #{_lambda_.8} parent=1 // loop_pre_header
      _
    $region3: #{_lambda_.8} parent=1 // loop_header
      %s11 = sphi 0, %s15
      %p12 = scmp.ge.s32.totalorder %s11, 4
      %s21 = sphi 0, %s23
      %s24 = sphi 0, %s21
      %s25 = sphi 0, %s24
      %s41 = sphi 0, %s25
      %s47 = sphi 0, %s49
      %s50 = sphi 0, %s47
      %s51 = sphi 0, %s50
      %s67 = sphi 0, %s51
      %s73 = sphi 0, %s75
      %s76 = sphi 0, %s73
      %s77 = sphi 0, %s76
      %s93 = sphi 0, %s77
      %s97 = sphi 0, %s97
      %s99 = sphi 0, %s97
      %s100 = sphi 0, %s99
      %s114 = sphi 0, %s100
      %s120 = sphi 0, %s122
      %s123 = sphi 0, %s120
      %s124 = sphi 0, %s123
      %s140 = sphi 0, %s124
    $region4: #{_lambda_.8} parent=1 // loop_header_branch
      %14 = sbr.rel (%p12) target = $region8
    $region5: #{_lambda_.8} parent=1 // loop_body
      %s16 = ssub.s32 %s11, 1
      %s17 = ssub.s32 %s11, 2
      %s18 = sadd.s32 %s11, 1
      %s19 = ssub.s32 %s11, %s18
      %p20 = scmp.eq.s32.totalorder %s19, 0
      %s22 = sadd.s32 %s21, 1
      %s23 = scalar_select %p20, %s21, %s22
      %p26 = pneg %p20
      %p27 = scmp.eq.s32.totalorder %s11, 1
      %p28 = por %p26, %p27
      %p29 = scmp.ne.s32.totalorder %s21, %s24
      %p30 = scmp.eq.s32.totalorder %s11, 0
      %p31 = por %p29, %p30
      %p32 = scmp.ne.s32.totalorder %s21, %s24
      %p33 = scmp.eq.s32.totalorder %s16, 1
      %p34 = por %p32, %p33
      %p35 = scmp.ne.s32.totalorder %s24, %s25
      %p36 = scmp.eq.s32.totalorder %s16, 0
      %p37 = por %p35, %p36
      %p38 = scmp.ne.s32.totalorder %s24, %s25
      %p39 = scmp.eq.s32.totalorder %s17, 1
      %p40 = por %p38, %p39
      %p42 = scmp.ne.s32.totalorder %s25, %s41
      %p43 = scmp.eq.s32.totalorder %s17, 0
      %p44 = por %p42, %p43
      %s45 = ssub.s32 %s11, %s18
      %p46 = scmp.eq.s32.totalorder %s45, 0
      %s48 = sadd.s32 %s47, 1
      %s49 = scalar_select %p46, %s47, %s48
      %p52 = pneg %p46
      %p53 = scmp.eq.s32.totalorder %s11, 1
      %p54 = por %p52, %p53
      %p55 = scmp.ne.s32.totalorder %s47, %s50
      %p56 = scmp.eq.s32.totalorder %s11, 0
      %p57 = por %p55, %p56
      %p58 = scmp.ne.s32.totalorder %s47, %s50
      %p59 = scmp.eq.s32.totalorder %s16, 1
      %p60 = por %p58, %p59
      %p61 = scmp.ne.s32.totalorder %s50, %s51
      %p62 = scmp.eq.s32.totalorder %s16, 0
      %p63 = por %p61, %p62
      %p64 = scmp.ne.s32.totalorder %s50, %s51
      %p65 = scmp.eq.s32.totalorder %s17, 1
      %p66 = por %p64, %p65
      %p68 = scmp.ne.s32.totalorder %s51, %s67
      %p69 = scmp.eq.s32.totalorder %s17, 0
      %p70 = por %p68, %p69
      %s71 = ssub.s32 %s11, %s18
      %p72 = scmp.eq.s32.totalorder %s71, 0
      %s74 = sadd.s32 %s73, 1
      %s75 = scalar_select %p72, %s73, %s74
      %p78 = pneg %p72
      %p79 = scmp.eq.s32.totalorder %s11, 1
      %p80 = por %p78, %p79
      %p81 = scmp.ne.s32.totalorder %s73, %s76
      %p82 = scmp.eq.s32.totalorder %s11, 0
      %p83 = por %p81, %p82
      %p84 = scmp.ne.s32.totalorder %s73, %s76
      %p85 = scmp.eq.s32.totalorder %s16, 1
      %p86 = por %p84, %p85
      %p87 = scmp.ne.s32.totalorder %s76, %s77
      %p88 = scmp.eq.s32.totalorder %s16, 0
      %p89 = por %p87, %p88
      %p90 = scmp.ne.s32.totalorder %s76, %s77
      %p91 = scmp.eq.s32.totalorder %s17, 1
      %p92 = por %p90, %p91
      %p94 = scmp.ne.s32.totalorder %s77, %s93
      %p95 = scmp.eq.s32.totalorder %s17, 0
      %p96 = por %p94, %p95
      %s98 = sadd.s32 %s97, 1
      %p101 = scmp.eq.s32.totalorder %s11, 1
      %p102 = scmp.ne.s32.totalorder %s97, %s99
      %p103 = scmp.eq.s32.totalorder %s11, 0
      %p104 = por %p102, %p103
      %p105 = scmp.ne.s32.totalorder %s97, %s99
      %p106 = scmp.eq.s32.totalorder %s16, 1
      %p107 = por %p105, %p106
      %p108 = scmp.ne.s32.totalorder %s99, %s100
      %p109 = scmp.eq.s32.totalorder %s16, 0
      %p110 = por %p108, %p109
      %p111 = scmp.ne.s32.totalorder %s99, %s100
      %p112 = scmp.eq.s32.totalorder %s17, 1
      %p113 = por %p111, %p112
      %p115 = scmp.ne.s32.totalorder %s100, %s114
      %p116 = scmp.eq.s32.totalorder %s17, 0
      %p117 = por %p115, %p116
      %s118 = ssub.s32 %s11, %s18
      %p119 = scmp.eq.s32.totalorder %s118, 0
      %s121 = sadd.s32 %s120, 1
      %s122 = scalar_select %p119, %s120, %s121
      %p125 = pneg %p119
      %p126 = scmp.eq.s32.totalorder %s11, 1
      %p127 = por %p125, %p126
      %p128 = scmp.ne.s32.totalorder %s120, %s123
      %p129 = scmp.eq.s32.totalorder %s11, 0
      %p130 = por %p128, %p129
      %p131 = scmp.ne.s32.totalorder %s120, %s123
      %p132 = scmp.eq.s32.totalorder %s16, 1
      %p133 = por %p131, %p132
      %p134 = scmp.ne.s32.totalorder %s123, %s124
      %p135 = scmp.eq.s32.totalorder %s16, 0
      %p136 = por %p134, %p135
      %p137 = scmp.ne.s32.totalorder %s123, %s124
      %p138 = scmp.eq.s32.totalorder %s17, 1
      %p139 = por %p137, %p138
      %p141 = scmp.ne.s32.totalorder %s124, %s140
      %p142 = scmp.eq.s32.totalorder %s17, 0
      %p143 = por %p141, %p142
      %p144 = scmp.le.s32.totalorder 1, %s11
      %p145 = scmp.lt.s32.totalorder %s11, 3
      %p146 = pnand %p144, %p145
      %p147 = pneg %p146
      // Predicated region
      $region9: #{_lambda_.8} parent=5 // pred_check
        _
      $region10: #{_lambda_.8} parent=5 // pred_check_branch
        %149 = sbr.rel (%p146) target = $region12
      $region11: #{_lambda_.8} parent=5 // pred_region
        %s150 = ssub.s32 %s11, 1
        // Predicated region
        $region13: #{_lambda_.8} parent=11 // pred_check
          %p151 = pneg %p110
        $region14: #{_lambda_.8} parent=11 // pred_check_branch
          %153 = sbr.rel (%p151) target = $region16
        $region15: #{_lambda_.8} parent=11 // pred_region
          %s155 = ssub.s32 32, 32
          %156 = vsyncadd [#allocation3], %s155
          %s158 = sshll.u32 %s3, 4
          %s159 = int_to_ptr.vmem [resolvable:$true] %s158
          %161 = dma.vmem_to_smem %s159, 32, [#allocation2], [#allocation3]
        $region16: #{_lambda_.8} parent=11 // pred_fallthru
          _
      $region12: #{_lambda_.8} parent=5 // pred_fallthru
        _
      %p162 = scmp.lt.s32.totalorder %s11, 2
      // Predicated region
      $region17: #{_lambda_.8} parent=5 // pred_check
        %p163 = pneg %p162
      $region18: #{_lambda_.8} parent=5 // pred_check_branch
        %165 = sbr.rel (%p163) target = $region20
      $region19: #{_lambda_.8} parent=5 // pred_region
        // Predicated region
        $region21: #{_lambda_.8} parent=19 // pred_check
          %p166 = pneg %p31
        $region22: #{_lambda_.8} parent=19 // pred_check_branch
          %168 = sbr.rel (%p166) target = $region24
        $region23: #{_lambda_.8} parent=19 // pred_region
          %p169 = scmp.lt.s32.totalorder %s11, 1
          %s170 = scalar_select %p169, %s11, 1
          %s171 = smul.addr %s170, 2
          %s172 = smul.addr %s171, 4
          %s173 = scalar_lea.vmem %s0, %s172
        $region24: #{_lambda_.8} parent=19 // pred_fallthru
          _
        // Predicated region
        $region25: #{_lambda_.8} parent=19 // pred_check
          %p174 = pneg %p57
        $region26: #{_lambda_.8} parent=19 // pred_check_branch
          %176 = sbr.rel (%p174) target = $region28
        $region27: #{_lambda_.8} parent=19 // pred_region
          %p177 = scmp.lt.s32.totalorder %s11, 1
          %s178 = scalar_select %p177, %s11, 1
          %s179 = smul.addr %s178, 4
          %s180 = smul.addr %s179, 4
          %s181 = scalar_lea.vmem %s1, %s180
        $region28: #{_lambda_.8} parent=19 // pred_fallthru
          _
        // Predicated region
        $region29: #{_lambda_.8} parent=19 // pred_check
          %p182 = pneg %p83
        $region30: #{_lambda_.8} parent=19 // pred_check_branch
          %184 = sbr.rel (%p182) target = $region32
        $region31: #{_lambda_.8} parent=19 // pred_region
          %p185 = scmp.lt.s32.totalorder %s11, 1
          %s186 = scalar_select %p185, %s11, 1
          %s187 = smul.addr %s186, 4
          %s188 = smul.addr %s187, 8
          %s189 = scalar_lea.vmem %s2, %s188
        $region32: #{_lambda_.8} parent=19 // pred_fallthru
          _
      $region20: #{_lambda_.8} parent=5 // pred_fallthru
        _
      %p190 = scmp.le.s32.totalorder 1, %s11
      %p191 = scmp.lt.s32.totalorder %s11, 3
      %p192 = pnand %p190, %p191
      %p193 = pneg %p192
      // Predicated region
      $region33: #{_lambda_.8} parent=5 // pred_check
        _
      $region34: #{_lambda_.8} parent=5 // pred_check_branch
        %195 = sbr.rel (%p192) target = $region36
      $region35: #{_lambda_.8} parent=5 // pred_region
        %s196 = ssub.s32 %s11, 1
        // Predicated region
        $region37: #{_lambda_.8} parent=35 // pred_check
          %p197 = pneg %p110
        $region38: #{_lambda_.8} parent=35 // pred_check_branch
          %199 = sbr.rel (%p197) target = $region40
        $region39: #{_lambda_.8} parent=35 // pred_region
          %200 = dma.done [#allocation3], 32
        $region40: #{_lambda_.8} parent=35 // pred_fallthru
          _
        %201 = sfence
        %p202 = scmp.lt.s32.totalorder %s16, 1
        %s203 = scalar_select %p202, %s16, 1
        %s204 = smul.addr %s203, 2
        %s205 = smul.addr %s204, 4
        %s206 = scalar_lea.vmem %s0, %s205
        %p207 = pneg %p37
        %p208 = pneg %p34
        %p209 = scmp.lt.s32.totalorder %s16, 1
        %s210 = scalar_select %p209, %s16, 1
        %s211 = smul.addr %s210, 4
        %s212 = smul.addr %s211, 4
        %s213 = scalar_lea.vmem %s1, %s212
        %p214 = pneg %p63
        %p215 = pneg %p60
        %p216 = scmp.lt.s32.totalorder %s16, 1
        %s217 = scalar_select %p216, %s16, 1
        %s218 = smul.addr %s217, 4
        %s219 = smul.addr %s218, 8
        %s220 = scalar_lea.vmem %s2, %s219
        %p221 = pneg %p89
        %p222 = pneg %p86
        %p223 = pneg %p110
        %p224 = pneg %p107
        %p225 = pneg %p136
        %p226 = pneg %p133
        %p227 = scmp.lt.s32.totalorder %s16, 1
        %s228 = scalar_select %p227, %s16, 1
        %s229 = smul.addr %s228, 2
        %s230 = smul.addr %s229, 4
        %s231 = scalar_lea.vmem %s4, %s230
        %p232 = scmp.lt.s32.totalorder %s16, 1
        %s233 = scalar_select %p232, %s16, 1
        %s234 = smul.addr %s233, 2
        %s235 = smul.addr %s234, 4
        %s236 = scalar_lea.vmem %s0, %s235
        %p237 = scmp.lt.s32.totalorder %s16, 1
        %s238 = scalar_select %p237, %s16, 1
        %s239 = smul.addr %s238, 4
        %s240 = smul.addr %s239, 4
        %s241 = scalar_lea.vmem %s1, %s240
        %p242 = scmp.lt.s32.totalorder %s16, 1
        %s243 = scalar_select %p242, %s16, 1
        %s244 = smul.addr %s243, 4
        %s245 = smul.addr %s244, 8
        %s246 = scalar_lea.vmem %s2, %s245
        %p247 = scmp.lt.s32.totalorder %s16, 1
        %s248 = scalar_select %p247, %s16, 1
        %s249 = smul.addr %s248, 2
        %s250 = smul.addr %s249, 4
        %s251 = scalar_lea.vmem %s4, %s250
        %v253 = vld [vmem:[%s236] sm:$0xf]
        %v254 = vld [vmem:[%s236 + $0x4] sm:$0xf]
        %v255 = vld [vmem:[%s241] sm:$0xf]
        %v256 = vld [vmem:[%s241 + $0x4] sm:$0xf]
        %v257 = vld [vmem:[%s241 + $0x8] sm:$0xf]
        %v258 = vld [vmem:[%s241 + $0xc] sm:$0xf]
        %v259 = vld [vmem:[%s246] sm:$0xff]
        %v260 = vld [vmem:[%s246 + $0x8] sm:$0xff]
        %v261 = vld [vmem:[%s246 + $0x10] sm:$0xff]
        %v262 = vld [vmem:[%s246 + $0x18] sm:$0xff]
        %264 = vset.pattern.permute.xlu0 0
        %265 = vperm.xlu0 %264, %v259
        %v266 = vpop.permute.xlu0 %265
        %269 = vset.pattern.permute.xlu0 0
        %270 = vperm.xlu0 %269, %v260
        %v271 = vpop.permute.xlu0 %270
        %274 = vset.pattern.permute.xlu0 0
        %275 = vperm.xlu0 %274, %v261
        %v276 = vpop.permute.xlu0 %275
        %279 = vset.pattern.permute.xlu0 0
        %280 = vperm.xlu0 %279, %v262
        %v281 = vpop.permute.xlu0 %280
        %v287 = vunpack.c.l.b16 %v255
        %v288 = vunpack.c.l.b16 %v256
        %v289 = vunpack.c.l.b16 %v257
        %v290 = vunpack.c.l.b16 %v258
        %v291 = vpack.c.b16 %v288, %v287
        %v292 = vpack.c.b16 %v290, %v289
        %v295 = vunpack.c.l.b16 %v253
        %v296 = vunpack.c.l.b16 %v254
        %v297 = vpack.c.b16 %v296, %v295
        %vm299 = vcmask 130048
        %v301 = vsel %vm299, %v291, 0
        %v304 = vsel %vm299, %v292, 0
        %306 = vmatprep.subr.bf16.mxu0 0
        %307 = vmatpush1.bf16.msra.mxu0 0
        %308 = vmatprep.subr.bf16.mxu0 0
        %309 = vmatpush1.bf16.msra.mxu0 0
        %310 = vmatprep.subr.bf16.mxu0 0
        %311 = vmatpush1.bf16.msra.mxu0 0
        %312 = vmatprep.subr.bf16.mxu0 0
        %313 = vmatpush1.bf16.msra.mxu0 0
        %314 = vmatprep.subr.bf16.mxu0 0
        %315 = vmatpush1.bf16.msra.mxu0 0
        %316 = vmatprep.subr.bf16.mxu0 0
        %317 = vmatpush1.bf16.msra.mxu0 0
        %318 = vmatprep.subr.bf16.mxu0 0
        %319 = vmatpush1.bf16.msra.mxu0 0
        %320 = vmatprep.subr.bf16.mxu0 0
        %321 = vmatpush1.bf16.msra.mxu0 %v297
        %322 = vmatprep.subr.bf16.mxu0 0
        %323 = vmatpush2.bf16.msra.mxu0 0
        %324 = vmatprep.subr.bf16.mxu0 0
        %325 = vmatpush2.bf16.msra.mxu0 0
        %326 = vmatprep.subr.bf16.mxu0 0
        %327 = vmatpush2.bf16.msra.mxu0 0
        %328 = vmatprep.subr.bf16.mxu0 0
        %329 = vmatpush2.bf16.msra.mxu0 0
        %330 = vmatprep.subr.bf16.mxu0 0
        %331 = vmatpush2.bf16.msra.mxu0 0
        %332 = vmatprep.subr.bf16.mxu0 0
        %333 = vmatpush2.bf16.msra.mxu0 0
        %334 = vmatprep.subr.bf16.mxu0 0
        %335 = vmatpush2.bf16.msra.mxu0 0
        %336 = vmatprep.subr.bf16.mxu0 0
        %337 = vmatpush2.bf16.msra.mxu0 0
        %338 = vmatprep.mubr.bf16.mxu0 0
        %339 = vmatmul.mubr.bf16.gmra.mxu0 %v301
        %v340 = vpop.f32.mrf.mxu0
        %v341 = vadd.f32 %v266, %v340
        %v342 = vpop.f32.mrf.mxu0
        %v343 = vpop.f32.mrf.mxu0
        %v344 = vadd.f32 %v271, %v343
        %v345 = vpop.f32.mrf.mxu0
        %346 = vmatprep.mubr.bf16.mxu0 0
        %347 = vmatmul.mubr.bf16.gmra.mxu0 %v304
        %v348 = vpop.f32.mrf.mxu0
        %v349 = vadd.f32 %v276, %v348
        %v350 = vpop.f32.mrf.mxu0
        %v351 = vpop.f32.mrf.mxu0
        %v352 = vadd.f32 %v281, %v351
        %v353 = vpop.f32.mrf.mxu0
        %354 = vdwg.mxu0
        %v355 = vpack.c.bf16 %v341, %v341
        %v356 = vpack.c.bf16 %v344, %v344
        %357 = vxpose.xlu0.c.b16.start [1/8] %v355, 128
        %358 = vxpose.xlu0.c.b16.cont [2/8] 0, 128
        %359 = vxpose.xlu0.c.b16.cont [3/8] 0, 128
        %360 = vxpose.xlu0.c.b16.cont [4/8] 0, 128
        %361 = vxpose.xlu0.c.b16.cont [5/8] 0, 128
        %362 = vxpose.xlu0.c.b16.cont [6/8] 0, 128
        %363 = vxpose.xlu0.c.b16.cont [7/8] 0, 128
        %364 = vxpose.xlu0.c.b16.end [8/8] 0, 128
        %v365 = vpop.trf.xlu0
        %v366 = vpop.trf.xlu0
        %v367 = vpop.trf.xlu0
        %v368 = vpop.trf.xlu0
        %v369 = vpop.trf.xlu0
        %v370 = vpop.trf.xlu0
        %v371 = vpop.trf.xlu0
        %v372 = vpop.trf.xlu0
        %vm373 = vcmask 64512
        %v375 = vsel %vm373, %v365, 0
        %v378 = vsel %vm373, %v366, 0
        %v381 = vsel %vm373, %v367, 0
        %v384 = vsel %vm373, %v368, 0
        %vm386 = vcmask 1043456
        %v388 = vsel %vm386, %v356, 0
        %390 = vmatprep.subr.bf16.mxu0 0
        %391 = vmatpush1.bf16.msra.mxu0 0
        %392 = vmatprep.subr.bf16.mxu0 0
        %393 = vmatpush1.bf16.msra.mxu0 0
        %394 = vmatprep.subr.bf16.mxu0 0
        %395 = vmatpush1.bf16.msra.mxu0 0
        %396 = vmatprep.subr.bf16.mxu0 0
        %397 = vmatpush1.bf16.msra.mxu0 0
        %398 = vmatprep.subr.bf16.mxu0 0
        %399 = vmatpush1.bf16.msra.mxu0 0
        %400 = vmatprep.subr.bf16.mxu0 0
        %401 = vmatpush1.bf16.msra.mxu0 0
        %402 = vmatprep.subr.bf16.mxu0 0
        %403 = vmatpush1.bf16.msra.mxu0 0
        %404 = vmatprep.subr.bf16.mxu0 0
        %405 = vmatpush1.bf16.msra.mxu0 %v388
        %406 = vmatprep.subr.bf16.mxu0 0
        %407 = vmatpush2.bf16.msra.mxu0 0
        %408 = vmatprep.subr.bf16.mxu0 0
        %409 = vmatpush2.bf16.msra.mxu0 0
        %410 = vmatprep.subr.bf16.mxu0 0
        %411 = vmatpush2.bf16.msra.mxu0 0
        %412 = vmatprep.subr.bf16.mxu0 0
        %413 = vmatpush2.bf16.msra.mxu0 0
        %414 = vmatprep.subr.bf16.mxu0 0
        %415 = vmatpush2.bf16.msra.mxu0 0
        %416 = vmatprep.subr.bf16.mxu0 0
        %417 = vmatpush2.bf16.msra.mxu0 0
        %418 = vmatprep.subr.bf16.mxu0 0
        %419 = vmatpush2.bf16.msra.mxu0 0
        %420 = vmatprep.subr.bf16.mxu0 0
        %421 = vmatpush2.bf16.msra.mxu0 0
        %422 = vmatprep.mubr.bf16.mxu0 0
        %423 = vmatmul.mubr.bf16.gmra.mxu0 %v375
        %v424 = vpop.f32.mrf.mxu0
        %v425 = vadd.f32 0.0, %v424
        %v426 = vpop.f32.mrf.mxu0
        %v427 = vpop.f32.mrf.mxu0
        %v428 = vadd.f32 0.0, %v427
        %v429 = vpop.f32.mrf.mxu0
        %430 = vmatprep.mubr.bf16.mxu0 0
        %431 = vmatmul.mubr.bf16.gmra.mxu0 %v378
        %v432 = vpop.f32.mrf.mxu0
        %v433 = vadd.f32 0.0, %v432
        %v434 = vpop.f32.mrf.mxu0
        %v435 = vpop.f32.mrf.mxu0
        %v436 = vadd.f32 0.0, %v435
        %v437 = vpop.f32.mrf.mxu0
        %438 = vmatprep.mubr.bf16.mxu0 0
        %439 = vmatmul.mubr.bf16.gmra.mxu0 %v381
        %v440 = vpop.f32.mrf.mxu0
        %v441 = vadd.f32 0.0, %v440
        %v442 = vpop.f32.mrf.mxu0
        %v443 = vpop.f32.mrf.mxu0
        %v444 = vadd.f32 0.0, %v443
        %v445 = vpop.f32.mrf.mxu0
        %446 = vmatprep.mubr.bf16.mxu0 0
        %447 = vmatmul.mubr.bf16.gmra.mxu0 %v384
        %v448 = vpop.f32.mrf.mxu0
        %v449 = vadd.f32 0.0, %v448
        %v450 = vpop.f32.mrf.mxu0
        %v451 = vpop.f32.mrf.mxu0
        %v452 = vadd.f32 0.0, %v451
        %v453 = vpop.f32.mrf.mxu0
        %454 = vdwg.mxu0
        %vm455 = vcmask 523264
        %v456 = vsel %vm455, %v425, -inf
        %457 = vmax.xlane.f32.xlu0 %v456
        %v458 = vpop.xlane.xlu0 %457
        %v459 = vsel %vm455, %v428, -inf
        %460 = vmax.xlane.f32.xlu0 %v459
        %v461 = vpop.xlane.xlu0 %460
        %v462 = vsel %vm455, %v433, -inf
        %463 = vmax.xlane.f32.xlu0 %v462
        %v464 = vpop.xlane.xlu0 %463
        %v465 = vsel %vm455, %v436, -inf
        %466 = vmax.xlane.f32.xlu0 %v465
        %v467 = vpop.xlane.xlu0 %466
        %v468 = vsel %vm455, %v441, -inf
        %469 = vmax.xlane.f32.xlu0 %v468
        %v470 = vpop.xlane.xlu0 %469
        %v471 = vsel %vm455, %v444, -inf
        %472 = vmax.xlane.f32.xlu0 %v471
        %v473 = vpop.xlane.xlu0 %472
        %v474 = vsel %vm455, %v449, -inf
        %475 = vmax.xlane.f32.xlu0 %v474
        %v476 = vpop.xlane.xlu0 %475
        %v477 = vsel %vm455, %v452, -inf
        %478 = vmax.xlane.f32.xlu0 %v477
        %v479 = vpop.xlane.xlu0 %478
        %v480 = vsub.f32 %v425, %v458
        %v481 = vsub.f32 %v428, %v461
        %v482 = vsub.f32 %v433, %v464
        %v483 = vsub.f32 %v436, %v467
        %v484 = vsub.f32 %v441, %v470
        %v485 = vsub.f32 %v444, %v473
        %v486 = vsub.f32 %v449, %v476
        %v487 = vsub.f32 %v452, %v479
        %v488 = vmul.f32 %v480, 1.442695
        %v489 = vpow.pop %v488
        %v490 = vmul.f32 %v481, 1.442695
        %v491 = vpow.pop %v490
        %v492 = vmul.f32 %v482, 1.442695
        %v493 = vpow.pop %v492
        %v494 = vmul.f32 %v483, 1.442695
        %v495 = vpow.pop %v494
        %v496 = vmul.f32 %v484, 1.442695
        %v497 = vpow.pop %v496
        %v498 = vmul.f32 %v485, 1.442695
        %v499 = vpow.pop %v498
        %v500 = vmul.f32 %v486, 1.442695
        %v501 = vpow.pop %v500
        %v502 = vmul.f32 %v487, 1.442695
        %v503 = vpow.pop %v502
        %v504 = vsel %vm455, %v489, 0.0
        %505 = vadd.xlane.f32.xlu0 %v504
        %v506 = vpop.xlane.xlu0 %505
        %v507 = vsel %vm455, %v491, 0.0
        %508 = vadd.xlane.f32.xlu0 %v507
        %v509 = vpop.xlane.xlu0 %508
        %v510 = vsel %vm455, %v493, 0.0
        %511 = vadd.xlane.f32.xlu0 %v510
        %v512 = vpop.xlane.xlu0 %511
        %v513 = vsel %vm455, %v495, 0.0
        %514 = vadd.xlane.f32.xlu0 %v513
        %v515 = vpop.xlane.xlu0 %514
        %v516 = vsel %vm455, %v497, 0.0
        %517 = vadd.xlane.f32.xlu0 %v516
        %v518 = vpop.xlane.xlu0 %517
        %v519 = vsel %vm455, %v499, 0.0
        %520 = vadd.xlane.f32.xlu0 %v519
        %v521 = vpop.xlane.xlu0 %520
        %v522 = vsel %vm455, %v501, 0.0
        %523 = vadd.xlane.f32.xlu0 %v522
        %v524 = vpop.xlane.xlu0 %523
        %v525 = vsel %vm455, %v503, 0.0
        %526 = vadd.xlane.f32.xlu0 %v525
        %v527 = vpop.xlane.xlu0 %526
        %v528 = vrcp.pop %v506
        %v529 = vrcp.pop %v509
        %v530 = vrcp.pop %v512
        %v531 = vrcp.pop %v515
        %v532 = vrcp.pop %v518
        %v533 = vrcp.pop %v521
        %v534 = vrcp.pop %v524
        %v535 = vrcp.pop %v527
        %v536 = vmul.f32 %v489, %v528
        %v537 = vmul.f32 %v491, %v529
        %v538 = vmul.f32 %v493, %v530
        %v539 = vmul.f32 %v495, %v531
        %v540 = vmul.f32 %v497, %v532
        %v541 = vmul.f32 %v499, %v533
        %v542 = vmul.f32 %v501, %v534
        %v543 = vmul.f32 %v503, %v535
        %v544 = vpack.c.bf16 %v352, %v349
        %v545 = vpack.c.bf16 %v537, %v536
        %v546 = vpack.c.bf16 %v539, %v538
        %v547 = vpack.c.bf16 %v541, %v540
        %v548 = vpack.c.bf16 %v543, %v542
        %v550 = vsel %vm455, %v544, 0
        %v553 = vsel %vm455, %v545, 0
        %v556 = vsel %vm455, %v546, 0
        %v559 = vsel %vm455, %v547, 0
        %v562 = vsel %vm455, %v548, 0
        %564 = vmatprep.subr.bf16.mxu0 0
        %565 = vmatpush1.bf16.xpose.msra.mxu0 0
        %566 = vmatprep.subr.bf16.mxu0 0
        %567 = vmatpush1.bf16.xpose.msra.mxu0 0
        %568 = vmatprep.subr.bf16.mxu0 0
        %569 = vmatpush1.bf16.xpose.msra.mxu0 0
        %570 = vmatprep.subr.bf16.mxu0 0
        %571 = vmatpush1.bf16.xpose.msra.mxu0 0
        %572 = vmatprep.subr.bf16.mxu0 0
        %573 = vmatpush1.bf16.xpose.msra.mxu0 %v562
        %574 = vmatprep.subr.bf16.mxu0 0
        %575 = vmatpush1.bf16.xpose.msra.mxu0 %v559
        %576 = vmatprep.subr.bf16.mxu0 0
        %577 = vmatpush1.bf16.xpose.msra.mxu0 %v556
        %578 = vmatprep.subr.bf16.mxu0 0
        %579 = vmatpush1.bf16.xpose.msra.mxu0 %v553
        %580 = vmatprep.subr.bf16.mxu0 0
        %581 = vmatpush2.bf16.xpose.msra.mxu0 0
        %582 = vmatprep.subr.bf16.mxu0 0
        %583 = vmatpush2.bf16.xpose.msra.mxu0 0
        %584 = vmatprep.subr.bf16.mxu0 0
        %585 = vmatpush2.bf16.xpose.msra.mxu0 0
        %586 = vmatprep.subr.bf16.mxu0 0
        %587 = vmatpush2.bf16.xpose.msra.mxu0 0
        %588 = vmatprep.subr.bf16.mxu0 0
        %589 = vmatpush2.bf16.xpose.msra.mxu0 0
        %590 = vmatprep.subr.bf16.mxu0 0
        %591 = vmatpush2.bf16.xpose.msra.mxu0 0
        %592 = vmatprep.subr.bf16.mxu0 0
        %593 = vmatpush2.bf16.xpose.msra.mxu0 0
        %594 = vmatprep.subr.bf16.mxu0 0
        %595 = vmatpush2.bf16.xpose.msra.mxu0 0
        %596 = vmatprep.mubr.bf16.mxu0 0
        %597 = vmatmul.mubr.bf16.gmra.mxu0 %v550
        %v598 = vpop.f32.mrf.mxu0
        %v599 = vadd.f32 0.0, %v598
        %v600 = vpop.f32.mrf.mxu0
        %v601 = vpop.f32.mrf.mxu0
        %v602 = vadd.f32 0.0, %v601
        %v603 = vpop.f32.mrf.mxu0
        %604 = vdwg.mxu0
        %606 = vrot.lane.b32.xlu0 %v355, 64
        %v607 = vpop.permute.xlu0 %606
        %609 = vxpose.xlu0.c.b16.start [1/8] %v607, 128
        %610 = vxpose.xlu0.c.b16.cont [2/8] 0, 128
        %611 = vxpose.xlu0.c.b16.cont [3/8] 0, 128
        %612 = vxpose.xlu0.c.b16.cont [4/8] 0, 128
        %613 = vxpose.xlu0.c.b16.cont [5/8] 0, 128
        %614 = vxpose.xlu0.c.b16.cont [6/8] 0, 128
        %615 = vxpose.xlu0.c.b16.cont [7/8] 0, 128
        %616 = vxpose.xlu0.c.b16.end [8/8] 0, 128
        %v617 = vpop.trf.xlu0
        %v618 = vpop.trf.xlu0
        %v619 = vpop.trf.xlu0
        %v620 = vpop.trf.xlu0
        %v621 = vpop.trf.xlu0
        %v622 = vpop.trf.xlu0
        %v623 = vpop.trf.xlu0
        %v624 = vpop.trf.xlu0
        %626 = vrot.lane.b32.xlu0 %v356, 64
        %v627 = vpop.permute.xlu0 %626
        %v629 = vsel %vm373, %v617, 0
        %v632 = vsel %vm373, %v618, 0
        %v635 = vsel %vm373, %v619, 0
        %v638 = vsel %vm373, %v620, 0
        %v641 = vsel %vm386, %v627, 0
        %643 = vmatprep.subr.bf16.mxu0 0
        %644 = vmatpush1.bf16.msra.mxu0 0
        %645 = vmatprep.subr.bf16.mxu0 0
        %646 = vmatpush1.bf16.msra.mxu0 0
        %647 = vmatprep.subr.bf16.mxu0 0
        %648 = vmatpush1.bf16.msra.mxu0 0
        %649 = vmatprep.subr.bf16.mxu0 0
        %650 = vmatpush1.bf16.msra.mxu0 0
        %651 = vmatprep.subr.bf16.mxu0 0
        %652 = vmatpush1.bf16.msra.mxu0 0
        %653 = vmatprep.subr.bf16.mxu0 0
        %654 = vmatpush1.bf16.msra.mxu0 0
        %655 = vmatprep.subr.bf16.mxu0 0
        %656 = vmatpush1.bf16.msra.mxu0 0
        %657 = vmatprep.subr.bf16.mxu0 0
        %658 = vmatpush1.bf16.msra.mxu0 %v641
        %659 = vmatprep.subr.bf16.mxu0 0
        %660 = vmatpush2.bf16.msra.mxu0 0
        %661 = vmatprep.subr.bf16.mxu0 0
        %662 = vmatpush2.bf16.msra.mxu0 0
        %663 = vmatprep.subr.bf16.mxu0 0
        %664 = vmatpush2.bf16.msra.mxu0 0
        %665 = vmatprep.subr.bf16.mxu0 0
        %666 = vmatpush2.bf16.msra.mxu0 0
        %667 = vmatprep.subr.bf16.mxu0 0
        %668 = vmatpush2.bf16.msra.mxu0 0
        %669 = vmatprep.subr.bf16.mxu0 0
        %670 = vmatpush2.bf16.msra.mxu0 0
        %671 = vmatprep.subr.bf16.mxu0 0
        %672 = vmatpush2.bf16.msra.mxu0 0
        %673 = vmatprep.subr.bf16.mxu0 0
        %674 = vmatpush2.bf16.msra.mxu0 0
        %675 = vmatprep.mubr.bf16.mxu0 0
        %676 = vmatmul.mubr.bf16.gmra.mxu0 %v629
        %v677 = vpop.f32.mrf.mxu0
        %v678 = vadd.f32 0.0, %v677
        %v679 = vpop.f32.mrf.mxu0
        %v680 = vpop.f32.mrf.mxu0
        %v681 = vadd.f32 0.0, %v680
        %v682 = vpop.f32.mrf.mxu0
        %683 = vmatprep.mubr.bf16.mxu0 0
        %684 = vmatmul.mubr.bf16.gmra.mxu0 %v632
        %v685 = vpop.f32.mrf.mxu0
        %v686 = vadd.f32 0.0, %v685
        %v687 = vpop.f32.mrf.mxu0
        %v688 = vpop.f32.mrf.mxu0
        %v689 = vadd.f32 0.0, %v688
        %v690 = vpop.f32.mrf.mxu0
        %691 = vmatprep.mubr.bf16.mxu0 0
        %692 = vmatmul.mubr.bf16.gmra.mxu0 %v635
        %v693 = vpop.f32.mrf.mxu0
        %v694 = vadd.f32 0.0, %v693
        %v695 = vpop.f32.mrf.mxu0
        %v696 = vpop.f32.mrf.mxu0
        %v697 = vadd.f32 0.0, %v696
        %v698 = vpop.f32.mrf.mxu0
        %699 = vmatprep.mubr.bf16.mxu0 0
        %700 = vmatmul.mubr.bf16.gmra.mxu0 %v638
        %v701 = vpop.f32.mrf.mxu0
        %v702 = vadd.f32 0.0, %v701
        %v703 = vpop.f32.mrf.mxu0
        %v704 = vpop.f32.mrf.mxu0
        %v705 = vadd.f32 0.0, %v704
        %v706 = vpop.f32.mrf.mxu0
        %707 = vdwg.mxu0
        %v708 = vsel %vm455, %v678, -inf
        %709 = vmax.xlane.f32.xlu0 %v708
        %v710 = vpop.xlane.xlu0 %709
        %v711 = vsel %vm455, %v681, -inf
        %712 = vmax.xlane.f32.xlu0 %v711
        %v713 = vpop.xlane.xlu0 %712
        %v714 = vsel %vm455, %v686, -inf
        %715 = vmax.xlane.f32.xlu0 %v714
        %v716 = vpop.xlane.xlu0 %715
        %v717 = vsel %vm455, %v689, -inf
        %718 = vmax.xlane.f32.xlu0 %v717
        %v719 = vpop.xlane.xlu0 %718
        %v720 = vsel %vm455, %v694, -inf
        %721 = vmax.xlane.f32.xlu0 %v720
        %v722 = vpop.xlane.xlu0 %721
        %v723 = vsel %vm455, %v697, -inf
        %724 = vmax.xlane.f32.xlu0 %v723
        %v725 = vpop.xlane.xlu0 %724
        %v726 = vsel %vm455, %v702, -inf
        %727 = vmax.xlane.f32.xlu0 %v726
        %v728 = vpop.xlane.xlu0 %727
        %v729 = vsel %vm455, %v705, -inf
        %730 = vmax.xlane.f32.xlu0 %v729
        %v731 = vpop.xlane.xlu0 %730
        %v732 = vsub.f32 %v678, %v710
        %v733 = vsub.f32 %v681, %v713
        %v734 = vsub.f32 %v686, %v716
        %v735 = vsub.f32 %v689, %v719
        %v736 = vsub.f32 %v694, %v722
        %v737 = vsub.f32 %v697, %v725
        %v738 = vsub.f32 %v702, %v728
        %v739 = vsub.f32 %v705, %v731
        %v740 = vmul.f32 %v732, 1.442695
        %v741 = vpow.pop %v740
        %v742 = vmul.f32 %v733, 1.442695
        %v743 = vpow.pop %v742
        %v744 = vmul.f32 %v734, 1.442695
        %v745 = vpow.pop %v744
        %v746 = vmul.f32 %v735, 1.442695
        %v747 = vpow.pop %v746
        %v748 = vmul.f32 %v736, 1.442695
        %v749 = vpow.pop %v748
        %v750 = vmul.f32 %v737, 1.442695
        %v751 = vpow.pop %v750
        %v752 = vmul.f32 %v738, 1.442695
        %v753 = vpow.pop %v752
        %v754 = vmul.f32 %v739, 1.442695
        %v755 = vpow.pop %v754
        %v756 = vsel %vm455, %v741, 0.0
        %757 = vadd.xlane.f32.xlu0 %v756
        %v758 = vpop.xlane.xlu0 %757
        %v759 = vsel %vm455, %v743, 0.0
        %760 = vadd.xlane.f32.xlu0 %v759
        %v761 = vpop.xlane.xlu0 %760
        %v762 = vsel %vm455, %v745, 0.0
        %763 = vadd.xlane.f32.xlu0 %v762
        %v764 = vpop.xlane.xlu0 %763
        %v765 = vsel %vm455, %v747, 0.0
        %766 = vadd.xlane.f32.xlu0 %v765
        %v767 = vpop.xlane.xlu0 %766
        %v768 = vsel %vm455, %v749, 0.0
        %769 = vadd.xlane.f32.xlu0 %v768
        %v770 = vpop.xlane.xlu0 %769
        %v771 = vsel %vm455, %v751, 0.0
        %772 = vadd.xlane.f32.xlu0 %v771
        %v773 = vpop.xlane.xlu0 %772
        %v774 = vsel %vm455, %v753, 0.0
        %775 = vadd.xlane.f32.xlu0 %v774
        %v776 = vpop.xlane.xlu0 %775
        %v777 = vsel %vm455, %v755, 0.0
        %778 = vadd.xlane.f32.xlu0 %v777
        %v779 = vpop.xlane.xlu0 %778
        %v780 = vrcp.pop %v758
        %v781 = vrcp.pop %v761
        %v782 = vrcp.pop %v764
        %v783 = vrcp.pop %v767
        %v784 = vrcp.pop %v770
        %v785 = vrcp.pop %v773
        %v786 = vrcp.pop %v776
        %v787 = vrcp.pop %v779
        %v788 = vmul.f32 %v741, %v780
        %v789 = vmul.f32 %v743, %v781
        %v790 = vmul.f32 %v745, %v782
        %v791 = vmul.f32 %v747, %v783
        %v792 = vmul.f32 %v749, %v784
        %v793 = vmul.f32 %v751, %v785
        %v794 = vmul.f32 %v753, %v786
        %v795 = vmul.f32 %v755, %v787
        %v796 = vpack.c.bf16 %v789, %v788
        %v797 = vpack.c.bf16 %v791, %v790
        %v798 = vpack.c.bf16 %v793, %v792
        %v799 = vpack.c.bf16 %v795, %v794
        %801 = vrot.lane.b32.xlu0 %v544, 64
        %v802 = vpop.permute.xlu0 %801
        %v804 = vsel %vm455, %v802, 0
        %v807 = vsel %vm455, %v796, 0
        %v810 = vsel %vm455, %v797, 0
        %v813 = vsel %vm455, %v798, 0
        %v816 = vsel %vm455, %v799, 0
        %818 = vmatprep.subr.bf16.mxu0 0
        %819 = vmatpush1.bf16.xpose.msra.mxu0 0
        %820 = vmatprep.subr.bf16.mxu0 0
        %821 = vmatpush1.bf16.xpose.msra.mxu0 0
        %822 = vmatprep.subr.bf16.mxu0 0
        %823 = vmatpush1.bf16.xpose.msra.mxu0 0
        %824 = vmatprep.subr.bf16.mxu0 0
        %825 = vmatpush1.bf16.xpose.msra.mxu0 0
        %826 = vmatprep.subr.bf16.mxu0 0
        %827 = vmatpush1.bf16.xpose.msra.mxu0 %v816
        %828 = vmatprep.subr.bf16.mxu0 0
        %829 = vmatpush1.bf16.xpose.msra.mxu0 %v813
        %830 = vmatprep.subr.bf16.mxu0 0
        %831 = vmatpush1.bf16.xpose.msra.mxu0 %v810
        %832 = vmatprep.subr.bf16.mxu0 0
        %833 = vmatpush1.bf16.xpose.msra.mxu0 %v807
        %834 = vmatprep.subr.bf16.mxu0 0
        %835 = vmatpush2.bf16.xpose.msra.mxu0 0
        %836 = vmatprep.subr.bf16.mxu0 0
        %837 = vmatpush2.bf16.xpose.msra.mxu0 0
        %838 = vmatprep.subr.bf16.mxu0 0
        %839 = vmatpush2.bf16.xpose.msra.mxu0 0
        %840 = vmatprep.subr.bf16.mxu0 0
        %841 = vmatpush2.bf16.xpose.msra.mxu0 0
        %842 = vmatprep.subr.bf16.mxu0 0
        %843 = vmatpush2.bf16.xpose.msra.mxu0 0
        %844 = vmatprep.subr.bf16.mxu0 0
        %845 = vmatpush2.bf16.xpose.msra.mxu0 0
        %846 = vmatprep.subr.bf16.mxu0 0
        %847 = vmatpush2.bf16.xpose.msra.mxu0 0
        %848 = vmatprep.subr.bf16.mxu0 0
        %849 = vmatpush2.bf16.xpose.msra.mxu0 0
        %850 = vmatprep.mubr.bf16.mxu0 0
        %851 = vmatmul.mubr.bf16.gmra.mxu0 %v804
        %v852 = vpop.f32.mrf.mxu0
        %v853 = vadd.f32 0.0, %v852
        %v854 = vpop.f32.mrf.mxu0
        %v855 = vpop.f32.mrf.mxu0
        %v856 = vadd.f32 0.0, %v855
        %v857 = vpop.f32.mrf.mxu0
        %858 = vdwg.mxu0
        %861 = vrot.lane.b32.xlu0 %v853, 64
        %v862 = vpop.permute.xlu0 %861
        %863 = vrot.lane.b32.xlu0 %v856, 64
        %v864 = vpop.permute.xlu0 %863
        %v867 = vsel %vm455, %v599, %v862
        %v868 = vsel %vm455, %v602, %v864
        %s869 = smul.u32 %s16, 128
        %s870 = sld [smem:[#allocation2 + %s869]]
        %v871 = vstv %s870
        %v872 = vmul.f32 %v871, %v867
        %v873 = vmul.f32 %v871, %v868
        %v874 = vunpack.c.l.bf16 %v253
        %v875 = vunpack.c.l.bf16 %v254
        %v876 = vadd.f32 %v872, %v874
        %v877 = vadd.f32 %v873, %v875
        %v878 = vpack.c.bf16 %v877, %v876
        %v880 = vunpack.c.l.b16 %v878
        %v881 = vunpack.c.h.b16 %v878
        %v882 = vpack.c.b16 %v880, %v880
        %v883 = vpack.c.b16 %v881, %v881
        %886 = vst [vmem:[%s251] sm:$0xf] %v882
        %887 = vst [vmem:[%s251 + $0x4] sm:$0xf] %v883
        %p888 = scmp.lt.s32.totalorder %s16, 1
        %s889 = scalar_select %p888, %s16, 1
        %s890 = smul.addr %s889, 2
        %s891 = smul.addr %s890, 4
        %s892 = scalar_lea.vmem %s4, %s891
        // Predicated region
        $region41: #{_lambda_.8} parent=35 // pred_check
          %p893 = pneg %p133
        $region42: #{_lambda_.8} parent=35 // pred_check_branch
          %895 = sbr.rel (%p893) target = $region44
        $region43: #{_lambda_.8} parent=35 // pred_region
          _
        $region44: #{_lambda_.8} parent=35 // pred_fallthru
          _
      $region36: #{_lambda_.8} parent=5 // pred_fallthru
        _
      %p896 = scmp.le.s32.totalorder 2, %s11
      // Predicated region
      $region45: #{_lambda_.8} parent=5 // pred_check
        %p897 = pneg %p896
      $region46: #{_lambda_.8} parent=5 // pred_check_branch
        %899 = sbr.rel (%p897) target = $region48
      $region47: #{_lambda_.8} parent=5 // pred_region
        %s900 = ssub.s32 %s11, 2
        // Predicated region
        $region49: #{_lambda_.8} parent=47 // pred_check
          %p901 = pneg %p139
        $region50: #{_lambda_.8} parent=47 // pred_check_branch
          %903 = sbr.rel (%p901) target = $region52
        $region51: #{_lambda_.8} parent=47 // pred_region
          %p904 = scmp.lt.s32.totalorder %s17, 1
          %s905 = scalar_select %p904, %s17, 1
          %s906 = smul.addr %s905, 2
          %s907 = smul.addr %s906, 4
          %s908 = scalar_lea.vmem %s4, %s907
        $region52: #{_lambda_.8} parent=47 // pred_fallthru
          _
      $region48: #{_lambda_.8} parent=5 // pred_fallthru
        _
    $region6: #{_lambda_.8} parent=1 // loop_footer
      %s15 = sadd.s32 1, %s11
    $region7: #{_lambda_.8} parent=1 // loop_footer_branch
      %10 = sbr.rel target = $region3
    $region8: #{_lambda_.8} parent=1 // loop_exit
      _
    %909 = vsyncpa [#allocation3], 1
    %s910 = scalar_lea.sflag [#allocation3], 1
    %911 = vsyncpa %s910, 1

// kernel: squeeze.13
$region0: #{squeeze.13}
  %s0 = inlined_call_operand.vmem [shape: bf16[1,16,98], index: 0, kind: input, shape index: {}]
  %s1 = inlined_call_operand.vmem [shape: bf16[16,2,7,7], index: 1, kind: output, shape index: {}]
  $region1: #{squeeze.13} parent=0
    #allocation0 [shape = 'u8[57344]{0}', space=vmem, size = 0xe000, scoped, tag = 'scoped mem for output reshape']
    #allocation1 [shape = 'u8[53248]{0}', space=vmem, size = 0xd000, scoped, tag = 'scoped mem for input reshape']
    %s3 = smul.u32 4, 2
    %s4 = sshll.u32 1, %s3
    %s5 = ssub.s32 %s4, 1
    %s6 = smul.addr 4, 12
    %s7 = scalar_lea.vmem %s0, %s6
    %s8 = sshrl.u32 %s5, 1
    %s9 = sor.u32 %s5, %s8
    %s10 = sand.u32 %s9, 85
    %s11 = sshrl.u32 %s10, 1
    %s12 = sor.u32 %s10, %s11
    %s13 = sand.u32 51, %s12
    %s14 = sshrl.u32 %s13, 2
    %s15 = sor.u32 %s13, %s14
    %s16 = sand.u32 15, %s15
    %v17 = vld [vmem:[%s7] sm:%s16]
    %v18 = vunpack.c.l.bf16 %v17
    %v19 = vunpack.c.h.bf16 %v17
    %s20 = scalar_lea.vmem [#allocation1], 96
    %21 = vst [vmem:[%s20] sm:%s5] %v18
    %s22 = smul.addr 4, 11
    %s23 = scalar_lea.vmem %s0, %s22
    %s24 = sshrl.u32 %s5, 1
    %s25 = sor.u32 %s5, %s24
    %s26 = sand.u32 %s25, 85
    %s27 = sshrl.u32 %s26, 1
    %s28 = sor.u32 %s26, %s27
    %s29 = sand.u32 51, %s28
    %s30 = sshrl.u32 %s29, 2
    %s31 = sor.u32 %s29, %s30
    %s32 = sand.u32 15, %s31
    %v33 = vld [vmem:[%s23] sm:%s32]
    %v34 = vunpack.c.l.bf16 %v33
    %v35 = vunpack.c.h.bf16 %v33
    %s36 = scalar_lea.vmem [#allocation1], 88
    %37 = vst [vmem:[%s36] sm:%s5] %v34
    %s38 = smul.addr 4, 10
    %s39 = scalar_lea.vmem %s0, %s38
    %s40 = sshrl.u32 %s5, 1
    %s41 = sor.u32 %s5, %s40
    %s42 = sand.u32 %s41, 85
    %s43 = sshrl.u32 %s42, 1
    %s44 = sor.u32 %s42, %s43
    %s45 = sand.u32 51, %s44
    %s46 = sshrl.u32 %s45, 2
    %s47 = sor.u32 %s45, %s46
    %s48 = sand.u32 15, %s47
    %v49 = vld [vmem:[%s39] sm:%s48]
    %v50 = vunpack.c.l.bf16 %v49
    %v51 = vunpack.c.h.bf16 %v49
    %s52 = scalar_lea.vmem [#allocation1], 80
    %53 = vst [vmem:[%s52] sm:%s5] %v50
    %s54 = smul.addr 4, 9
    %s55 = scalar_lea.vmem %s0, %s54
    %s56 = sshrl.u32 %s5, 1
    %s57 = sor.u32 %s5, %s56
    %s58 = sand.u32 %s57, 85
    %s59 = sshrl.u32 %s58, 1
    %s60 = sor.u32 %s58, %s59
    %s61 = sand.u32 51, %s60
    %s62 = sshrl.u32 %s61, 2
    %s63 = sor.u32 %s61, %s62
    %s64 = sand.u32 15, %s63
    %v65 = vld [vmem:[%s55] sm:%s64]
    %v66 = vunpack.c.l.bf16 %v65
    %v67 = vunpack.c.h.bf16 %v65
    %s68 = scalar_lea.vmem [#allocation1], 72
    %69 = vst [vmem:[%s68] sm:%s5] %v66
    %s70 = smul.addr 4, 8
    %s71 = scalar_lea.vmem %s0, %s70
    %s72 = sshrl.u32 %s5, 1
    %s73 = sor.u32 %s5, %s72
    %s74 = sand.u32 %s73, 85
    %s75 = sshrl.u32 %s74, 1
    %s76 = sor.u32 %s74, %s75
    %s77 = sand.u32 51, %s76
    %s78 = sshrl.u32 %s77, 2
    %s79 = sor.u32 %s77, %s78
    %s80 = sand.u32 15, %s79
    %v81 = vld [vmem:[%s71] sm:%s80]
    %v82 = vunpack.c.l.bf16 %v81
    %v83 = vunpack.c.h.bf16 %v81
    %s84 = scalar_lea.vmem [#allocation1], 64
    %85 = vst [vmem:[%s84] sm:%s5] %v82
    %s86 = smul.addr 4, 7
    %s87 = scalar_lea.vmem %s0, %s86
    %s88 = sshrl.u32 %s5, 1
    %s89 = sor.u32 %s5, %s88
    %s90 = sand.u32 %s89, 85
    %s91 = sshrl.u32 %s90, 1
    %s92 = sor.u32 %s90, %s91
    %s93 = sand.u32 51, %s92
    %s94 = sshrl.u32 %s93, 2
    %s95 = sor.u32 %s93, %s94
    %s96 = sand.u32 15, %s95
    %v97 = vld [vmem:[%s87] sm:%s96]
    %v98 = vunpack.c.l.bf16 %v97
    %v99 = vunpack.c.h.bf16 %v97
    %s100 = scalar_lea.vmem [#allocation1], 56
    %101 = vst [vmem:[%s100] sm:%s5] %v98
    %s102 = smul.addr 4, 6
    %s103 = scalar_lea.vmem %s0, %s102
    %s104 = sshrl.u32 %s5, 1
    %s105 = sor.u32 %s5, %s104
    %s106 = sand.u32 %s105, 85
    %s107 = sshrl.u32 %s106, 1
    %s108 = sor.u32 %s106, %s107
    %s109 = sand.u32 51, %s108
    %s110 = sshrl.u32 %s109, 2
    %s111 = sor.u32 %s109, %s110
    %s112 = sand.u32 15, %s111
    %v113 = vld [vmem:[%s103] sm:%s112]
    %v114 = vunpack.c.l.bf16 %v113
    %v115 = vunpack.c.h.bf16 %v113
    %s116 = scalar_lea.vmem [#allocation1], 48
    %117 = vst [vmem:[%s116] sm:%s5] %v114
    %s118 = smul.addr 4, 5
    %s119 = scalar_lea.vmem %s0, %s118
    %s120 = sshrl.u32 %s5, 1
    %s121 = sor.u32 %s5, %s120
    %s122 = sand.u32 %s121, 85
    %s123 = sshrl.u32 %s122, 1
    %s124 = sor.u32 %s122, %s123
    %s125 = sand.u32 51, %s124
    %s126 = sshrl.u32 %s125, 2
    %s127 = sor.u32 %s125, %s126
    %s128 = sand.u32 15, %s127
    %v129 = vld [vmem:[%s119] sm:%s128]
    %v130 = vunpack.c.l.bf16 %v129
    %v131 = vunpack.c.h.bf16 %v129
    %s132 = scalar_lea.vmem [#allocation1], 40
    %133 = vst [vmem:[%s132] sm:%s5] %v130
    %s134 = smul.addr 4, 4
    %s135 = scalar_lea.vmem %s0, %s134
    %s136 = sshrl.u32 %s5, 1
    %s137 = sor.u32 %s5, %s136
    %s138 = sand.u32 %s137, 85
    %s139 = sshrl.u32 %s138, 1
    %s140 = sor.u32 %s138, %s139
    %s141 = sand.u32 51, %s140
    %s142 = sshrl.u32 %s141, 2
    %s143 = sor.u32 %s141, %s142
    %s144 = sand.u32 15, %s143
    %v145 = vld [vmem:[%s135] sm:%s144]
    %v146 = vunpack.c.l.bf16 %v145
    %v147 = vunpack.c.h.bf16 %v145
    %s148 = scalar_lea.vmem [#allocation1], 32
    %149 = vst [vmem:[%s148] sm:%s5] %v146
    %s150 = smul.addr 4, 3
    %s151 = scalar_lea.vmem %s0, %s150
    %s152 = sshrl.u32 %s5, 1
    %s153 = sor.u32 %s5, %s152
    %s154 = sand.u32 %s153, 85
    %s155 = sshrl.u32 %s154, 1
    %s156 = sor.u32 %s154, %s155
    %s157 = sand.u32 51, %s156
    %s158 = sshrl.u32 %s157, 2
    %s159 = sor.u32 %s157, %s158
    %s160 = sand.u32 15, %s159
    %v161 = vld [vmem:[%s151] sm:%s160]
    %v162 = vunpack.c.l.bf16 %v161
    %v163 = vunpack.c.h.bf16 %v161
    %s164 = scalar_lea.vmem [#allocation1], 24
    %165 = vst [vmem:[%s164] sm:%s5] %v162
    %s166 = smul.addr 4, 2
    %s167 = scalar_lea.vmem %s0, %s166
    %s168 = sshrl.u32 %s5, 1
    %s169 = sor.u32 %s5, %s168
    %s170 = sand.u32 %s169, 85
    %s171 = sshrl.u32 %s170, 1
    %s172 = sor.u32 %s170, %s171
    %s173 = sand.u32 51, %s172
    %s174 = sshrl.u32 %s173, 2
    %s175 = sor.u32 %s173, %s174
    %s176 = sand.u32 15, %s175
    %v177 = vld [vmem:[%s167] sm:%s176]
    %v178 = vunpack.c.l.bf16 %v177
    %v179 = vunpack.c.h.bf16 %v177
    %s180 = scalar_lea.vmem [#allocation1], 16
    %181 = vst [vmem:[%s180] sm:%s5] %v178
    %s182 = scalar_lea.vmem %s0, 4
    %s183 = sshrl.u32 %s5, 1
    %s184 = sor.u32 %s5, %s183
    %s185 = sand.u32 %s184, 85
    %s186 = sshrl.u32 %s185, 1
    %s187 = sor.u32 %s185, %s186
    %s188 = sand.u32 51, %s187
    %s189 = sshrl.u32 %s188, 2
    %s190 = sor.u32 %s188, %s189
    %s191 = sand.u32 15, %s190
    %v192 = vld [vmem:[%s182] sm:%s191]
    %v193 = vunpack.c.l.bf16 %v192
    %v194 = vunpack.c.h.bf16 %v192
    %s195 = scalar_lea.vmem [#allocation1], 8
    %196 = vst [vmem:[%s195] sm:%s5] %v193
    %s197 = sshrl.u32 %s5, 1
    %s198 = sor.u32 %s5, %s197
    %s199 = sand.u32 %s198, 85
    %s200 = sshrl.u32 %s199, 1
    %s201 = sor.u32 %s199, %s200
    %s202 = sand.u32 51, %s201
    %s203 = sshrl.u32 %s202, 2
    %s204 = sor.u32 %s202, %s203
    %s205 = sand.u32 15, %s204
    %v206 = vld [vmem:[%s0] sm:%s205]
    %v207 = vunpack.c.l.bf16 %v206
    %v208 = vunpack.c.h.bf16 %v206
    %209 = vst [vmem:[#allocation1] sm:%s5] %v207
    %v210 = vld [vmem:[#allocation1] sm:$0xff]
    %vm211 = vcmask 130048
    %212 = vst.msk [vmem:[#allocation0] sm:$0x7f] %vm211, %v210
    %s213 = scalar_lea.vmem [#allocation0], 1
    %214 = vst.msk [vmem:[%s213] sm:$0x80] %vm211, %v210
    %s215 = scalar_lea.vmem [#allocation1], 8
    %v216 = vld [vmem:[%s215] sm:$0xff]
    %vm217 = vcmask 130048
    %s218 = scalar_lea.vmem [#allocation0], 9
    %219 = vst.msk [vmem:[%s218] sm:$0x3f] %vm217, %v216
    %s220 = scalar_lea.vmem [#allocation0], 10
    %221 = vst.msk [vmem:[%s220] sm:$0xc0] %vm217, %v216
    %s222 = scalar_lea.vmem [#allocation1], 16
    %v223 = vld [vmem:[%s222] sm:$0xff]
    %vm224 = vcmask 130048
    %s225 = scalar_lea.vmem [#allocation0], 18
    %226 = vst.msk [vmem:[%s225] sm:$0x1f] %vm224, %v223
    %s227 = scalar_lea.vmem [#allocation0], 19
    %228 = vst.msk [vmem:[%s227] sm:$0xe0] %vm224, %v223
    %s229 = scalar_lea.vmem [#allocation1], 24
    %v230 = vld [vmem:[%s229] sm:$0xff]
    %vm231 = vcmask 130048
    %s232 = scalar_lea.vmem [#allocation0], 27
    %233 = vst.msk [vmem:[%s232] sm:$0xf] %vm231, %v230
    %s234 = scalar_lea.vmem [#allocation0], 28
    %235 = vst.msk [vmem:[%s234] sm:$0xf0] %vm231, %v230
    %s236 = scalar_lea.vmem [#allocation1], 32
    %v237 = vld [vmem:[%s236] sm:$0xff]
    %vm238 = vcmask 130048
    %s239 = scalar_lea.vmem [#allocation0], 36
    %240 = vst.msk [vmem:[%s239] sm:$0x7] %vm238, %v237
    %s241 = scalar_lea.vmem [#allocation0], 37
    %242 = vst.msk [vmem:[%s241] sm:$0xf8] %vm238, %v237
    %s243 = scalar_lea.vmem [#allocation1], 40
    %v244 = vld [vmem:[%s243] sm:$0xff]
    %vm245 = vcmask 130048
    %s246 = scalar_lea.vmem [#allocation0], 45
    %247 = vst.msk [vmem:[%s246] sm:$0x3] %vm245, %v244
    %s248 = scalar_lea.vmem [#allocation0], 46
    %249 = vst.msk [vmem:[%s248] sm:$0xfc] %vm245, %v244
    %s250 = scalar_lea.vmem [#allocation1], 48
    %v251 = vld [vmem:[%s250] sm:$0xff]
    %vm252 = vcmask 130048
    %s253 = scalar_lea.vmem [#allocation0], 54
    %254 = vst.msk [vmem:[%s253] ss:$2 sm:$0x3] %vm252, %v251
    %s255 = scalar_lea.vmem [#allocation0], 55
    %256 = vst.msk [vmem:[%s255] sm:$0xfc] %vm252, %v251
    %s257 = scalar_lea.vmem [#allocation1], 56
    %v258 = vld [vmem:[%s257] sm:$0xff]
    %vm259 = vcmask 130048
    %s260 = scalar_lea.vmem [#allocation0], 64
    %261 = vst.msk [vmem:[%s260] sm:$0x7f] %vm259, %v258
    %s262 = scalar_lea.vmem [#allocation0], 65
    %263 = vst.msk [vmem:[%s262] sm:$0x80] %vm259, %v258
    %s264 = scalar_lea.vmem [#allocation1], 64
    %v265 = vld [vmem:[%s264] sm:$0xff]
    %vm266 = vcmask 130048
    %s267 = scalar_lea.vmem [#allocation0], 73
    %268 = vst.msk [vmem:[%s267] sm:$0x3f] %vm266, %v265
    %s269 = scalar_lea.vmem [#allocation0], 74
    %270 = vst.msk [vmem:[%s269] sm:$0xc0] %vm266, %v265
    %s271 = scalar_lea.vmem [#allocation1], 72
    %v272 = vld [vmem:[%s271] sm:$0xff]
    %vm273 = vcmask 130048
    %s274 = scalar_lea.vmem [#allocation0], 82
    %275 = vst.msk [vmem:[%s274] sm:$0x1f] %vm273, %v272
    %s276 = scalar_lea.vmem [#allocation0], 83
    %277 = vst.msk [vmem:[%s276] sm:$0xe0] %vm273, %v272
    %s278 = scalar_lea.vmem [#allocation1], 80
    %v279 = vld [vmem:[%s278] sm:$0xff]
    %vm280 = vcmask 130048
    %s281 = scalar_lea.vmem [#allocation0], 91
    %282 = vst.msk [vmem:[%s281] sm:$0xf] %vm280, %v279
    %s283 = scalar_lea.vmem [#allocation0], 92
    %284 = vst.msk [vmem:[%s283] sm:$0xf0] %vm280, %v279
    %s285 = scalar_lea.vmem [#allocation1], 88
    %v286 = vld [vmem:[%s285] sm:$0xff]
    %vm287 = vcmask 130048
    %s288 = scalar_lea.vmem [#allocation0], 100
    %289 = vst.msk [vmem:[%s288] sm:$0x7] %vm287, %v286
    %s290 = scalar_lea.vmem [#allocation0], 101
    %291 = vst.msk [vmem:[%s290] sm:$0xf8] %vm287, %v286
    %s292 = scalar_lea.vmem [#allocation1], 96
    %v293 = vld [vmem:[%s292] sm:$0x3]
    %vm294 = vcmask 130048
    %s295 = scalar_lea.vmem [#allocation0], 109
    %296 = vst.msk [vmem:[%s295] sm:$0x3] %vm294, %v293
    %s298 = smul.u32 4, 2
    %s299 = sshll.u32 1, %s298
    %s300 = ssub.s32 %s299, 1
    %s301 = sshrl.u32 %s298, 1
    %v302 = vld [vmem:[#allocation0] sm:%s300]
    %v303 = vpack.c.bf16 0.0, %v302
    %s304 = sshll.u32 1, %s301
    %s305 = ssub.s32 %s304, 1
    %306 = vst [vmem:[%s1] sm:%s305] %v303
    %s307 = scalar_lea.vmem [#allocation0], 8
    %v308 = vld [vmem:[%s307] sm:%s300]
    %v309 = vpack.c.bf16 0.0, %v308
    %s310 = sshll.u32 1, %s301
    %s311 = ssub.s32 %s310, 1
    %s312 = scalar_lea.vmem %s1, 4
    %313 = vst [vmem:[%s312] sm:%s311] %v309
    %s314 = scalar_lea.vmem [#allocation0], 16
    %v315 = vld [vmem:[%s314] sm:%s300]
    %v316 = vpack.c.bf16 0.0, %v315
    %s317 = sshll.u32 1, %s301
    %s318 = ssub.s32 %s317, 1
    %s319 = smul.addr 4, 2
    %s320 = scalar_lea.vmem %s1, %s319
    %321 = vst [vmem:[%s320] sm:%s318] %v316
    %s322 = scalar_lea.vmem [#allocation0], 24
    %v323 = vld [vmem:[%s322] sm:%s300]
    %v324 = vpack.c.bf16 0.0, %v323
    %s325 = sshll.u32 1, %s301
    %s326 = ssub.s32 %s325, 1
    %s327 = smul.addr 4, 3
    %s328 = scalar_lea.vmem %s1, %s327
    %329 = vst [vmem:[%s328] sm:%s326] %v324
    %s330 = scalar_lea.vmem [#allocation0], 32
    %v331 = vld [vmem:[%s330] sm:%s300]
    %v332 = vpack.c.bf16 0.0, %v331
    %s333 = sshll.u32 1, %s301
    %s334 = ssub.s32 %s333, 1
    %s335 = smul.addr 4, 4
    %s336 = scalar_lea.vmem %s1, %s335
    %337 = vst [vmem:[%s336] sm:%s334] %v332
    %s338 = scalar_lea.vmem [#allocation0], 40
    %v339 = vld [vmem:[%s338] sm:%s300]
    %v340 = vpack.c.bf16 0.0, %v339
    %s341 = sshll.u32 1, %s301
    %s342 = ssub.s32 %s341, 1
    %s343 = smul.addr 4, 5
    %s344 = scalar_lea.vmem %s1, %s343
    %345 = vst [vmem:[%s344] sm:%s342] %v340
    %s346 = scalar_lea.vmem [#allocation0], 48
    %v347 = vld [vmem:[%s346] sm:%s300]
    %v348 = vpack.c.bf16 0.0, %v347
    %s349 = sshll.u32 1, %s301
    %s350 = ssub.s32 %s349, 1
    %s351 = smul.addr 4, 6
    %s352 = scalar_lea.vmem %s1, %s351
    %353 = vst [vmem:[%s352] sm:%s350] %v348
    %s354 = scalar_lea.vmem [#allocation0], 56
    %v355 = vld [vmem:[%s354] sm:%s300]
    %v356 = vpack.c.bf16 0.0, %v355
    %s357 = sshll.u32 1, %s301
    %s358 = ssub.s32 %s357, 1
    %s359 = smul.addr 4, 7
    %s360 = scalar_lea.vmem %s1, %s359
    %361 = vst [vmem:[%s360] sm:%s358] %v356
    %s362 = scalar_lea.vmem [#allocation0], 64
    %v363 = vld [vmem:[%s362] sm:%s300]
    %v364 = vpack.c.bf16 0.0, %v363
    %s365 = sshll.u32 1, %s301
    %s366 = ssub.s32 %s365, 1
    %s367 = smul.addr 4, 8
    %s368 = scalar_lea.vmem %s1, %s367
    %369 = vst [vmem:[%s368] sm:%s366] %v364
    %s370 = scalar_lea.vmem [#allocation0], 72
    %v371 = vld [vmem:[%s370] sm:%s300]
    %v372 = vpack.c.bf16 0.0, %v371
    %s373 = sshll.u32 1, %s301
    %s374 = ssub.s32 %s373, 1
    %s375 = smul.addr 4, 9
    %s376 = scalar_lea.vmem %s1, %s375
    %377 = vst [vmem:[%s376] sm:%s374] %v372
    %s378 = scalar_lea.vmem [#allocation0], 80
    %v379 = vld [vmem:[%s378] sm:%s300]
    %v380 = vpack.c.bf16 0.0, %v379
    %s381 = sshll.u32 1, %s301
    %s382 = ssub.s32 %s381, 1
    %s383 = smul.addr 4, 10
    %s384 = scalar_lea.vmem %s1, %s383
    %385 = vst [vmem:[%s384] sm:%s382] %v380
    %s386 = scalar_lea.vmem [#allocation0], 88
    %v387 = vld [vmem:[%s386] sm:%s300]
    %v388 = vpack.c.bf16 0.0, %v387
    %s389 = sshll.u32 1, %s301
    %s390 = ssub.s32 %s389, 1
    %s391 = smul.addr 4, 11
    %s392 = scalar_lea.vmem %s1, %s391
    %393 = vst [vmem:[%s392] sm:%s390] %v388
    %s394 = scalar_lea.vmem [#allocation0], 96
    %v395 = vld [vmem:[%s394] sm:%s300]
    %v396 = vpack.c.bf16 0.0, %v395
    %s397 = sshll.u32 1, %s301
    %s398 = ssub.s32 %s397, 1
    %s399 = smul.addr 4, 12
    %s400 = scalar_lea.vmem %s1, %s399
    %401 = vst [vmem:[%s400] sm:%s398] %v396
    %s402 = scalar_lea.vmem [#allocation0], 104
    %v403 = vld [vmem:[%s402] sm:%s300]
    %v404 = vpack.c.bf16 0.0, %v403
    %s405 = sshll.u32 1, %s301
    %s406 = ssub.s32 %s405, 1
    %s407 = smul.addr 4, 13
    %s408 = scalar_lea.vmem %s1, %s407
    %409 = vst [vmem:[%s408] sm:%s406] %v404

// kernel: _lambda_.9
$region0: #{_lambda_.9}
  #allocation0 [shape = 'u32[]', space=smem, size = 0x4, offset = 0x4, fixed_abs, tag = 'smem constant byte address 0x4 - core index']
  #allocation1 [shape = 'u32[144,128]{1,0:T(1,128)}', space=vmem, size = 0x12000, scoped, tag = 'internal scratch']
  %s0 = inlined_call_operand.vmem [shape: bf16[2,256,128], index: 0, kind: input, shape index: {}]
  %s1 = inlined_call_operand.vmem [shape: bf16[2,16,256], index: 1, kind: input, shape index: {}]
  %s2 = inlined_call_operand.vmem [shape: f32[2,16,1], index: 2, kind: input, shape index: {}]
  %s3 = inlined_call_operand.vmem [shape: f32[2,16,1], index: 3, kind: input, shape index: {}]
  %s4 = inlined_call_operand.vmem [shape: bf16[2,16,128], index: 4, kind: output, shape index: {}]
  %s5 = sld [smem:[#allocation0]]
  $region49: #{_lambda_.9} parent=0
    _
  %s7 = ssub.s32 1, %s5
  %s8 = scalar_select 0, %s7, %s5
  loop: start=0, step=1, limit=4
  $region2: #{_lambda_.9} parent=0 // loop_pre_header
    _
  $region3: #{_lambda_.9} parent=0 // loop_header
    %s10 = sphi 0, %s14
    %p11 = scmp.ge.s32.totalorder %s10, 4
    %s20 = sphi 0, %s22
    %s23 = sphi 0, %s20
    %s24 = sphi 0, %s23
    %s40 = sphi 0, %s24
    %s46 = sphi 0, %s48
    %s49 = sphi 0, %s46
    %s50 = sphi 0, %s49
    %s66 = sphi 0, %s50
    %s72 = sphi 0, %s74
    %s75 = sphi 0, %s72
    %s76 = sphi 0, %s75
    %s92 = sphi 0, %s76
    %s98 = sphi 0, %s100
    %s101 = sphi 0, %s98
    %s102 = sphi 0, %s101
    %s118 = sphi 0, %s102
    %s124 = sphi 0, %s126
    %s127 = sphi 0, %s124
    %s128 = sphi 0, %s127
    %s144 = sphi 0, %s128
  $region4: #{_lambda_.9} parent=0 // loop_header_branch
    %13 = sbr.rel (%p11) target = $region8
  $region5: #{_lambda_.9} parent=0 // loop_body
    %s15 = ssub.s32 %s10, 1
    %s16 = ssub.s32 %s10, 2
    %s17 = sadd.s32 %s10, 1
    %s18 = ssub.s32 %s10, %s17
    %p19 = scmp.eq.s32.totalorder %s18, 0
    %s21 = sadd.s32 %s20, 1
    %s22 = scalar_select %p19, %s20, %s21
    %p25 = pneg %p19
    %p26 = scmp.eq.s32.totalorder %s10, 1
    %p27 = por %p25, %p26
    %p28 = scmp.ne.s32.totalorder %s20, %s23
    %p29 = scmp.eq.s32.totalorder %s10, 0
    %p30 = por %p28, %p29
    %p31 = scmp.ne.s32.totalorder %s20, %s23
    %p32 = scmp.eq.s32.totalorder %s15, 1
    %p33 = por %p31, %p32
    %p34 = scmp.ne.s32.totalorder %s23, %s24
    %p35 = scmp.eq.s32.totalorder %s15, 0
    %p36 = por %p34, %p35
    %p37 = scmp.ne.s32.totalorder %s23, %s24
    %p38 = scmp.eq.s32.totalorder %s16, 1
    %p39 = por %p37, %p38
    %p41 = scmp.ne.s32.totalorder %s24, %s40
    %p42 = scmp.eq.s32.totalorder %s16, 0
    %p43 = por %p41, %p42
    %s44 = ssub.s32 %s10, %s17
    %p45 = scmp.eq.s32.totalorder %s44, 0
    %s47 = sadd.s32 %s46, 1
    %s48 = scalar_select %p45, %s46, %s47
    %p51 = pneg %p45
    %p52 = scmp.eq.s32.totalorder %s10, 1
    %p53 = por %p51, %p52
    %p54 = scmp.ne.s32.totalorder %s46, %s49
    %p55 = scmp.eq.s32.totalorder %s10, 0
    %p56 = por %p54, %p55
    %p57 = scmp.ne.s32.totalorder %s46, %s49
    %p58 = scmp.eq.s32.totalorder %s15, 1
    %p59 = por %p57, %p58
    %p60 = scmp.ne.s32.totalorder %s49, %s50
    %p61 = scmp.eq.s32.totalorder %s15, 0
    %p62 = por %p60, %p61
    %p63 = scmp.ne.s32.totalorder %s49, %s50
    %p64 = scmp.eq.s32.totalorder %s16, 1
    %p65 = por %p63, %p64
    %p67 = scmp.ne.s32.totalorder %s50, %s66
    %p68 = scmp.eq.s32.totalorder %s16, 0
    %p69 = por %p67, %p68
    %s70 = ssub.s32 %s10, %s17
    %p71 = scmp.eq.s32.totalorder %s70, 0
    %s73 = sadd.s32 %s72, 1
    %s74 = scalar_select %p71, %s72, %s73
    %p77 = pneg %p71
    %p78 = scmp.eq.s32.totalorder %s10, 1
    %p79 = por %p77, %p78
    %p80 = scmp.ne.s32.totalorder %s72, %s75
    %p81 = scmp.eq.s32.totalorder %s10, 0
    %p82 = por %p80, %p81
    %p83 = scmp.ne.s32.totalorder %s72, %s75
    %p84 = scmp.eq.s32.totalorder %s15, 1
    %p85 = por %p83, %p84
    %p86 = scmp.ne.s32.totalorder %s75, %s76
    %p87 = scmp.eq.s32.totalorder %s15, 0
    %p88 = por %p86, %p87
    %p89 = scmp.ne.s32.totalorder %s75, %s76
    %p90 = scmp.eq.s32.totalorder %s16, 1
    %p91 = por %p89, %p90
    %p93 = scmp.ne.s32.totalorder %s76, %s92
    %p94 = scmp.eq.s32.totalorder %s16, 0
    %p95 = por %p93, %p94
    %s96 = ssub.s32 %s10, %s17
    %p97 = scmp.eq.s32.totalorder %s96, 0
    %s99 = sadd.s32 %s98, 1
    %s100 = scalar_select %p97, %s98, %s99
    %p103 = pneg %p97
    %p104 = scmp.eq.s32.totalorder %s10, 1
    %p105 = por %p103, %p104
    %p106 = scmp.ne.s32.totalorder %s98, %s101
    %p107 = scmp.eq.s32.totalorder %s10, 0
    %p108 = por %p106, %p107
    %p109 = scmp.ne.s32.totalorder %s98, %s101
    %p110 = scmp.eq.s32.totalorder %s15, 1
    %p111 = por %p109, %p110
    %p112 = scmp.ne.s32.totalorder %s101, %s102
    %p113 = scmp.eq.s32.totalorder %s15, 0
    %p114 = por %p112, %p113
    %p115 = scmp.ne.s32.totalorder %s101, %s102
    %p116 = scmp.eq.s32.totalorder %s16, 1
    %p117 = por %p115, %p116
    %p119 = scmp.ne.s32.totalorder %s102, %s118
    %p120 = scmp.eq.s32.totalorder %s16, 0
    %p121 = por %p119, %p120
    %s122 = ssub.s32 %s10, %s17
    %p123 = scmp.eq.s32.totalorder %s122, 0
    %s125 = sadd.s32 %s124, 1
    %s126 = scalar_select %p123, %s124, %s125
    %p129 = pneg %p123
    %p130 = scmp.eq.s32.totalorder %s10, 1
    %p131 = por %p129, %p130
    %p132 = scmp.ne.s32.totalorder %s124, %s127
    %p133 = scmp.eq.s32.totalorder %s10, 0
    %p134 = por %p132, %p133
    %p135 = scmp.ne.s32.totalorder %s124, %s127
    %p136 = scmp.eq.s32.totalorder %s15, 1
    %p137 = por %p135, %p136
    %p138 = scmp.ne.s32.totalorder %s127, %s128
    %p139 = scmp.eq.s32.totalorder %s15, 0
    %p140 = por %p138, %p139
    %p141 = scmp.ne.s32.totalorder %s127, %s128
    %p142 = scmp.eq.s32.totalorder %s16, 1
    %p143 = por %p141, %p142
    %p145 = scmp.ne.s32.totalorder %s128, %s144
    %p146 = scmp.eq.s32.totalorder %s16, 0
    %p147 = por %p145, %p146
    %p148 = scmp.le.s32.totalorder 1, %s10
    %p149 = scmp.lt.s32.totalorder %s10, 3
    %p150 = pnand %p148, %p149
    %p151 = pneg %p150
    // Predicated region
    $region9: #{_lambda_.9} parent=5 // pred_check
      _
    $region10: #{_lambda_.9} parent=5 // pred_check_branch
      %153 = sbr.rel (%p150) target = $region12
    $region11: #{_lambda_.9} parent=5 // pred_region
      %s154 = ssub.s32 %s10, 1
    $region12: #{_lambda_.9} parent=5 // pred_fallthru
      _
    %p155 = scmp.lt.s32.totalorder %s10, 2
    // Predicated region
    $region13: #{_lambda_.9} parent=5 // pred_check
      %p156 = pneg %p155
    $region14: #{_lambda_.9} parent=5 // pred_check_branch
      %158 = sbr.rel (%p156) target = $region16
    $region15: #{_lambda_.9} parent=5 // pred_region
      // Predicated region
      $region17: #{_lambda_.9} parent=15 // pred_check
        %p159 = pneg %p30
      $region18: #{_lambda_.9} parent=15 // pred_check_branch
        %161 = sbr.rel (%p159) target = $region20
      $region19: #{_lambda_.9} parent=15 // pred_region
        %p162 = scmp.lt.s32.totalorder %s10, 1
        %s163 = scalar_select %p162, %s10, 1
        %s164 = smul.addr %s163, 32
        %s165 = smul.addr %s164, 4
        %s166 = scalar_lea.vmem %s0, %s165
      $region20: #{_lambda_.9} parent=15 // pred_fallthru
        _
      // Predicated region
      $region21: #{_lambda_.9} parent=15 // pred_check
        %p167 = pneg %p56
      $region22: #{_lambda_.9} parent=15 // pred_check_branch
        %169 = sbr.rel (%p167) target = $region24
      $region23: #{_lambda_.9} parent=15 // pred_region
        %p170 = scmp.lt.s32.totalorder %s10, 1
        %s171 = scalar_select %p170, %s10, 1
        %s172 = smul.addr %s171, 4
        %s173 = smul.addr %s172, 4
        %s174 = scalar_lea.vmem %s1, %s173
      $region24: #{_lambda_.9} parent=15 // pred_fallthru
        _
      // Predicated region
      $region25: #{_lambda_.9} parent=15 // pred_check
        %p175 = pneg %p82
      $region26: #{_lambda_.9} parent=15 // pred_check_branch
        %177 = sbr.rel (%p175) target = $region28
      $region27: #{_lambda_.9} parent=15 // pred_region
        %p178 = scmp.lt.s32.totalorder %s10, 1
        %s179 = scalar_select %p178, %s10, 1
        %s180 = smul.addr %s179, 2
        %s181 = smul.addr %s180, 8
        %s182 = scalar_lea.vmem %s2, %s181
      $region28: #{_lambda_.9} parent=15 // pred_fallthru
        _
      // Predicated region
      $region29: #{_lambda_.9} parent=15 // pred_check
        %p183 = pneg %p108
      $region30: #{_lambda_.9} parent=15 // pred_check_branch
        %185 = sbr.rel (%p183) target = $region32
      $region31: #{_lambda_.9} parent=15 // pred_region
        %p186 = scmp.lt.s32.totalorder %s10, 1
        %s187 = scalar_select %p186, %s10, 1
        %s188 = smul.addr %s187, 2
        %s189 = smul.addr %s188, 8
        %s190 = scalar_lea.vmem %s3, %s189
      $region32: #{_lambda_.9} parent=15 // pred_fallthru
        _
    $region16: #{_lambda_.9} parent=5 // pred_fallthru
      _
    %p191 = scmp.le.s32.totalorder 1, %s10
    %p192 = scmp.lt.s32.totalorder %s10, 3
    %p193 = pnand %p191, %p192
    %p194 = pneg %p193
    // Predicated region
    $region33: #{_lambda_.9} parent=5 // pred_check
      _
    $region34: #{_lambda_.9} parent=5 // pred_check_branch
      %196 = sbr.rel (%p193) target = $region36
    $region35: #{_lambda_.9} parent=5 // pred_region
      %s197 = ssub.s32 %s10, 1
      %p198 = scmp.lt.s32.totalorder %s15, 1
      %s199 = scalar_select %p198, %s15, 1
      %s200 = smul.addr %s199, 32
      %s201 = smul.addr %s200, 4
      %s202 = scalar_lea.vmem %s0, %s201
      %p203 = pneg %p36
      %p204 = pneg %p33
      %p205 = scmp.lt.s32.totalorder %s15, 1
      %s206 = scalar_select %p205, %s15, 1
      %s207 = smul.addr %s206, 4
      %s208 = smul.addr %s207, 4
      %s209 = scalar_lea.vmem %s1, %s208
      %p210 = pneg %p62
      %p211 = pneg %p59
      %p212 = scmp.lt.s32.totalorder %s15, 1
      %s213 = scalar_select %p212, %s15, 1
      %s214 = smul.addr %s213, 2
      %s215 = smul.addr %s214, 8
      %s216 = scalar_lea.vmem %s2, %s215
      %p217 = pneg %p88
      %p218 = pneg %p85
      %p219 = scmp.lt.s32.totalorder %s15, 1
      %s220 = scalar_select %p219, %s15, 1
      %s221 = smul.addr %s220, 2
      %s222 = smul.addr %s221, 8
      %s223 = scalar_lea.vmem %s3, %s222
      %p224 = pneg %p114
      %p225 = pneg %p111
      %p226 = pneg %p140
      %p227 = pneg %p137
      %p228 = scmp.lt.s32.totalorder %s15, 1
      %s229 = scalar_select %p228, %s15, 1
      %s230 = smul.addr %s229, 2
      %s231 = smul.addr %s230, 4
      %s232 = scalar_lea.vmem %s4, %s231
      %p233 = scmp.lt.s32.totalorder %s15, 1
      %s234 = scalar_select %p233, %s15, 1
      %s235 = smul.addr %s234, 32
      %s236 = smul.addr %s235, 4
      %s237 = scalar_lea.vmem %s0, %s236
      %p238 = scmp.lt.s32.totalorder %s15, 1
      %s239 = scalar_select %p238, %s15, 1
      %s240 = smul.addr %s239, 4
      %s241 = smul.addr %s240, 4
      %s242 = scalar_lea.vmem %s1, %s241
      %p243 = scmp.lt.s32.totalorder %s15, 1
      %s244 = scalar_select %p243, %s15, 1
      %s245 = smul.addr %s244, 2
      %s246 = smul.addr %s245, 8
      %s247 = scalar_lea.vmem %s2, %s246
      %p248 = scmp.lt.s32.totalorder %s15, 1
      %s249 = scalar_select %p248, %s15, 1
      %s250 = smul.addr %s249, 2
      %s251 = smul.addr %s250, 8
      %s252 = scalar_lea.vmem %s3, %s251
      %p253 = scmp.lt.s32.totalorder %s15, 1
      %s254 = scalar_select %p253, %s15, 1
      %s255 = smul.addr %s254, 2
      %s256 = smul.addr %s255, 4
      %s257 = scalar_lea.vmem %s4, %s256
      %v259 = vld [vmem:[%s242] sm:$0xff]
      %v260 = vld [vmem:[%s242 + $0x8] sm:$0xff]
      %v261 = vld [vmem:[%s237] sm:$0xf]
      %v262 = vld [vmem:[%s237 + $0x4] sm:$0xf]
      %v263 = vld [vmem:[%s237 + $0x8] sm:$0xf]
      %v264 = vld [vmem:[%s237 + $0xc] sm:$0xf]
      %v265 = vld [vmem:[%s237 + $0x10] sm:$0xf]
      %v266 = vld [vmem:[%s237 + $0x14] sm:$0xf]
      %v267 = vld [vmem:[%s237 + $0x18] sm:$0xf]
      %v268 = vld [vmem:[%s237 + $0x1c] sm:$0xf]
      %v269 = vld [vmem:[%s237 + $0x20] sm:$0xf]
      %v270 = vld [vmem:[%s237 + $0x24] sm:$0xf]
      %v271 = vld [vmem:[%s237 + $0x28] sm:$0xf]
      %v272 = vld [vmem:[%s237 + $0x2c] sm:$0xf]
      %v273 = vld [vmem:[%s237 + $0x30] sm:$0xf]
      %v274 = vld [vmem:[%s237 + $0x34] sm:$0xf]
      %v275 = vld [vmem:[%s237 + $0x38] sm:$0xf]
      %v276 = vld [vmem:[%s237 + $0x3c] sm:$0xf]
      %v277 = vld [vmem:[%s237 + $0x40] sm:$0xf]
      %v278 = vld [vmem:[%s237 + $0x44] sm:$0xf]
      %v279 = vld [vmem:[%s237 + $0x48] sm:$0xf]
      %v280 = vld [vmem:[%s237 + $0x4c] sm:$0xf]
      %v281 = vld [vmem:[%s237 + $0x50] sm:$0xf]
      %v282 = vld [vmem:[%s237 + $0x54] sm:$0xf]
      %v283 = vld [vmem:[%s237 + $0x58] sm:$0xf]
      %v284 = vld [vmem:[%s237 + $0x5c] sm:$0xf]
      %v285 = vld [vmem:[%s237 + $0x60] sm:$0xf]
      %v286 = vld [vmem:[%s237 + $0x64] sm:$0xf]
      %v287 = vld [vmem:[%s237 + $0x68] sm:$0xf]
      %v288 = vld [vmem:[%s237 + $0x6c] sm:$0xf]
      %v289 = vld [vmem:[%s237 + $0x70] sm:$0xf]
      %v290 = vld [vmem:[%s237 + $0x74] sm:$0xf]
      %v291 = vld [vmem:[%s237 + $0x78] sm:$0xf]
      %v292 = vld [vmem:[%s237 + $0x7c] sm:$0xf]
      %v295 = vunpack.c.l.b16 %v259
      %v296 = vunpack.c.h.b16 %v259
      %v297 = vunpack.c.l.b16 %v260
      %v298 = vunpack.c.h.b16 %v260
      %v299 = vpack.c.b16 %v297, %v295
      %v300 = vpack.c.b16 %v298, %v296
      %v335 = vunpack.c.l.b16 %v261
      %v336 = vunpack.c.l.b16 %v262
      %v337 = vunpack.c.l.b16 %v263
      %v338 = vunpack.c.l.b16 %v264
      %v339 = vunpack.c.l.b16 %v265
      %v340 = vunpack.c.l.b16 %v266
      %v341 = vunpack.c.l.b16 %v267
      %v342 = vunpack.c.l.b16 %v268
      %v343 = vunpack.c.l.b16 %v269
      %v344 = vunpack.c.l.b16 %v270
      %v345 = vunpack.c.l.b16 %v271
      %v346 = vunpack.c.l.b16 %v272
      %v347 = vunpack.c.l.b16 %v273
      %v348 = vunpack.c.l.b16 %v274
      %v349 = vunpack.c.l.b16 %v275
      %v350 = vunpack.c.l.b16 %v276
      %v351 = vunpack.c.l.b16 %v277
      %v352 = vunpack.c.l.b16 %v278
      %v353 = vunpack.c.l.b16 %v279
      %v354 = vunpack.c.l.b16 %v280
      %v355 = vunpack.c.l.b16 %v281
      %v356 = vunpack.c.l.b16 %v282
      %v357 = vunpack.c.l.b16 %v283
      %v358 = vunpack.c.l.b16 %v284
      %v359 = vunpack.c.l.b16 %v285
      %v360 = vunpack.c.l.b16 %v286
      %v361 = vunpack.c.l.b16 %v287
      %v362 = vunpack.c.l.b16 %v288
      %v363 = vunpack.c.l.b16 %v289
      %v364 = vunpack.c.l.b16 %v290
      %v365 = vunpack.c.l.b16 %v291
      %v366 = vunpack.c.l.b16 %v292
      %v367 = vpack.c.b16 %v336, %v335
      %v368 = vpack.c.b16 %v338, %v337
      %v369 = vpack.c.b16 %v340, %v339
      %v370 = vpack.c.b16 %v342, %v341
      %v371 = vpack.c.b16 %v344, %v343
      %v372 = vpack.c.b16 %v346, %v345
      %v373 = vpack.c.b16 %v348, %v347
      %v374 = vpack.c.b16 %v350, %v349
      %v375 = vpack.c.b16 %v352, %v351
      %v376 = vpack.c.b16 %v354, %v353
      %v377 = vpack.c.b16 %v356, %v355
      %v378 = vpack.c.b16 %v358, %v357
      %v379 = vpack.c.b16 %v360, %v359
      %v380 = vpack.c.b16 %v362, %v361
      %v381 = vpack.c.b16 %v364, %v363
      %v382 = vpack.c.b16 %v366, %v365
      %399 = vmatprep.subr.bf16.mxu0 0
      %400 = vmatpush1.bf16.msra.mxu0 %v374
      %401 = vmatprep.subr.bf16.mxu0 0
      %402 = vmatpush1.bf16.msra.mxu0 %v373
      %403 = vmatprep.subr.bf16.mxu0 0
      %404 = vmatpush1.bf16.msra.mxu0 %v372
      %405 = vmatprep.subr.bf16.mxu0 0
      %406 = vmatpush1.bf16.msra.mxu0 %v371
      %407 = vmatprep.subr.bf16.mxu0 0
      %408 = vmatpush1.bf16.msra.mxu0 %v370
      %409 = vmatprep.subr.bf16.mxu0 0
      %410 = vmatpush1.bf16.msra.mxu0 %v369
      %411 = vmatprep.subr.bf16.mxu0 0
      %412 = vmatpush1.bf16.msra.mxu0 %v368
      %413 = vmatprep.subr.bf16.mxu0 0
      %414 = vmatpush1.bf16.msra.mxu0 %v367
      %415 = vmatprep.subr.bf16.mxu0 0
      %416 = vmatpush2.bf16.msra.mxu0 %v382
      %417 = vmatprep.subr.bf16.mxu0 0
      %418 = vmatpush2.bf16.msra.mxu0 %v381
      %419 = vmatprep.subr.bf16.mxu0 0
      %420 = vmatpush2.bf16.msra.mxu0 %v380
      %421 = vmatprep.subr.bf16.mxu0 0
      %422 = vmatpush2.bf16.msra.mxu0 %v379
      %423 = vmatprep.subr.bf16.mxu0 0
      %424 = vmatpush2.bf16.msra.mxu0 %v378
      %425 = vmatprep.subr.bf16.mxu0 0
      %426 = vmatpush2.bf16.msra.mxu0 %v377
      %427 = vmatprep.subr.bf16.mxu0 0
      %428 = vmatpush2.bf16.msra.mxu0 %v376
      %429 = vmatprep.subr.bf16.mxu0 0
      %430 = vmatpush2.bf16.msra.mxu0 %v375
      %431 = vmatprep.mubr.bf16.mxu0 %v300
      %432 = vmatmul.mubr.bf16.gmra.mxu0 %v299
      %v433 = vpop.f32.mrf.mxu0
      %v434 = vadd.f32 0.0, %v433
      %v435 = vpop.f32.mrf.mxu0
      %v436 = vpop.f32.mrf.mxu0
      %v437 = vadd.f32 0.0, %v436
      %v438 = vpop.f32.mrf.mxu0
      %439 = vdwg.mxu0
      %440 = vadd.xlane.f32.xlu0 %v434
      %v441 = vpop.xlane.xlu0 %440
      %442 = vadd.xlane.f32.xlu0 %v437
      %v443 = vpop.xlane.xlu0 %442
      %v444 = vmul.f32 %v441, 0.010204081
      %v445 = vmul.f32 %v443, 0.010204081
      %v446 = vlaneseq
      %v447 = vand.u32 %v446, 127
      %vm448 = vcmp.lt.s32.totalorder %v447, 98
      %v449 = vsub.f32 %v434, %v444
      %v450 = vsub.f32 %v437, %v445
      %v451 = vsel %vm448, %v449, 0.0
      %v452 = vsel %vm448, %v450, 0.0
      %v453 = vmul.f32 %v451, %v451
      %v454 = vmul.f32 %v452, %v452
      %455 = vadd.xlane.f32.xlu0 %v453
      %v456 = vpop.xlane.xlu0 %455
      %457 = vadd.xlane.f32.xlu0 %v454
      %v458 = vpop.xlane.xlu0 %457
      %v459 = vmul.f32 %v456, 0.010204081
      %v460 = vmul.f32 %v458, 0.010204081
      %v461 = vld [vmem:[%s247] sm:$0xff]
      %v462 = vld [vmem:[%s247 + $0x8] sm:$0xff]
      %v463 = vadd.f32 %v459, 1e-05
      %v464 = vadd.f32 %v460, 1e-05
      %v465 = vrsqrt.pop %v463
      %v466 = vrsqrt.pop %v464
      %v467 = vmul.f32 %v461, %v465
      %v468 = vmul.f32 %v462, %v466
      %470 = vset.pattern.permute.xlu0 0
      %471 = vperm.xlu0 %470, %v467
      %v472 = vpop.permute.xlu0 %471
      %475 = vset.pattern.permute.xlu0 0
      %476 = vperm.xlu0 %475, %v468
      %v477 = vpop.permute.xlu0 %476
      %v479 = vmul.f32 %v451, %v472
      %v480 = vmul.f32 %v452, %v477
      %v481 = vld [vmem:[%s252] sm:$0xff]
      %v482 = vld [vmem:[%s252 + $0x8] sm:$0xff]
      %484 = vset.pattern.permute.xlu0 0
      %485 = vperm.xlu0 %484, %v481
      %v486 = vpop.permute.xlu0 %485
      %489 = vset.pattern.permute.xlu0 0
      %490 = vperm.xlu0 %489, %v482
      %v491 = vpop.permute.xlu0 %490
      %v493 = vadd.f32 %v479, %v486
      %v494 = vadd.f32 %v480, %v491
      %vm495 = vcmp.ge.f32.partialorder %v493, 0.0
      %vm496 = vcmp.ge.f32.partialorder %v494, 0.0
      %v497 = vmul.f32 %v493, 0.2
      %v498 = vmul.f32 %v494, 0.2
      %v499 = vsel %vm495, %v493, %v497
      %v500 = vsel %vm496, %v494, %v498
      %v501 = vpack.c.bf16 %v500, %v499
      %v503 = vunpack.c.l.b16 %v501
      %v504 = vunpack.c.h.b16 %v501
      %v505 = vpack.c.b16 %v503, %v503
      %v506 = vpack.c.b16 %v504, %v504
      %509 = vst [vmem:[%s257] sm:$0xf] %v505
      %510 = vst [vmem:[%s257 + $0x4] sm:$0xf] %v506
      %p511 = scmp.lt.s32.totalorder %s15, 1
      %s512 = scalar_select %p511, %s15, 1
      %s513 = smul.addr %s512, 2
      %s514 = smul.addr %s513, 4
      %s515 = scalar_lea.vmem %s4, %s514
      // Predicated region
      $region37: #{_lambda_.9} parent=35 // pred_check
        %p516 = pneg %p137
      $region38: #{_lambda_.9} parent=35 // pred_check_branch
        %518 = sbr.rel (%p516) target = $region40
      $region39: #{_lambda_.9} parent=35 // pred_region
        _
      $region40: #{_lambda_.9} parent=35 // pred_fallthru
        _
    $region36: #{_lambda_.9} parent=5 // pred_fallthru
      _
    %p519 = scmp.le.s32.totalorder 2, %s10
    // Predicated region
    $region41: #{_lambda_.9} parent=5 // pred_check
      %p520 = pneg %p519
    $region42: #{_lambda_.9} parent=5 // pred_check_branch
      %522 = sbr.rel (%p520) target = $region44
    $region43: #{_lambda_.9} parent=5 // pred_region
      %s523 = ssub.s32 %s10, 2
      // Predicated region
      $region45: #{_lambda_.9} parent=43 // pred_check
        %p524 = pneg %p143
      $region46: #{_lambda_.9} parent=43 // pred_check_branch
        %526 = sbr.rel (%p524) target = $region48
      $region47: #{_lambda_.9} parent=43 // pred_region
        %p527 = scmp.lt.s32.totalorder %s16, 1
        %s528 = scalar_select %p527, %s16, 1
        %s529 = smul.addr %s528, 2
        %s530 = smul.addr %s529, 4
        %s531 = scalar_lea.vmem %s4, %s530
      $region48: #{_lambda_.9} parent=43 // pred_fallthru
        _
    $region44: #{_lambda_.9} parent=5 // pred_fallthru
      _
  $region6: #{_lambda_.9} parent=0 // loop_footer
    %s14 = sadd.s32 1, %s10
  $region7: #{_lambda_.9} parent=0 // loop_footer_branch
    %9 = sbr.rel target = $region3
  $region8: #{_lambda_.9} parent=0 // loop_exit
    _

// kernel: _lambda_.10
$region0: #{_lambda_.10}
  #allocation0 [shape = 'u32[]', space=smem, size = 0x4, offset = 0x4, fixed_abs, tag = 'smem constant byte address 0x4 - core index']
  #allocation1 [shape = 'u32[144,128]{1,0:T(1,128)}', space=vmem, size = 0x12000, scoped, tag = 'internal scratch']
  %s0 = inlined_call_operand.vmem [shape: bf16[2,256,128], index: 0, kind: input, shape index: {}]
  %s1 = inlined_call_operand.vmem [shape: bf16[2,16,256], index: 1, kind: input, shape index: {}]
  %s2 = inlined_call_operand.vmem [shape: f32[2,16,1], index: 2, kind: input, shape index: {}]
  %s3 = inlined_call_operand.vmem [shape: f32[2,16,1], index: 3, kind: input, shape index: {}]
  %s4 = inlined_call_operand.vmem [shape: bf16[2,16,128], index: 4, kind: output, shape index: {}]
  %s5 = sld [smem:[#allocation0]]
  $region49: #{_lambda_.10} parent=0
    _
  %s7 = ssub.s32 1, %s5
  %s8 = scalar_select 0, %s7, %s5
  loop: start=0, step=1, limit=4
  $region2: #{_lambda_.10} parent=0 // loop_pre_header
    _
  $region3: #{_lambda_.10} parent=0 // loop_header
    %s10 = sphi 0, %s14
    %p11 = scmp.ge.s32.totalorder %s10, 4
    %s20 = sphi 0, %s22
    %s23 = sphi 0, %s20
    %s24 = sphi 0, %s23
    %s40 = sphi 0, %s24
    %s46 = sphi 0, %s48
    %s49 = sphi 0, %s46
    %s50 = sphi 0, %s49
    %s66 = sphi 0, %s50
    %s72 = sphi 0, %s74
    %s75 = sphi 0, %s72
    %s76 = sphi 0, %s75
    %s92 = sphi 0, %s76
    %s98 = sphi 0, %s100
    %s101 = sphi 0, %s98
    %s102 = sphi 0, %s101
    %s118 = sphi 0, %s102
    %s124 = sphi 0, %s126
    %s127 = sphi 0, %s124
    %s128 = sphi 0, %s127
    %s144 = sphi 0, %s128
  $region4: #{_lambda_.10} parent=0 // loop_header_branch
    %13 = sbr.rel (%p11) target = $region8
  $region5: #{_lambda_.10} parent=0 // loop_body
    %s15 = ssub.s32 %s10, 1
    %s16 = ssub.s32 %s10, 2
    %s17 = sadd.s32 %s10, 1
    %s18 = ssub.s32 %s10, %s17
    %p19 = scmp.eq.s32.totalorder %s18, 0
    %s21 = sadd.s32 %s20, 1
    %s22 = scalar_select %p19, %s20, %s21
    %p25 = pneg %p19
    %p26 = scmp.eq.s32.totalorder %s10, 1
    %p27 = por %p25, %p26
    %p28 = scmp.ne.s32.totalorder %s20, %s23
    %p29 = scmp.eq.s32.totalorder %s10, 0
    %p30 = por %p28, %p29
    %p31 = scmp.ne.s32.totalorder %s20, %s23
    %p32 = scmp.eq.s32.totalorder %s15, 1
    %p33 = por %p31, %p32
    %p34 = scmp.ne.s32.totalorder %s23, %s24
    %p35 = scmp.eq.s32.totalorder %s15, 0
    %p36 = por %p34, %p35
    %p37 = scmp.ne.s32.totalorder %s23, %s24
    %p38 = scmp.eq.s32.totalorder %s16, 1
    %p39 = por %p37, %p38
    %p41 = scmp.ne.s32.totalorder %s24, %s40
    %p42 = scmp.eq.s32.totalorder %s16, 0
    %p43 = por %p41, %p42
    %s44 = ssub.s32 %s10, %s17
    %p45 = scmp.eq.s32.totalorder %s44, 0
    %s47 = sadd.s32 %s46, 1
    %s48 = scalar_select %p45, %s46, %s47
    %p51 = pneg %p45
    %p52 = scmp.eq.s32.totalorder %s10, 1
    %p53 = por %p51, %p52
    %p54 = scmp.ne.s32.totalorder %s46, %s49
    %p55 = scmp.eq.s32.totalorder %s10, 0
    %p56 = por %p54, %p55
    %p57 = scmp.ne.s32.totalorder %s46, %s49
    %p58 = scmp.eq.s32.totalorder %s15, 1
    %p59 = por %p57, %p58
    %p60 = scmp.ne.s32.totalorder %s49, %s50
    %p61 = scmp.eq.s32.totalorder %s15, 0
    %p62 = por %p60, %p61
    %p63 = scmp.ne.s32.totalorder %s49, %s50
    %p64 = scmp.eq.s32.totalorder %s16, 1
    %p65 = por %p63, %p64
    %p67 = scmp.ne.s32.totalorder %s50, %s66
    %p68 = scmp.eq.s32.totalorder %s16, 0
    %p69 = por %p67, %p68
    %s70 = ssub.s32 %s10, %s17
    %p71 = scmp.eq.s32.totalorder %s70, 0
    %s73 = sadd.s32 %s72, 1
    %s74 = scalar_select %p71, %s72, %s73
    %p77 = pneg %p71
    %p78 = scmp.eq.s32.totalorder %s10, 1
    %p79 = por %p77, %p78
    %p80 = scmp.ne.s32.totalorder %s72, %s75
    %p81 = scmp.eq.s32.totalorder %s10, 0
    %p82 = por %p80, %p81
    %p83 = scmp.ne.s32.totalorder %s72, %s75
    %p84 = scmp.eq.s32.totalorder %s15, 1
    %p85 = por %p83, %p84
    %p86 = scmp.ne.s32.totalorder %s75, %s76
    %p87 = scmp.eq.s32.totalorder %s15, 0
    %p88 = por %p86, %p87
    %p89 = scmp.ne.s32.totalorder %s75, %s76
    %p90 = scmp.eq.s32.totalorder %s16, 1
    %p91 = por %p89, %p90
    %p93 = scmp.ne.s32.totalorder %s76, %s92
    %p94 = scmp.eq.s32.totalorder %s16, 0
    %p95 = por %p93, %p94
    %s96 = ssub.s32 %s10, %s17
    %p97 = scmp.eq.s32.totalorder %s96, 0
    %s99 = sadd.s32 %s98, 1
    %s100 = scalar_select %p97, %s98, %s99
    %p103 = pneg %p97
    %p104 = scmp.eq.s32.totalorder %s10, 1
    %p105 = por %p103, %p104
    %p106 = scmp.ne.s32.totalorder %s98, %s101
    %p107 = scmp.eq.s32.totalorder %s10, 0
    %p108 = por %p106, %p107
    %p109 = scmp.ne.s32.totalorder %s98, %s101
    %p110 = scmp.eq.s32.totalorder %s15, 1
    %p111 = por %p109, %p110
    %p112 = scmp.ne.s32.totalorder %s101, %s102
    %p113 = scmp.eq.s32.totalorder %s15, 0
    %p114 = por %p112, %p113
    %p115 = scmp.ne.s32.totalorder %s101, %s102
    %p116 = scmp.eq.s32.totalorder %s16, 1
    %p117 = por %p115, %p116
    %p119 = scmp.ne.s32.totalorder %s102, %s118
    %p120 = scmp.eq.s32.totalorder %s16, 0
    %p121 = por %p119, %p120
    %s122 = ssub.s32 %s10, %s17
    %p123 = scmp.eq.s32.totalorder %s122, 0
    %s125 = sadd.s32 %s124, 1
    %s126 = scalar_select %p123, %s124, %s125
    %p129 = pneg %p123
    %p130 = scmp.eq.s32.totalorder %s10, 1
    %p131 = por %p129, %p130
    %p132 = scmp.ne.s32.totalorder %s124, %s127
    %p133 = scmp.eq.s32.totalorder %s10, 0
    %p134 = por %p132, %p133
    %p135 = scmp.ne.s32.totalorder %s124, %s127
    %p136 = scmp.eq.s32.totalorder %s15, 1
    %p137 = por %p135, %p136
    %p138 = scmp.ne.s32.totalorder %s127, %s128
    %p139 = scmp.eq.s32.totalorder %s15, 0
    %p140 = por %p138, %p139
    %p141 = scmp.ne.s32.totalorder %s127, %s128
    %p142 = scmp.eq.s32.totalorder %s16, 1
    %p143 = por %p141, %p142
    %p145 = scmp.ne.s32.totalorder %s128, %s144
    %p146 = scmp.eq.s32.totalorder %s16, 0
    %p147 = por %p145, %p146
    %p148 = scmp.le.s32.totalorder 1, %s10
    %p149 = scmp.lt.s32.totalorder %s10, 3
    %p150 = pnand %p148, %p149
    %p151 = pneg %p150
    // Predicated region
    $region9: #{_lambda_.10} parent=5 // pred_check
      _
    $region10: #{_lambda_.10} parent=5 // pred_check_branch
      %153 = sbr.rel (%p150) target = $region12
    $region11: #{_lambda_.10} parent=5 // pred_region
      %s154 = ssub.s32 %s10, 1
    $region12: #{_lambda_.10} parent=5 // pred_fallthru
      _
    %p155 = scmp.lt.s32.totalorder %s10, 2
    // Predicated region
    $region13: #{_lambda_.10} parent=5 // pred_check
      %p156 = pneg %p155
    $region14: #{_lambda_.10} parent=5 // pred_check_branch
      %158 = sbr.rel (%p156) target = $region16
    $region15: #{_lambda_.10} parent=5 // pred_region
      // Predicated region
      $region17: #{_lambda_.10} parent=15 // pred_check
        %p159 = pneg %p30
      $region18: #{_lambda_.10} parent=15 // pred_check_branch
        %161 = sbr.rel (%p159) target = $region20
      $region19: #{_lambda_.10} parent=15 // pred_region
        %p162 = scmp.lt.s32.totalorder %s10, 1
        %s163 = scalar_select %p162, %s10, 1
        %s164 = smul.addr %s163, 32
        %s165 = smul.addr %s164, 4
        %s166 = scalar_lea.vmem %s0, %s165
      $region20: #{_lambda_.10} parent=15 // pred_fallthru
        _
      // Predicated region
      $region21: #{_lambda_.10} parent=15 // pred_check
        %p167 = pneg %p56
      $region22: #{_lambda_.10} parent=15 // pred_check_branch
        %169 = sbr.rel (%p167) target = $region24
      $region23: #{_lambda_.10} parent=15 // pred_region
        %p170 = scmp.lt.s32.totalorder %s10, 1
        %s171 = scalar_select %p170, %s10, 1
        %s172 = smul.addr %s171, 4
        %s173 = smul.addr %s172, 4
        %s174 = scalar_lea.vmem %s1, %s173
      $region24: #{_lambda_.10} parent=15 // pred_fallthru
        _
      // Predicated region
      $region25: #{_lambda_.10} parent=15 // pred_check
        %p175 = pneg %p82
      $region26: #{_lambda_.10} parent=15 // pred_check_branch
        %177 = sbr.rel (%p175) target = $region28
      $region27: #{_lambda_.10} parent=15 // pred_region
        %p178 = scmp.lt.s32.totalorder %s10, 1
        %s179 = scalar_select %p178, %s10, 1
        %s180 = smul.addr %s179, 2
        %s181 = smul.addr %s180, 8
        %s182 = scalar_lea.vmem %s2, %s181
      $region28: #{_lambda_.10} parent=15 // pred_fallthru
        _
      // Predicated region
      $region29: #{_lambda_.10} parent=15 // pred_check
        %p183 = pneg %p108
      $region30: #{_lambda_.10} parent=15 // pred_check_branch
        %185 = sbr.rel (%p183) target = $region32
      $region31: #{_lambda_.10} parent=15 // pred_region
        %p186 = scmp.lt.s32.totalorder %s10, 1
        %s187 = scalar_select %p186, %s10, 1
        %s188 = smul.addr %s187, 2
        %s189 = smul.addr %s188, 8
        %s190 = scalar_lea.vmem %s3, %s189
      $region32: #{_lambda_.10} parent=15 // pred_fallthru
        _
    $region16: #{_lambda_.10} parent=5 // pred_fallthru
      _
    %p191 = scmp.le.s32.totalorder 1, %s10
    %p192 = scmp.lt.s32.totalorder %s10, 3
    %p193 = pnand %p191, %p192
    %p194 = pneg %p193
    // Predicated region
    $region33: #{_lambda_.10} parent=5 // pred_check
      _
    $region34: #{_lambda_.10} parent=5 // pred_check_branch
      %196 = sbr.rel (%p193) target = $region36
    $region35: #{_lambda_.10} parent=5 // pred_region
      %s197 = ssub.s32 %s10, 1
      %p198 = scmp.lt.s32.totalorder %s15, 1
      %s199 = scalar_select %p198, %s15, 1
      %s200 = smul.addr %s199, 32
      %s201 = smul.addr %s200, 4
      %s202 = scalar_lea.vmem %s0, %s201
      %p203 = pneg %p36
      %p204 = pneg %p33
      %p205 = scmp.lt.s32.totalorder %s15, 1
      %s206 = scalar_select %p205, %s15, 1
      %s207 = smul.addr %s206, 4
      %s208 = smul.addr %s207, 4
      %s209 = scalar_lea.vmem %s1, %s208
      %p210 = pneg %p62
      %p211 = pneg %p59
      %p212 = scmp.lt.s32.totalorder %s15, 1
      %s213 = scalar_select %p212, %s15, 1
      %s214 = smul.addr %s213, 2
      %s215 = smul.addr %s214, 8
      %s216 = scalar_lea.vmem %s2, %s215
      %p217 = pneg %p88
      %p218 = pneg %p85
      %p219 = scmp.lt.s32.totalorder %s15, 1
      %s220 = scalar_select %p219, %s15, 1
      %s221 = smul.addr %s220, 2
      %s222 = smul.addr %s221, 8
      %s223 = scalar_lea.vmem %s3, %s222
      %p224 = pneg %p114
      %p225 = pneg %p111
      %p226 = pneg %p140
      %p227 = pneg %p137
      %p228 = scmp.lt.s32.totalorder %s15, 1
      %s229 = scalar_select %p228, %s15, 1
      %s230 = smul.addr %s229, 2
      %s231 = smul.addr %s230, 4
      %s232 = scalar_lea.vmem %s4, %s231
      %p233 = scmp.lt.s32.totalorder %s15, 1
      %s234 = scalar_select %p233, %s15, 1
      %s235 = smul.addr %s234, 32
      %s236 = smul.addr %s235, 4
      %s237 = scalar_lea.vmem %s0, %s236
      %p238 = scmp.lt.s32.totalorder %s15, 1
      %s239 = scalar_select %p238, %s15, 1
      %s240 = smul.addr %s239, 4
      %s241 = smul.addr %s240, 4
      %s242 = scalar_lea.vmem %s1, %s241
      %p243 = scmp.lt.s32.totalorder %s15, 1
      %s244 = scalar_select %p243, %s15, 1
      %s245 = smul.addr %s244, 2
      %s246 = smul.addr %s245, 8
      %s247 = scalar_lea.vmem %s2, %s246
      %p248 = scmp.lt.s32.totalorder %s15, 1
      %s249 = scalar_select %p248, %s15, 1
      %s250 = smul.addr %s249, 2
      %s251 = smul.addr %s250, 8
      %s252 = scalar_lea.vmem %s3, %s251
      %p253 = scmp.lt.s32.totalorder %s15, 1
      %s254 = scalar_select %p253, %s15, 1
      %s255 = smul.addr %s254, 2
      %s256 = smul.addr %s255, 4
      %s257 = scalar_lea.vmem %s4, %s256
      %v259 = vld [vmem:[%s242] sm:$0xff]
      %v260 = vld [vmem:[%s242 + $0x8] sm:$0xff]
      %v261 = vld [vmem:[%s237] sm:$0xf]
      %v262 = vld [vmem:[%s237 + $0x4] sm:$0xf]
      %v263 = vld [vmem:[%s237 + $0x8] sm:$0xf]
      %v264 = vld [vmem:[%s237 + $0xc] sm:$0xf]
      %v265 = vld [vmem:[%s237 + $0x10] sm:$0xf]
      %v266 = vld [vmem:[%s237 + $0x14] sm:$0xf]
      %v267 = vld [vmem:[%s237 + $0x18] sm:$0xf]
      %v268 = vld [vmem:[%s237 + $0x1c] sm:$0xf]
      %v269 = vld [vmem:[%s237 + $0x20] sm:$0xf]
      %v270 = vld [vmem:[%s237 + $0x24] sm:$0xf]
      %v271 = vld [vmem:[%s237 + $0x28] sm:$0xf]
      %v272 = vld [vmem:[%s237 + $0x2c] sm:$0xf]
      %v273 = vld [vmem:[%s237 + $0x30] sm:$0xf]
      %v274 = vld [vmem:[%s237 + $0x34] sm:$0xf]
      %v275 = vld [vmem:[%s237 + $0x38] sm:$0xf]
      %v276 = vld [vmem:[%s237 + $0x3c] sm:$0xf]
      %v277 = vld [vmem:[%s237 + $0x40] sm:$0xf]
      %v278 = vld [vmem:[%s237 + $0x44] sm:$0xf]
      %v279 = vld [vmem:[%s237 + $0x48] sm:$0xf]
      %v280 = vld [vmem:[%s237 + $0x4c] sm:$0xf]
      %v281 = vld [vmem:[%s237 + $0x50] sm:$0xf]
      %v282 = vld [vmem:[%s237 + $0x54] sm:$0xf]
      %v283 = vld [vmem:[%s237 + $0x58] sm:$0xf]
      %v284 = vld [vmem:[%s237 + $0x5c] sm:$0xf]
      %v285 = vld [vmem:[%s237 + $0x60] sm:$0xf]
      %v286 = vld [vmem:[%s237 + $0x64] sm:$0xf]
      %v287 = vld [vmem:[%s237 + $0x68] sm:$0xf]
      %v288 = vld [vmem:[%s237 + $0x6c] sm:$0xf]
      %v289 = vld [vmem:[%s237 + $0x70] sm:$0xf]
      %v290 = vld [vmem:[%s237 + $0x74] sm:$0xf]
      %v291 = vld [vmem:[%s237 + $0x78] sm:$0xf]
      %v292 = vld [vmem:[%s237 + $0x7c] sm:$0xf]
      %v295 = vunpack.c.l.b16 %v259
      %v296 = vunpack.c.h.b16 %v259
      %v297 = vunpack.c.l.b16 %v260
      %v298 = vunpack.c.h.b16 %v260
      %v299 = vpack.c.b16 %v297, %v295
      %v300 = vpack.c.b16 %v298, %v296
      %v335 = vunpack.c.l.b16 %v261
      %v336 = vunpack.c.l.b16 %v262
      %v337 = vunpack.c.l.b16 %v263
      %v338 = vunpack.c.l.b16 %v264
      %v339 = vunpack.c.l.b16 %v265
      %v340 = vunpack.c.l.b16 %v266
      %v341 = vunpack.c.l.b16 %v267
      %v342 = vunpack.c.l.b16 %v268
      %v343 = vunpack.c.l.b16 %v269
      %v344 = vunpack.c.l.b16 %v270
      %v345 = vunpack.c.l.b16 %v271
      %v346 = vunpack.c.l.b16 %v272
      %v347 = vunpack.c.l.b16 %v273
      %v348 = vunpack.c.l.b16 %v274
      %v349 = vunpack.c.l.b16 %v275
      %v350 = vunpack.c.l.b16 %v276
      %v351 = vunpack.c.l.b16 %v277
      %v352 = vunpack.c.l.b16 %v278
      %v353 = vunpack.c.l.b16 %v279
      %v354 = vunpack.c.l.b16 %v280
      %v355 = vunpack.c.l.b16 %v281
      %v356 = vunpack.c.l.b16 %v282
      %v357 = vunpack.c.l.b16 %v283
      %v358 = vunpack.c.l.b16 %v284
      %v359 = vunpack.c.l.b16 %v285
      %v360 = vunpack.c.l.b16 %v286
      %v361 = vunpack.c.l.b16 %v287
      %v362 = vunpack.c.l.b16 %v288
      %v363 = vunpack.c.l.b16 %v289
      %v364 = vunpack.c.l.b16 %v290
      %v365 = vunpack.c.l.b16 %v291
      %v366 = vunpack.c.l.b16 %v292
      %v367 = vpack.c.b16 %v336, %v335
      %v368 = vpack.c.b16 %v338, %v337
      %v369 = vpack.c.b16 %v340, %v339
      %v370 = vpack.c.b16 %v342, %v341
      %v371 = vpack.c.b16 %v344, %v343
      %v372 = vpack.c.b16 %v346, %v345
      %v373 = vpack.c.b16 %v348, %v347
      %v374 = vpack.c.b16 %v350, %v349
      %v375 = vpack.c.b16 %v352, %v351
      %v376 = vpack.c.b16 %v354, %v353
      %v377 = vpack.c.b16 %v356, %v355
      %v378 = vpack.c.b16 %v358, %v357
      %v379 = vpack.c.b16 %v360, %v359
      %v380 = vpack.c.b16 %v362, %v361
      %v381 = vpack.c.b16 %v364, %v363
      %v382 = vpack.c.b16 %v366, %v365
      %399 = vmatprep.subr.bf16.mxu0 0
      %400 = vmatpush1.bf16.msra.mxu0 %v374
      %401 = vmatprep.subr.bf16.mxu0 0
      %402 = vmatpush1.bf16.msra.mxu0 %v373
      %403 = vmatprep.subr.bf16.mxu0 0
      %404 = vmatpush1.bf16.msra.mxu0 %v372
      %405 = vmatprep.subr.bf16.mxu0 0
      %406 = vmatpush1.bf16.msra.mxu0 %v371
      %407 = vmatprep.subr.bf16.mxu0 0
      %408 = vmatpush1.bf16.msra.mxu0 %v370
      %409 = vmatprep.subr.bf16.mxu0 0
      %410 = vmatpush1.bf16.msra.mxu0 %v369
      %411 = vmatprep.subr.bf16.mxu0 0
      %412 = vmatpush1.bf16.msra.mxu0 %v368
      %413 = vmatprep.subr.bf16.mxu0 0
      %414 = vmatpush1.bf16.msra.mxu0 %v367
      %415 = vmatprep.subr.bf16.mxu0 0
      %416 = vmatpush2.bf16.msra.mxu0 %v382
      %417 = vmatprep.subr.bf16.mxu0 0
      %418 = vmatpush2.bf16.msra.mxu0 %v381
      %419 = vmatprep.subr.bf16.mxu0 0
      %420 = vmatpush2.bf16.msra.mxu0 %v380
      %421 = vmatprep.subr.bf16.mxu0 0
      %422 = vmatpush2.bf16.msra.mxu0 %v379
      %423 = vmatprep.subr.bf16.mxu0 0
      %424 = vmatpush2.bf16.msra.mxu0 %v378
      %425 = vmatprep.subr.bf16.mxu0 0
      %426 = vmatpush2.bf16.msra.mxu0 %v377
      %427 = vmatprep.subr.bf16.mxu0 0
      %428 = vmatpush2.bf16.msra.mxu0 %v376
      %429 = vmatprep.subr.bf16.mxu0 0
      %430 = vmatpush2.bf16.msra.mxu0 %v375
      %431 = vmatprep.mubr.bf16.mxu0 %v300
      %432 = vmatmul.mubr.bf16.gmra.mxu0 %v299
      %v433 = vpop.f32.mrf.mxu0
      %v434 = vadd.f32 0.0, %v433
      %v435 = vpop.f32.mrf.mxu0
      %v436 = vpop.f32.mrf.mxu0
      %v437 = vadd.f32 0.0, %v436
      %v438 = vpop.f32.mrf.mxu0
      %439 = vdwg.mxu0
      %440 = vadd.xlane.f32.xlu0 %v434
      %v441 = vpop.xlane.xlu0 %440
      %442 = vadd.xlane.f32.xlu0 %v437
      %v443 = vpop.xlane.xlu0 %442
      %v444 = vmul.f32 %v441, 0.013888889
      %v445 = vmul.f32 %v443, 0.013888889
      %v446 = vlaneseq
      %v447 = vand.u32 %v446, 127
      %vm448 = vcmp.lt.s32.totalorder %v447, 72
      %v449 = vsub.f32 %v434, %v444
      %v450 = vsub.f32 %v437, %v445
      %v451 = vsel %vm448, %v449, 0.0
      %v452 = vsel %vm448, %v450, 0.0
      %v453 = vmul.f32 %v451, %v451
      %v454 = vmul.f32 %v452, %v452
      %455 = vadd.xlane.f32.xlu0 %v453
      %v456 = vpop.xlane.xlu0 %455
      %457 = vadd.xlane.f32.xlu0 %v454
      %v458 = vpop.xlane.xlu0 %457
      %v459 = vmul.f32 %v456, 0.013888889
      %v460 = vmul.f32 %v458, 0.013888889
      %v461 = vld [vmem:[%s247] sm:$0xff]
      %v462 = vld [vmem:[%s247 + $0x8] sm:$0xff]
      %v463 = vadd.f32 %v459, 1e-05
      %v464 = vadd.f32 %v460, 1e-05
      %v465 = vrsqrt.pop %v463
      %v466 = vrsqrt.pop %v464
      %v467 = vmul.f32 %v461, %v465
      %v468 = vmul.f32 %v462, %v466
      %470 = vset.pattern.permute.xlu0 0
      %471 = vperm.xlu0 %470, %v467
      %v472 = vpop.permute.xlu0 %471
      %475 = vset.pattern.permute.xlu0 0
      %476 = vperm.xlu0 %475, %v468
      %v477 = vpop.permute.xlu0 %476
      %v479 = vmul.f32 %v451, %v472
      %v480 = vmul.f32 %v452, %v477
      %v481 = vld [vmem:[%s252] sm:$0xff]
      %v482 = vld [vmem:[%s252 + $0x8] sm:$0xff]
      %484 = vset.pattern.permute.xlu0 0
      %485 = vperm.xlu0 %484, %v481
      %v486 = vpop.permute.xlu0 %485
      %489 = vset.pattern.permute.xlu0 0
      %490 = vperm.xlu0 %489, %v482
      %v491 = vpop.permute.xlu0 %490
      %v493 = vadd.f32 %v479, %v486
      %v494 = vadd.f32 %v480, %v491
      %vm495 = vcmp.ge.f32.partialorder %v493, 0.0
      %vm496 = vcmp.ge.f32.partialorder %v494, 0.0
      %v497 = vmul.f32 %v493, 0.2
      %v498 = vmul.f32 %v494, 0.2
      %v499 = vsel %vm495, %v493, %v497
      %v500 = vsel %vm496, %v494, %v498
      %v501 = vpack.c.bf16 %v500, %v499
      %v503 = vunpack.c.l.b16 %v501
      %v504 = vunpack.c.h.b16 %v501
      %v505 = vpack.c.b16 %v503, %v503
      %v506 = vpack.c.b16 %v504, %v504
      %509 = vst [vmem:[%s257] sm:$0xf] %v505
      %510 = vst [vmem:[%s257 + $0x4] sm:$0xf] %v506
      %p511 = scmp.lt.s32.totalorder %s15, 1
      %s512 = scalar_select %p511, %s15, 1
      %s513 = smul.addr %s512, 2
      %s514 = smul.addr %s513, 4
      %s515 = scalar_lea.vmem %s4, %s514
      // Predicated region
      $region37: #{_lambda_.10} parent=35 // pred_check
        %p516 = pneg %p137
      $region38: #{_lambda_.10} parent=35 // pred_check_branch
        %518 = sbr.rel (%p516) target = $region40
      $region39: #{_lambda_.10} parent=35 // pred_region
        _
      $region40: #{_lambda_.10} parent=35 // pred_fallthru
        _
    $region36: #{_lambda_.10} parent=5 // pred_fallthru
      _
    %p519 = scmp.le.s32.totalorder 2, %s10
    // Predicated region
    $region41: #{_lambda_.10} parent=5 // pred_check
      %p520 = pneg %p519
    $region42: #{_lambda_.10} parent=5 // pred_check_branch
      %522 = sbr.rel (%p520) target = $region44
    $region43: #{_lambda_.10} parent=5 // pred_region
      %s523 = ssub.s32 %s10, 2
      // Predicated region
      $region45: #{_lambda_.10} parent=43 // pred_check
        %p524 = pneg %p143
      $region46: #{_lambda_.10} parent=43 // pred_check_branch
        %526 = sbr.rel (%p524) target = $region48
      $region47: #{_lambda_.10} parent=43 // pred_region
        %p527 = scmp.lt.s32.totalorder %s16, 1
        %s528 = scalar_select %p527, %s16, 1
        %s529 = smul.addr %s528, 2
        %s530 = smul.addr %s529, 4
        %s531 = scalar_lea.vmem %s4, %s530
      $region48: #{_lambda_.10} parent=43 // pred_fallthru
        _
    $region44: #{_lambda_.10} parent=5 // pred_fallthru
      _
  $region6: #{_lambda_.10} parent=0 // loop_footer
    %s14 = sadd.s32 1, %s10
  $region7: #{_lambda_.10} parent=0 // loop_footer_branch
    %9 = sbr.rel target = $region3
  $region8: #{_lambda_.10} parent=0 // loop_exit
    _

// kernel: _lambda_.11
$region0: #{_lambda_.11}
  #allocation0 [shape = 'u32[]', space=smem, size = 0x4, offset = 0x4, fixed_abs, tag = 'smem constant byte address 0x4 - core index']
  #allocation1 [shape = 'u32[144,128]{1,0:T(1,128)}', space=vmem, size = 0x12000, scoped, tag = 'internal scratch']
  %s0 = inlined_call_operand.vmem [shape: bf16[2,1,98], index: 0, kind: input, shape index: {}]
  %s1 = inlined_call_operand.vmem [shape: bf16[2,98,128], index: 1, kind: input, shape index: {}]
  %s2 = inlined_call_operand.vmem [shape: bf16[2,16,128], index: 2, kind: input, shape index: {}]
  %s3 = inlined_call_operand.vmem [shape: bf16[2,16,128], index: 3, kind: output, shape index: {}]
  %s4 = sld [smem:[#allocation0]]
  $region45: #{_lambda_.11} parent=0
    _
  %s6 = ssub.s32 1, %s4
  %s7 = scalar_select 0, %s6, %s4
  loop: start=0, step=1, limit=4
  $region2: #{_lambda_.11} parent=0 // loop_pre_header
    _
  $region3: #{_lambda_.11} parent=0 // loop_header
    %s9 = sphi 0, %s13
    %p10 = scmp.ge.s32.totalorder %s9, 4
    %s16 = sphi 0, %s28
    %s17 = sphi 0, %s24
    %s18 = sphi 0, %s16
    %s19 = sphi 0, %s17
    %s20 = sphi 0, %s18
    %s21 = sphi 0, %s19
    %s31 = sphi 0, %s33
    %s34 = sphi 0, %s31
    %s35 = sphi 0, %s34
    %s51 = sphi 0, %s35
    %s59 = sphi 0, %s61
    %s62 = sphi 0, %s59
    %s63 = sphi 0, %s62
    %s79 = sphi 0, %s63
    %s87 = sphi 0, %s89
    %s90 = sphi 0, %s87
    %s91 = sphi 0, %s90
    %s107 = sphi 0, %s91
    %s115 = sphi 0, %s117
    %s118 = sphi 0, %s115
    %s119 = sphi 0, %s118
    %s135 = sphi 0, %s119
  $region4: #{_lambda_.11} parent=0 // loop_header_branch
    %12 = sbr.rel (%p10) target = $region8
  $region5: #{_lambda_.11} parent=0 // loop_body
    %s14 = ssub.s32 %s9, 1
    %s15 = ssub.s32 %s9, 2
    %s22 = sadd.s32 1, %s17
    %p23 = scmp.ge.s32.totalorder %s22, 1
    %s24 = scalar_select %p23, 0, %s22
    %s25 = sadd.s32 1, %s16
    %s26 = scalar_select %p23, %s25, %s16
    %p27 = scmp.ge.s32.totalorder %s26, 2
    %s28 = scalar_select %p27, 0, %s26
    %s29 = ssub.s32 %s16, %s28
    %p30 = scmp.eq.s32.totalorder %s29, 0
    %s32 = sadd.s32 %s31, 1
    %s33 = scalar_select %p30, %s31, %s32
    %p36 = pneg %p30
    %p37 = scmp.eq.s32.totalorder %s9, 1
    %p38 = por %p36, %p37
    %p39 = scmp.ne.s32.totalorder %s31, %s34
    %p40 = scmp.eq.s32.totalorder %s9, 0
    %p41 = por %p39, %p40
    %p42 = scmp.ne.s32.totalorder %s31, %s34
    %p43 = scmp.eq.s32.totalorder %s14, 1
    %p44 = por %p42, %p43
    %p45 = scmp.ne.s32.totalorder %s34, %s35
    %p46 = scmp.eq.s32.totalorder %s14, 0
    %p47 = por %p45, %p46
    %p48 = scmp.ne.s32.totalorder %s34, %s35
    %p49 = scmp.eq.s32.totalorder %s15, 1
    %p50 = por %p48, %p49
    %p52 = scmp.ne.s32.totalorder %s35, %s51
    %p53 = scmp.eq.s32.totalorder %s15, 0
    %p54 = por %p52, %p53
    %s55 = ssub.s32 %s16, %s28
    %s56 = ssub.s32 %s17, %s24
    %s57 = sor.u32 %s55, %s56
    %p58 = scmp.eq.s32.totalorder %s57, 0
    %s60 = sadd.s32 %s59, 1
    %s61 = scalar_select %p58, %s59, %s60
    %p64 = pneg %p58
    %p65 = scmp.eq.s32.totalorder %s9, 1
    %p66 = por %p64, %p65
    %p67 = scmp.ne.s32.totalorder %s59, %s62
    %p68 = scmp.eq.s32.totalorder %s9, 0
    %p69 = por %p67, %p68
    %p70 = scmp.ne.s32.totalorder %s59, %s62
    %p71 = scmp.eq.s32.totalorder %s14, 1
    %p72 = por %p70, %p71
    %p73 = scmp.ne.s32.totalorder %s62, %s63
    %p74 = scmp.eq.s32.totalorder %s14, 0
    %p75 = por %p73, %p74
    %p76 = scmp.ne.s32.totalorder %s62, %s63
    %p77 = scmp.eq.s32.totalorder %s15, 1
    %p78 = por %p76, %p77
    %p80 = scmp.ne.s32.totalorder %s63, %s79
    %p81 = scmp.eq.s32.totalorder %s15, 0
    %p82 = por %p80, %p81
    %s83 = ssub.s32 %s16, %s28
    %s84 = ssub.s32 %s17, %s24
    %s85 = sor.u32 %s83, %s84
    %p86 = scmp.eq.s32.totalorder %s85, 0
    %s88 = sadd.s32 %s87, 1
    %s89 = scalar_select %p86, %s87, %s88
    %p92 = pneg %p86
    %p93 = scmp.eq.s32.totalorder %s9, 1
    %p94 = por %p92, %p93
    %p95 = scmp.ne.s32.totalorder %s87, %s90
    %p96 = scmp.eq.s32.totalorder %s9, 0
    %p97 = por %p95, %p96
    %p98 = scmp.ne.s32.totalorder %s87, %s90
    %p99 = scmp.eq.s32.totalorder %s14, 1
    %p100 = por %p98, %p99
    %p101 = scmp.ne.s32.totalorder %s90, %s91
    %p102 = scmp.eq.s32.totalorder %s14, 0
    %p103 = por %p101, %p102
    %p104 = scmp.ne.s32.totalorder %s90, %s91
    %p105 = scmp.eq.s32.totalorder %s15, 1
    %p106 = por %p104, %p105
    %p108 = scmp.ne.s32.totalorder %s91, %s107
    %p109 = scmp.eq.s32.totalorder %s15, 0
    %p110 = por %p108, %p109
    %s111 = ssub.s32 %s16, %s28
    %s112 = ssub.s32 %s17, %s24
    %s113 = sor.u32 %s111, %s112
    %p114 = scmp.eq.s32.totalorder %s113, 0
    %s116 = sadd.s32 %s115, 1
    %s117 = scalar_select %p114, %s115, %s116
    %p120 = pneg %p114
    %p121 = scmp.eq.s32.totalorder %s9, 1
    %p122 = por %p120, %p121
    %p123 = scmp.ne.s32.totalorder %s115, %s118
    %p124 = scmp.eq.s32.totalorder %s9, 0
    %p125 = por %p123, %p124
    %p126 = scmp.ne.s32.totalorder %s115, %s118
    %p127 = scmp.eq.s32.totalorder %s14, 1
    %p128 = por %p126, %p127
    %p129 = scmp.ne.s32.totalorder %s118, %s119
    %p130 = scmp.eq.s32.totalorder %s14, 0
    %p131 = por %p129, %p130
    %p132 = scmp.ne.s32.totalorder %s118, %s119
    %p133 = scmp.eq.s32.totalorder %s15, 1
    %p134 = por %p132, %p133
    %p136 = scmp.ne.s32.totalorder %s119, %s135
    %p137 = scmp.eq.s32.totalorder %s15, 0
    %p138 = por %p136, %p137
    %p139 = scmp.le.s32.totalorder 1, %s9
    %p140 = scmp.lt.s32.totalorder %s9, 3
    %p141 = pnand %p139, %p140
    %p142 = pneg %p141
    // Predicated region
    $region9: #{_lambda_.11} parent=5 // pred_check
      _
    $region10: #{_lambda_.11} parent=5 // pred_check_branch
      %144 = sbr.rel (%p141) target = $region12
    $region11: #{_lambda_.11} parent=5 // pred_region
      %s145 = ssub.s32 %s9, 1
    $region12: #{_lambda_.11} parent=5 // pred_fallthru
      _
    %p146 = scmp.lt.s32.totalorder %s9, 2
    // Predicated region
    $region13: #{_lambda_.11} parent=5 // pred_check
      %p147 = pneg %p146
    $region14: #{_lambda_.11} parent=5 // pred_check_branch
      %149 = sbr.rel (%p147) target = $region16
    $region15: #{_lambda_.11} parent=5 // pred_region
      // Predicated region
      $region17: #{_lambda_.11} parent=15 // pred_check
        %p150 = pneg %p41
      $region18: #{_lambda_.11} parent=15 // pred_check_branch
        %152 = sbr.rel (%p150) target = $region20
      $region19: #{_lambda_.11} parent=15 // pred_region
        %p153 = scmp.lt.s32.totalorder %s16, 1
        %s154 = scalar_select %p153, %s16, 1
        %s155 = scalar_lea.vmem %s0, %s154
      $region20: #{_lambda_.11} parent=15 // pred_fallthru
        _
      // Predicated region
      $region21: #{_lambda_.11} parent=15 // pred_check
        %p156 = pneg %p69
      $region22: #{_lambda_.11} parent=15 // pred_check_branch
        %158 = sbr.rel (%p156) target = $region24
      $region23: #{_lambda_.11} parent=15 // pred_region
        %p159 = scmp.lt.s32.totalorder %s16, 1
        %s160 = scalar_select %p159, %s16, 1
        %p161 = scmp.lt.s32.totalorder %s17, 0
        %s162 = scalar_select %p161, %s17, 0
        %s163 = smul.addr %s160, 13
        %s164 = sadd.s32 %s162, %s163
        %s165 = smul.addr %s164, 4
        %s166 = scalar_lea.vmem %s1, %s165
      $region24: #{_lambda_.11} parent=15 // pred_fallthru
        _
      // Predicated region
      $region25: #{_lambda_.11} parent=15 // pred_check
        %p167 = pneg %p97
      $region26: #{_lambda_.11} parent=15 // pred_check_branch
        %169 = sbr.rel (%p167) target = $region28
      $region27: #{_lambda_.11} parent=15 // pred_region
        %p170 = scmp.lt.s32.totalorder %s16, 1
        %s171 = scalar_select %p170, %s16, 1
        %p172 = scmp.lt.s32.totalorder %s17, 0
        %s173 = scalar_select %p172, %s17, 0
        %s174 = smul.addr %s171, 2
        %s175 = sadd.s32 %s173, %s174
        %s176 = smul.addr %s175, 4
        %s177 = scalar_lea.vmem %s2, %s176
      $region28: #{_lambda_.11} parent=15 // pred_fallthru
        _
    $region16: #{_lambda_.11} parent=5 // pred_fallthru
      _
    %p178 = scmp.le.s32.totalorder 1, %s9
    %p179 = scmp.lt.s32.totalorder %s9, 3
    %p180 = pnand %p178, %p179
    %p181 = pneg %p180
    // Predicated region
    $region29: #{_lambda_.11} parent=5 // pred_check
      _
    $region30: #{_lambda_.11} parent=5 // pred_check_branch
      %183 = sbr.rel (%p180) target = $region32
    $region31: #{_lambda_.11} parent=5 // pred_region
      %s184 = ssub.s32 %s9, 1
      %p185 = scmp.lt.s32.totalorder %s18, 1
      %s186 = scalar_select %p185, %s18, 1
      %s187 = scalar_lea.vmem %s0, %s186
      %p188 = pneg %p47
      %p189 = pneg %p44
      %p190 = scmp.lt.s32.totalorder %s18, 1
      %s191 = scalar_select %p190, %s18, 1
      %p192 = scmp.lt.s32.totalorder %s19, 0
      %s193 = scalar_select %p192, %s19, 0
      %s194 = smul.addr %s191, 13
      %s195 = sadd.s32 %s193, %s194
      %s196 = smul.addr %s195, 4
      %s197 = scalar_lea.vmem %s1, %s196
      %p198 = pneg %p75
      %p199 = pneg %p72
      %p200 = scmp.lt.s32.totalorder %s18, 1
      %s201 = scalar_select %p200, %s18, 1
      %p202 = scmp.lt.s32.totalorder %s19, 0
      %s203 = scalar_select %p202, %s19, 0
      %s204 = smul.addr %s201, 2
      %s205 = sadd.s32 %s203, %s204
      %s206 = smul.addr %s205, 4
      %s207 = scalar_lea.vmem %s2, %s206
      %p208 = pneg %p103
      %p209 = pneg %p100
      %p210 = pneg %p131
      %p211 = pneg %p128
      %p212 = scmp.lt.s32.totalorder %s18, 1
      %s213 = scalar_select %p212, %s18, 1
      %p214 = scmp.lt.s32.totalorder %s19, 0
      %s215 = scalar_select %p214, %s19, 0
      %s216 = smul.addr %s213, 2
      %s217 = sadd.s32 %s215, %s216
      %s218 = smul.addr %s217, 4
      %s219 = scalar_lea.vmem %s3, %s218
      %p220 = scmp.lt.s32.totalorder %s18, 1
      %s221 = scalar_select %p220, %s18, 1
      %s222 = scalar_lea.vmem %s0, %s221
      %p223 = scmp.lt.s32.totalorder %s18, 1
      %s224 = scalar_select %p223, %s18, 1
      %p225 = scmp.lt.s32.totalorder %s19, 0
      %s226 = scalar_select %p225, %s19, 0
      %s227 = smul.addr %s224, 13
      %s228 = sadd.s32 %s226, %s227
      %s229 = smul.addr %s228, 4
      %s230 = scalar_lea.vmem %s1, %s229
      %p231 = scmp.lt.s32.totalorder %s18, 1
      %s232 = scalar_select %p231, %s18, 1
      %p233 = scmp.lt.s32.totalorder %s19, 0
      %s234 = scalar_select %p233, %s19, 0
      %s235 = smul.addr %s232, 2
      %s236 = sadd.s32 %s234, %s235
      %s237 = smul.addr %s236, 4
      %s238 = scalar_lea.vmem %s2, %s237
      %p239 = scmp.lt.s32.totalorder %s18, 1
      %s240 = scalar_select %p239, %s18, 1
      %p241 = scmp.lt.s32.totalorder %s19, 0
      %s242 = scalar_select %p241, %s19, 0
      %s243 = smul.addr %s240, 2
      %s244 = sadd.s32 %s242, %s243
      %s245 = smul.addr %s244, 4
      %s246 = scalar_lea.vmem %s3, %s245
      %v248 = vld [vmem:[%s222] sm:$0x1]
      %v249 = vld [vmem:[%s230] sm:$0xf]
      %v250 = vld [vmem:[%s230 + $0x4] sm:$0xf]
      %v251 = vld [vmem:[%s230 + $0x8] sm:$0xf]
      %v252 = vld [vmem:[%s230 + $0xc] sm:$0xf]
      %v253 = vld [vmem:[%s230 + $0x10] sm:$0xf]
      %v254 = vld [vmem:[%s230 + $0x14] sm:$0xf]
      %v255 = vld [vmem:[%s230 + $0x18] sm:$0xf]
      %v256 = vld [vmem:[%s230 + $0x1c] sm:$0xf]
      %v257 = vld [vmem:[%s230 + $0x20] sm:$0xf]
      %v258 = vld [vmem:[%s230 + $0x24] sm:$0xf]
      %v259 = vld [vmem:[%s230 + $0x28] sm:$0xf]
      %v260 = vld [vmem:[%s230 + $0x2c] sm:$0xf]
      %v261 = vld [vmem:[%s230 + $0x30] sm:$0x1]
      %v275 = vunpack.c.l.b16 %v249
      %v276 = vunpack.c.l.b16 %v250
      %v277 = vunpack.c.l.b16 %v251
      %v278 = vunpack.c.l.b16 %v252
      %v279 = vunpack.c.l.b16 %v253
      %v280 = vunpack.c.l.b16 %v254
      %v281 = vunpack.c.l.b16 %v255
      %v282 = vunpack.c.l.b16 %v256
      %v283 = vunpack.c.l.b16 %v257
      %v284 = vunpack.c.l.b16 %v258
      %v285 = vunpack.c.l.b16 %v259
      %v286 = vunpack.c.l.b16 %v260
      %v287 = vunpack.c.l.b16 %v261
      %v288 = vpack.c.b16 %v276, %v275
      %v289 = vpack.c.b16 %v278, %v277
      %v290 = vpack.c.b16 %v280, %v279
      %v291 = vpack.c.b16 %v282, %v281
      %v292 = vpack.c.b16 %v284, %v283
      %v293 = vpack.c.b16 %v286, %v285
      %v294 = vpack.c.b16 %v287, %v287
      %vm301 = vcmask 801792
      %v303 = vsel %vm301, %v248, 0
      %vm305 = vcmask 1040384
      %v307 = vsel %vm305, %v294, 0
      %309 = vmatprep.subr.bf16.mxu0 0
      %310 = vmatpush1.bf16.msra.mxu0 0
      %311 = vmatprep.subr.bf16.mxu0 0
      %312 = vmatpush1.bf16.msra.mxu0 %v307
      %313 = vmatprep.subr.bf16.mxu0 0
      %314 = vmatpush1.bf16.msra.mxu0 %v293
      %315 = vmatprep.subr.bf16.mxu0 0
      %316 = vmatpush1.bf16.msra.mxu0 %v292
      %317 = vmatprep.subr.bf16.mxu0 0
      %318 = vmatpush1.bf16.msra.mxu0 %v291
      %319 = vmatprep.subr.bf16.mxu0 0
      %320 = vmatpush1.bf16.msra.mxu0 %v290
      %321 = vmatprep.subr.bf16.mxu0 0
      %322 = vmatpush1.bf16.msra.mxu0 %v289
      %323 = vmatprep.subr.bf16.mxu0 0
      %324 = vmatpush1.bf16.msra.mxu0 %v288
      %325 = vmatprep.subr.bf16.mxu0 0
      %326 = vmatpush2.bf16.msra.mxu0 0
      %327 = vmatprep.subr.bf16.mxu0 0
      %328 = vmatpush2.bf16.msra.mxu0 0
      %329 = vmatprep.subr.bf16.mxu0 0
      %330 = vmatpush2.bf16.msra.mxu0 0
      %331 = vmatprep.subr.bf16.mxu0 0
      %332 = vmatpush2.bf16.msra.mxu0 0
      %333 = vmatprep.subr.bf16.mxu0 0
      %334 = vmatpush2.bf16.msra.mxu0 0
      %335 = vmatprep.subr.bf16.mxu0 0
      %336 = vmatpush2.bf16.msra.mxu0 0
      %337 = vmatprep.subr.bf16.mxu0 0
      %338 = vmatpush2.bf16.msra.mxu0 0
      %339 = vmatprep.subr.bf16.mxu0 0
      %340 = vmatpush2.bf16.msra.mxu0 0
      %341 = vmatprep.mubr.bf16.mxu0 0
      %342 = vmatmul.mubr.bf16.gmra.mxu0 %v303
      %v343 = vpop.f32.mrf.mxu0
      %v344 = vadd.f32 0.0, %v343
      %v345 = vpop.f32.mrf.mxu0
      %v346 = vpop.f32.mrf.mxu0
      %v347 = vpop.f32.mrf.mxu0
      %348 = vdwg.mxu0
      %v349 = vmul.f32 %v344, 0.5
      %v350 = vtanh.pop %v349
      %v351 = vadd.f32 %v350, 1.0
      %v352 = vmul.f32 %v351, 0.5
      %v353 = vld [vmem:[%s238] sm:$0xf]
      %v354 = vld [vmem:[%s238 + $0x4] sm:$0xf]
      %v355 = vunpack.c.l.bf16 %v353
      %v356 = vunpack.c.l.bf16 %v354
      %v357 = vlaneseq
      %v358 = vshrl.u32 %v357, 7
      %v359 = vsub.s32 0, %v358
      %v360 = vrot.slane %v352, %v359
      %v361 = vmul.f32 %v355, %v360
      %v362 = vmul.f32 %v356, %v360
      %v363 = vpack.c.bf16 %v362, %v361
      %v365 = vunpack.c.l.b16 %v363
      %v366 = vunpack.c.h.b16 %v363
      %v367 = vpack.c.b16 %v365, %v365
      %v368 = vpack.c.b16 %v366, %v366
      %371 = vst [vmem:[%s246] sm:$0xf] %v367
      %372 = vst [vmem:[%s246 + $0x4] sm:$0xf] %v368
      %p373 = scmp.lt.s32.totalorder %s18, 1
      %s374 = scalar_select %p373, %s18, 1
      %p375 = scmp.lt.s32.totalorder %s19, 0
      %s376 = scalar_select %p375, %s19, 0
      %s377 = smul.addr %s374, 2
      %s378 = sadd.s32 %s376, %s377
      %s379 = smul.addr %s378, 4
      %s380 = scalar_lea.vmem %s3, %s379
      // Predicated region
      $region33: #{_lambda_.11} parent=31 // pred_check
        %p381 = pneg %p128
      $region34: #{_lambda_.11} parent=31 // pred_check_branch
        %383 = sbr.rel (%p381) target = $region36
      $region35: #{_lambda_.11} parent=31 // pred_region
        _
      $region36: #{_lambda_.11} parent=31 // pred_fallthru
        _
    $region32: #{_lambda_.11} parent=5 // pred_fallthru
      _
    %p384 = scmp.le.s32.totalorder 2, %s9
    // Predicated region
    $region37: #{_lambda_.11} parent=5 // pred_check
      %p385 = pneg %p384
    $region38: #{_lambda_.11} parent=5 // pred_check_branch
      %387 = sbr.rel (%p385) target = $region40
    $region39: #{_lambda_.11} parent=5 // pred_region
      %s388 = ssub.s32 %s9, 2
      // Predicated region
      $region41: #{_lambda_.11} parent=39 // pred_check
        %p389 = pneg %p134
      $region42: #{_lambda_.11} parent=39 // pred_check_branch
        %391 = sbr.rel (%p389) target = $region44
      $region43: #{_lambda_.11} parent=39 // pred_region
        %p392 = scmp.lt.s32.totalorder %s20, 1
        %s393 = scalar_select %p392, %s20, 1
        %p394 = scmp.lt.s32.totalorder %s21, 0
        %s395 = scalar_select %p394, %s21, 0
        %s396 = smul.addr %s393, 2
        %s397 = sadd.s32 %s395, %s396
        %s398 = smul.addr %s397, 4
        %s399 = scalar_lea.vmem %s3, %s398
      $region44: #{_lambda_.11} parent=39 // pred_fallthru
        _
    $region40: #{_lambda_.11} parent=5 // pred_fallthru
      _
  $region6: #{_lambda_.11} parent=0 // loop_footer
    %s13 = sadd.s32 1, %s9
  $region7: #{_lambda_.11} parent=0 // loop_footer_branch
    %8 = sbr.rel target = $region3
  $region8: #{_lambda_.11} parent=0 // loop_exit
    _

// kernel: _lambda_.12
$region0: #{_lambda_.12}
  #allocation0 [shape = 'u32[]', space=smem, size = 0x4, offset = 0x4, fixed_abs, tag = 'smem constant byte address 0x4 - core index']
  #allocation1 [shape = 'u32[144,128]{1,0:T(1,128)}', space=vmem, size = 0x12000, scoped, tag = 'internal scratch']
  %s0 = inlined_call_operand.vmem [shape: bf16[32,128], index: 0, kind: input, shape index: {}]
  %s1 = inlined_call_operand.vmem [shape: f32[4,32], index: 1, kind: input, shape index: {}]
  %s2 = inlined_call_operand.vmem [shape: f32[32,4], index: 2, kind: input, shape index: {}]
  %s3 = inlined_call_operand.vmem [shape: bf16[32,128], index: 3, kind: output, shape index: {}]
  %s4 = sld [smem:[#allocation0]]
  $region22: #{_lambda_.12} parent=0
    _
  %s6 = ssub.s32 1, %s4
  %s7 = scalar_select 0, %s6, %s4
  // Predicated region
  $region2: #{_lambda_.12} parent=0 // pred_check
    _
  $region3: #{_lambda_.12} parent=0 // pred_check_branch
    %9 = sbr.rel (0) target = $region5
  $region4: #{_lambda_.12} parent=0 // pred_region
    _
  $region5: #{_lambda_.12} parent=0 // pred_fallthru
    _
  // Predicated region
  $region6: #{_lambda_.12} parent=0 // pred_check
    _
  $region7: #{_lambda_.12} parent=0 // pred_check_branch
    %11 = sbr.rel (0) target = $region9
  $region8: #{_lambda_.12} parent=0 // pred_region
    _
  $region9: #{_lambda_.12} parent=0 // pred_fallthru
    _
  // Predicated region
  $region10: #{_lambda_.12} parent=0 // pred_check
    _
  $region11: #{_lambda_.12} parent=0 // pred_check_branch
    %13 = sbr.rel (0) target = $region13
  $region12: #{_lambda_.12} parent=0 // pred_region
    _
  $region13: #{_lambda_.12} parent=0 // pred_fallthru
    _
  %v14 = vld [vmem:[%s0] sm:$0xf]
  %v15 = vld [vmem:[%s0 + $0x4] sm:$0xf]
  %v16 = vld [vmem:[%s0 + $0x8] sm:$0xf]
  %v17 = vld [vmem:[%s0 + $0xc] sm:$0xf]
  %v18 = vunpack.c.l.bf16 %v14
  %v19 = vunpack.c.l.bf16 %v15
  %v20 = vunpack.c.l.bf16 %v16
  %v21 = vunpack.c.l.bf16 %v17
  %v22 = vlaneseq
  %v23 = vand.u32 %v22, 127
  %vm24 = vcmp.ge.s32.totalorder %v23, 0
  %vm25 = vcmp.lt.s32.totalorder %v23, 36
  %vm26 = vmand %vm24, %vm25
  %v27 = vsel %vm26, %v18, 0.0
  %v28 = vsel %vm26, %v19, 0.0
  %v29 = vsel %vm26, %v20, 0.0
  %v30 = vsel %vm26, %v21, 0.0
  %31 = vadd.xlane.f32.xlu0 %v27
  %v32 = vpop.xlane.xlu0 %31
  %33 = vadd.xlane.f32.xlu0 %v28
  %v34 = vpop.xlane.xlu0 %33
  %35 = vadd.xlane.f32.xlu0 %v29
  %v36 = vpop.xlane.xlu0 %35
  %37 = vadd.xlane.f32.xlu0 %v30
  %v38 = vpop.xlane.xlu0 %37
  %v39 = vmul.f32 %v32, 0.027777778
  %v40 = vmul.f32 %v34, 0.027777778
  %v41 = vmul.f32 %v36, 0.027777778
  %v42 = vmul.f32 %v38, 0.027777778
  %v43 = vsel %vm26, %v18, -inf
  %v44 = vsel %vm26, %v19, -inf
  %v45 = vsel %vm26, %v20, -inf
  %v46 = vsel %vm26, %v21, -inf
  %47 = vmax.xlane.f32.xlu0 %v43
  %v48 = vpop.xlane.xlu0 %47
  %49 = vmax.xlane.f32.xlu0 %v44
  %v50 = vpop.xlane.xlu0 %49
  %51 = vmax.xlane.f32.xlu0 %v45
  %v52 = vpop.xlane.xlu0 %51
  %53 = vmax.xlane.f32.xlu0 %v46
  %v54 = vpop.xlane.xlu0 %53
  %vm55 = vcmp.ge.s32.totalorder %v23, 36
  %vm56 = vcmp.lt.s32.totalorder %v23, 72
  %vm57 = vmand %vm55, %vm56
  %v58 = vsel %vm57, %v18, 0.0
  %v59 = vsel %vm57, %v19, 0.0
  %v60 = vsel %vm57, %v20, 0.0
  %v61 = vsel %vm57, %v21, 0.0
  %62 = vadd.xlane.f32.xlu0 %v58
  %v63 = vpop.xlane.xlu0 %62
  %64 = vadd.xlane.f32.xlu0 %v59
  %v65 = vpop.xlane.xlu0 %64
  %66 = vadd.xlane.f32.xlu0 %v60
  %v67 = vpop.xlane.xlu0 %66
  %68 = vadd.xlane.f32.xlu0 %v61
  %v69 = vpop.xlane.xlu0 %68
  %v70 = vmul.f32 %v63, 0.027777778
  %v71 = vmul.f32 %v65, 0.027777778
  %v72 = vmul.f32 %v67, 0.027777778
  %v73 = vmul.f32 %v69, 0.027777778
  %v74 = vsel %vm57, %v18, -inf
  %v75 = vsel %vm57, %v19, -inf
  %v76 = vsel %vm57, %v20, -inf
  %v77 = vsel %vm57, %v21, -inf
  %78 = vmax.xlane.f32.xlu0 %v74
  %v79 = vpop.xlane.xlu0 %78
  %80 = vmax.xlane.f32.xlu0 %v75
  %v81 = vpop.xlane.xlu0 %80
  %82 = vmax.xlane.f32.xlu0 %v76
  %v83 = vpop.xlane.xlu0 %82
  %84 = vmax.xlane.f32.xlu0 %v77
  %v85 = vpop.xlane.xlu0 %84
  %vm86 = vcmask 7168
  %v87 = vsel %vm86, %v39, %v70
  %v88 = vsel %vm86, %v40, %v71
  %v89 = vsel %vm86, %v41, %v72
  %v90 = vsel %vm86, %v42, %v73
  %v91 = vsel %vm86, %v48, %v79
  %v92 = vsel %vm86, %v50, %v81
  %v93 = vsel %vm86, %v52, %v83
  %v94 = vsel %vm86, %v54, %v85
  %v95 = vld [vmem:[%s1] sm:$0xf]
  %vm96 = vcmask 261120
  %v98 = vsel %vm96, %v95, 0
  %100 = vmatprep.subr.mxu0 0.0
  %101 = vmatpush1.msra.mxu0 0.0
  %102 = vmatprep.subr.mxu0 0.0
  %103 = vmatpush1.msra.mxu0 0.0
  %104 = vmatprep.subr.mxu0 0.0
  %105 = vmatpush1.msra.mxu0 0.0
  %106 = vmatprep.subr.mxu0 0.0
  %107 = vmatpush1.msra.mxu0 0.0
  %108 = vmatprep.subr.mxu0 0.0
  %109 = vmatpush1.msra.mxu0 0.0
  %110 = vmatprep.subr.mxu0 0.0
  %111 = vmatpush1.msra.mxu0 0.0
  %112 = vmatprep.subr.mxu0 0.0
  %113 = vmatpush1.msra.mxu0 0.0
  %114 = vmatprep.subr.mxu0 0.0
  %115 = vmatpush1.msra.mxu0 0.0
  %116 = vmatprep.subr.mxu0 0.0
  %117 = vmatpush1.msra.mxu0 0.0
  %118 = vmatprep.subr.mxu0 0.0
  %119 = vmatpush1.msra.mxu0 0.0
  %120 = vmatprep.subr.mxu0 0.0
  %121 = vmatpush1.msra.mxu0 0.0
  %122 = vmatprep.subr.mxu0 0.0
  %123 = vmatpush1.msra.mxu0 0.0
  %124 = vmatprep.subr.mxu0 0.0
  %125 = vmatpush1.msra.mxu0 %v90
  %126 = vmatprep.subr.mxu0 0.0
  %127 = vmatpush1.msra.mxu0 %v89
  %128 = vmatprep.subr.mxu0 0.0
  %129 = vmatpush1.msra.mxu0 %v88
  %130 = vmatprep.subr.mxu0 0.0
  %131 = vmatpush1.msra.mxu0 %v87
  %132 = vmatprep.subr.mxu0 0.0
  %133 = vmatpush2.msra.mxu0 0.0
  %134 = vmatprep.subr.mxu0 0.0
  %135 = vmatpush2.msra.mxu0 0.0
  %136 = vmatprep.subr.mxu0 0.0
  %137 = vmatpush2.msra.mxu0 0.0
  %138 = vmatprep.subr.mxu0 0.0
  %139 = vmatpush2.msra.mxu0 0.0
  %140 = vmatprep.subr.mxu0 0.0
  %141 = vmatpush2.msra.mxu0 0.0
  %142 = vmatprep.subr.mxu0 0.0
  %143 = vmatpush2.msra.mxu0 0.0
  %144 = vmatprep.subr.mxu0 0.0
  %145 = vmatpush2.msra.mxu0 0.0
  %146 = vmatprep.subr.mxu0 0.0
  %147 = vmatpush2.msra.mxu0 0.0
  %148 = vmatprep.subr.mxu0 0.0
  %149 = vmatpush2.msra.mxu0 0.0
  %150 = vmatprep.subr.mxu0 0.0
  %151 = vmatpush2.msra.mxu0 0.0
  %152 = vmatprep.subr.mxu0 0.0
  %153 = vmatpush2.msra.mxu0 0.0
  %154 = vmatprep.subr.mxu0 0.0
  %155 = vmatpush2.msra.mxu0 0.0
  %156 = vmatprep.subr.mxu0 0.0
  %157 = vmatpush2.msra.mxu0 0.0
  %158 = vmatprep.subr.mxu0 0.0
  %159 = vmatpush2.msra.mxu0 0.0
  %160 = vmatprep.subr.mxu0 0.0
  %161 = vmatpush2.msra.mxu0 0.0
  %162 = vmatprep.subr.mxu0 0.0
  %163 = vmatpush2.msra.mxu0 0.0
  %164 = vmatprep.mubr.f32.mxu0 0.0
  %165 = vmatmul.mubr.f32.gmra.mxu0 %v98
  %v166 = vpop.f32.mrf.mxu0
  %v167 = vadd.f32 0.0, %v166
  %v168 = vpop.f32.mrf.mxu0
  %169 = vdwg.mxu0
  %v170 = vmax.f32 %v167, 0.0
  %v171 = vld [vmem:[%s2] sm:$0xff]
  %v172 = vld [vmem:[%s2 + $0x8] sm:$0xff]
  %v173 = vld [vmem:[%s2 + $0x10] sm:$0xff]
  %v174 = vld [vmem:[%s2 + $0x18] sm:$0xff]
  %175 = vmatprep.subr.mxu0 0.0
  %176 = vmatpush1.msra.mxu0 0.0
  %177 = vmatprep.subr.mxu0 0.0
  %178 = vmatpush1.msra.mxu0 0.0
  %179 = vmatprep.subr.mxu0 0.0
  %180 = vmatpush1.msra.mxu0 0.0
  %181 = vmatprep.subr.mxu0 0.0
  %182 = vmatpush1.msra.mxu0 0.0
  %183 = vmatprep.subr.mxu0 0.0
  %184 = vmatpush1.msra.mxu0 0.0
  %185 = vmatprep.subr.mxu0 0.0
  %186 = vmatpush1.msra.mxu0 0.0
  %187 = vmatprep.subr.mxu0 0.0
  %188 = vmatpush1.msra.mxu0 0.0
  %189 = vmatprep.subr.mxu0 0.0
  %190 = vmatpush1.msra.mxu0 0.0
  %191 = vmatprep.subr.mxu0 0.0
  %192 = vmatpush1.msra.mxu0 0.0
  %193 = vmatprep.subr.mxu0 0.0
  %194 = vmatpush1.msra.mxu0 0.0
  %195 = vmatprep.subr.mxu0 0.0
  %196 = vmatpush1.msra.mxu0 0.0
  %197 = vmatprep.subr.mxu0 0.0
  %198 = vmatpush1.msra.mxu0 0.0
  %199 = vmatprep.subr.mxu0 0.0
  %200 = vmatpush1.msra.mxu0 %v94
  %201 = vmatprep.subr.mxu0 0.0
  %202 = vmatpush1.msra.mxu0 %v93
  %203 = vmatprep.subr.mxu0 0.0
  %204 = vmatpush1.msra.mxu0 %v92
  %205 = vmatprep.subr.mxu0 0.0
  %206 = vmatpush1.msra.mxu0 %v91
  %207 = vmatprep.subr.mxu0 0.0
  %208 = vmatpush2.msra.mxu0 0.0
  %209 = vmatprep.subr.mxu0 0.0
  %210 = vmatpush2.msra.mxu0 0.0
  %211 = vmatprep.subr.mxu0 0.0
  %212 = vmatpush2.msra.mxu0 0.0
  %213 = vmatprep.subr.mxu0 0.0
  %214 = vmatpush2.msra.mxu0 0.0
  %215 = vmatprep.subr.mxu0 0.0
  %216 = vmatpush2.msra.mxu0 0.0
  %217 = vmatprep.subr.mxu0 0.0
  %218 = vmatpush2.msra.mxu0 0.0
  %219 = vmatprep.subr.mxu0 0.0
  %220 = vmatpush2.msra.mxu0 0.0
  %221 = vmatprep.subr.mxu0 0.0
  %222 = vmatpush2.msra.mxu0 0.0
  %223 = vmatprep.subr.mxu0 0.0
  %224 = vmatpush2.msra.mxu0 0.0
  %225 = vmatprep.subr.mxu0 0.0
  %226 = vmatpush2.msra.mxu0 0.0
  %227 = vmatprep.subr.mxu0 0.0
  %228 = vmatpush2.msra.mxu0 0.0
  %229 = vmatprep.subr.mxu0 0.0
  %230 = vmatpush2.msra.mxu0 0.0
  %231 = vmatprep.subr.mxu0 0.0
  %232 = vmatpush2.msra.mxu0 0.0
  %233 = vmatprep.subr.mxu0 0.0
  %234 = vmatpush2.msra.mxu0 0.0
  %235 = vmatprep.subr.mxu0 0.0
  %236 = vmatpush2.msra.mxu0 0.0
  %237 = vmatprep.subr.mxu0 0.0
  %238 = vmatpush2.msra.mxu0 0.0
  %239 = vmatprep.mubr.f32.mxu0 0.0
  %240 = vmatmul.mubr.f32.gmra.mxu0 %v98
  %v241 = vpop.f32.mrf.mxu0
  %v242 = vadd.f32 0.0, %v241
  %v243 = vpop.f32.mrf.mxu0
  %244 = vdwg.mxu0
  %v245 = vmax.f32 %v242, 0.0
  %vm246 = vcmask 31744
  %v248 = vsel %vm246, %v171, 0
  %v251 = vsel %vm246, %v172, 0
  %v254 = vsel %vm246, %v173, 0
  %v257 = vsel %vm246, %v174, 0
  %vm259 = vcmask 1043456
  %v261 = vsel %vm259, %v245, 0
  %263 = vmatprep.subr.mxu0 0.0
  %264 = vmatpush1.msra.mxu0 0.0
  %265 = vmatprep.subr.mxu0 0.0
  %266 = vmatpush1.msra.mxu0 0.0
  %267 = vmatprep.subr.mxu0 0.0
  %268 = vmatpush1.msra.mxu0 0.0
  %269 = vmatprep.subr.mxu0 0.0
  %270 = vmatpush1.msra.mxu0 0.0
  %271 = vmatprep.subr.mxu0 0.0
  %272 = vmatpush1.msra.mxu0 0.0
  %273 = vmatprep.subr.mxu0 0.0
  %274 = vmatpush1.msra.mxu0 0.0
  %275 = vmatprep.subr.mxu0 0.0
  %276 = vmatpush1.msra.mxu0 0.0
  %277 = vmatprep.subr.mxu0 0.0
  %278 = vmatpush1.msra.mxu0 0.0
  %279 = vmatprep.subr.mxu0 0.0
  %280 = vmatpush1.msra.mxu0 0.0
  %281 = vmatprep.subr.mxu0 0.0
  %282 = vmatpush1.msra.mxu0 0.0
  %283 = vmatprep.subr.mxu0 0.0
  %284 = vmatpush1.msra.mxu0 0.0
  %285 = vmatprep.subr.mxu0 0.0
  %286 = vmatpush1.msra.mxu0 0.0
  %287 = vmatprep.subr.mxu0 0.0
  %288 = vmatpush1.msra.mxu0 0.0
  %289 = vmatprep.subr.mxu0 0.0
  %290 = vmatpush1.msra.mxu0 0.0
  %291 = vmatprep.subr.mxu0 0.0
  %292 = vmatpush1.msra.mxu0 0.0
  %293 = vmatprep.subr.mxu0 0.0
  %294 = vmatpush1.msra.mxu0 %v261
  %295 = vmatprep.subr.mxu0 0.0
  %296 = vmatpush2.msra.mxu0 0.0
  %297 = vmatprep.subr.mxu0 0.0
  %298 = vmatpush2.msra.mxu0 0.0
  %299 = vmatprep.subr.mxu0 0.0
  %300 = vmatpush2.msra.mxu0 0.0
  %301 = vmatprep.subr.mxu0 0.0
  %302 = vmatpush2.msra.mxu0 0.0
  %303 = vmatprep.subr.mxu0 0.0
  %304 = vmatpush2.msra.mxu0 0.0
  %305 = vmatprep.subr.mxu0 0.0
  %306 = vmatpush2.msra.mxu0 0.0
  %307 = vmatprep.subr.mxu0 0.0
  %308 = vmatpush2.msra.mxu0 0.0
  %309 = vmatprep.subr.mxu0 0.0
  %310 = vmatpush2.msra.mxu0 0.0
  %311 = vmatprep.subr.mxu0 0.0
  %312 = vmatpush2.msra.mxu0 0.0
  %313 = vmatprep.subr.mxu0 0.0
  %314 = vmatpush2.msra.mxu0 0.0
  %315 = vmatprep.subr.mxu0 0.0
  %316 = vmatpush2.msra.mxu0 0.0
  %317 = vmatprep.subr.mxu0 0.0
  %318 = vmatpush2.msra.mxu0 0.0
  %319 = vmatprep.subr.mxu0 0.0
  %320 = vmatpush2.msra.mxu0 0.0
  %321 = vmatprep.subr.mxu0 0.0
  %322 = vmatpush2.msra.mxu0 0.0
  %323 = vmatprep.subr.mxu0 0.0
  %324 = vmatpush2.msra.mxu0 0.0
  %325 = vmatprep.subr.mxu0 0.0
  %326 = vmatpush2.msra.mxu0 0.0
  %327 = vmatprep.mubr.f32.mxu0 0.0
  %328 = vmatmul.mubr.f32.gmra.mxu0 %v248
  %v329 = vpop.f32.mrf.mxu0
  %v330 = vadd.f32 0.0, %v329
  %v331 = vpop.f32.mrf.mxu0
  %332 = vmatprep.mubr.f32.mxu0 0.0
  %333 = vmatmul.mubr.f32.gmra.mxu0 %v251
  %v334 = vpop.f32.mrf.mxu0
  %v335 = vadd.f32 0.0, %v334
  %v336 = vpop.f32.mrf.mxu0
  %337 = vmatprep.mubr.f32.mxu0 0.0
  %338 = vmatmul.mubr.f32.gmra.mxu0 %v254
  %v339 = vpop.f32.mrf.mxu0
  %v340 = vadd.f32 0.0, %v339
  %v341 = vpop.f32.mrf.mxu0
  %342 = vmatprep.mubr.f32.mxu0 0.0
  %343 = vmatmul.mubr.f32.gmra.mxu0 %v257
  %v344 = vpop.f32.mrf.mxu0
  %v345 = vadd.f32 0.0, %v344
  %v346 = vpop.f32.mrf.mxu0
  %347 = vdwg.mxu0
  %v349 = vsel %vm259, %v170, 0
  %351 = vmatprep.subr.mxu0 0.0
  %352 = vmatpush1.msra.mxu0 0.0
  %353 = vmatprep.subr.mxu0 0.0
  %354 = vmatpush1.msra.mxu0 0.0
  %355 = vmatprep.subr.mxu0 0.0
  %356 = vmatpush1.msra.mxu0 0.0
  %357 = vmatprep.subr.mxu0 0.0
  %358 = vmatpush1.msra.mxu0 0.0
  %359 = vmatprep.subr.mxu0 0.0
  %360 = vmatpush1.msra.mxu0 0.0
  %361 = vmatprep.subr.mxu0 0.0
  %362 = vmatpush1.msra.mxu0 0.0
  %363 = vmatprep.subr.mxu0 0.0
  %364 = vmatpush1.msra.mxu0 0.0
  %365 = vmatprep.subr.mxu0 0.0
  %366 = vmatpush1.msra.mxu0 0.0
  %367 = vmatprep.subr.mxu0 0.0
  %368 = vmatpush1.msra.mxu0 0.0
  %369 = vmatprep.subr.mxu0 0.0
  %370 = vmatpush1.msra.mxu0 0.0
  %371 = vmatprep.subr.mxu0 0.0
  %372 = vmatpush1.msra.mxu0 0.0
  %373 = vmatprep.subr.mxu0 0.0
  %374 = vmatpush1.msra.mxu0 0.0
  %375 = vmatprep.subr.mxu0 0.0
  %376 = vmatpush1.msra.mxu0 0.0
  %377 = vmatprep.subr.mxu0 0.0
  %378 = vmatpush1.msra.mxu0 0.0
  %379 = vmatprep.subr.mxu0 0.0
  %380 = vmatpush1.msra.mxu0 0.0
  %381 = vmatprep.subr.mxu0 0.0
  %382 = vmatpush1.msra.mxu0 %v349
  %383 = vmatprep.subr.mxu0 0.0
  %384 = vmatpush2.msra.mxu0 0.0
  %385 = vmatprep.subr.mxu0 0.0
  %386 = vmatpush2.msra.mxu0 0.0
  %387 = vmatprep.subr.mxu0 0.0
  %388 = vmatpush2.msra.mxu0 0.0
  %389 = vmatprep.subr.mxu0 0.0
  %390 = vmatpush2.msra.mxu0 0.0
  %391 = vmatprep.subr.mxu0 0.0
  %392 = vmatpush2.msra.mxu0 0.0
  %393 = vmatprep.subr.mxu0 0.0
  %394 = vmatpush2.msra.mxu0 0.0
  %395 = vmatprep.subr.mxu0 0.0
  %396 = vmatpush2.msra.mxu0 0.0
  %397 = vmatprep.subr.mxu0 0.0
  %398 = vmatpush2.msra.mxu0 0.0
  %399 = vmatprep.subr.mxu0 0.0
  %400 = vmatpush2.msra.mxu0 0.0
  %401 = vmatprep.subr.mxu0 0.0
  %402 = vmatpush2.msra.mxu0 0.0
  %403 = vmatprep.subr.mxu0 0.0
  %404 = vmatpush2.msra.mxu0 0.0
  %405 = vmatprep.subr.mxu0 0.0
  %406 = vmatpush2.msra.mxu0 0.0
  %407 = vmatprep.subr.mxu0 0.0
  %408 = vmatpush2.msra.mxu0 0.0
  %409 = vmatprep.subr.mxu0 0.0
  %410 = vmatpush2.msra.mxu0 0.0
  %411 = vmatprep.subr.mxu0 0.0
  %412 = vmatpush2.msra.mxu0 0.0
  %413 = vmatprep.subr.mxu0 0.0
  %414 = vmatpush2.msra.mxu0 0.0
  %415 = vmatprep.mubr.f32.mxu0 0.0
  %416 = vmatmul.mubr.f32.gmra.mxu0 %v248
  %v417 = vpop.f32.mrf.mxu0
  %v418 = vadd.f32 %v330, %v417
  %v419 = vpop.f32.mrf.mxu0
  %420 = vmatprep.mubr.f32.mxu0 0.0
  %421 = vmatmul.mubr.f32.gmra.mxu0 %v251
  %v422 = vpop.f32.mrf.mxu0
  %v423 = vadd.f32 %v335, %v422
  %v424 = vpop.f32.mrf.mxu0
  %425 = vmatprep.mubr.f32.mxu0 0.0
  %426 = vmatmul.mubr.f32.gmra.mxu0 %v254
  %v427 = vpop.f32.mrf.mxu0
  %v428 = vadd.f32 %v340, %v427
  %v429 = vpop.f32.mrf.mxu0
  %430 = vmatprep.mubr.f32.mxu0 0.0
  %431 = vmatmul.mubr.f32.gmra.mxu0 %v257
  %v432 = vpop.f32.mrf.mxu0
  %v433 = vadd.f32 %v345, %v432
  %v434 = vpop.f32.mrf.mxu0
  %435 = vdwg.mxu0
  %v436 = vmul.f32 %v418, 0.5
  %v437 = vmul.f32 %v423, 0.5
  %v438 = vmul.f32 %v428, 0.5
  %v439 = vmul.f32 %v433, 0.5
  %v440 = vtanh.pop %v436
  %v441 = vtanh.pop %v437
  %v442 = vtanh.pop %v438
  %v443 = vtanh.pop %v439
  %v444 = vadd.f32 %v440, 1.0
  %v445 = vadd.f32 %v441, 1.0
  %v446 = vadd.f32 %v442, 1.0
  %v447 = vadd.f32 %v443, 1.0
  %v448 = vmul.f32 %v444, 0.5
  %v449 = vmul.f32 %v445, 0.5
  %v450 = vmul.f32 %v446, 0.5
  %v451 = vmul.f32 %v447, 0.5
  %453 = vset.pattern.permute.xlu0 0
  %454 = vperm.xlu0 %453, %v448
  %v455 = vpop.permute.xlu0 %454
  %458 = vset.pattern.permute.xlu0 0
  %459 = vperm.xlu0 %458, %v449
  %v460 = vpop.permute.xlu0 %459
  %463 = vset.pattern.permute.xlu0 0
  %464 = vperm.xlu0 %463, %v450
  %v465 = vpop.permute.xlu0 %464
  %468 = vset.pattern.permute.xlu0 0
  %469 = vperm.xlu0 %468, %v451
  %v470 = vpop.permute.xlu0 %469
  %v472 = vsel %vm26, %v455, 0.0
  %v473 = vsel %vm26, %v460, 0.0
  %v474 = vsel %vm26, %v465, 0.0
  %v475 = vsel %vm26, %v470, 0.0
  %476 = vset.pattern.permute.xlu0 1
  %477 = vperm.xlu0 %476, %v448
  %v478 = vpop.permute.xlu0 %477
  %480 = vset.pattern.permute.xlu0 1
  %481 = vperm.xlu0 %480, %v449
  %v482 = vpop.permute.xlu0 %481
  %484 = vset.pattern.permute.xlu0 1
  %485 = vperm.xlu0 %484, %v450
  %v486 = vpop.permute.xlu0 %485
  %488 = vset.pattern.permute.xlu0 1
  %489 = vperm.xlu0 %488, %v451
  %v490 = vpop.permute.xlu0 %489
  %v492 = vsel %vm57, %v478, %v472
  %v493 = vsel %vm57, %v482, %v473
  %v494 = vsel %vm57, %v486, %v474
  %v495 = vsel %vm57, %v490, %v475
  %v496 = vmul.f32 %v18, %v492
  %v497 = vmul.f32 %v19, %v493
  %v498 = vmul.f32 %v20, %v494
  %v499 = vmul.f32 %v21, %v495
  %v500 = vpack.c.bf16 %v497, %v496
  %v501 = vpack.c.bf16 %v499, %v498
  %v504 = vunpack.c.l.b16 %v500
  %v505 = vunpack.c.h.b16 %v500
  %v506 = vunpack.c.l.b16 %v501
  %v507 = vunpack.c.h.b16 %v501
  %v508 = vpack.c.b16 %v504, %v504
  %v509 = vpack.c.b16 %v505, %v505
  %v510 = vpack.c.b16 %v506, %v506
  %v511 = vpack.c.b16 %v507, %v507
  %516 = vst [vmem:[%s3] sm:$0xf] %v508
  %517 = vst [vmem:[%s3 + $0x4] sm:$0xf] %v509
  %518 = vst [vmem:[%s3 + $0x8] sm:$0xf] %v510
  %519 = vst [vmem:[%s3 + $0xc] sm:$0xf] %v511
  // Predicated region
  $region14: #{_lambda_.12} parent=0 // pred_check
    _
  $region15: #{_lambda_.12} parent=0 // pred_check_branch
    %521 = sbr.rel (0) target = $region17
  $region16: #{_lambda_.12} parent=0 // pred_region
    _
  $region17: #{_lambda_.12} parent=0 // pred_fallthru
    _
  // Predicated region
  $region18: #{_lambda_.12} parent=0 // pred_check
    _
  $region19: #{_lambda_.12} parent=0 // pred_check_branch
    %523 = sbr.rel (0) target = $region21
  $region20: #{_lambda_.12} parent=0 // pred_region
    _
  $region21: #{_lambda_.12} parent=0 // pred_fallthru
    _

// kernel: squeeze.0
$region0: #{squeeze.0}
  %s0 = inlined_call_operand.vmem [shape: f32[50], index: 0, kind: input, shape index: {}]
  %s1 = inlined_call_operand.hbm [shape: f32[2,1,5,5], index: 1, kind: output, shape index: {}]
  $region1: #{squeeze.0} parent=0
    #allocation0 [shape = 'u8[5120]{0}', space=vmem, size = 0x1400, scoped, tag = 'operand span for operand 1']
    #allocation1 [shape = 's32[1]{0}', space=sflag, size = 0x4, scoped, tag = 'scoped memory for squeeze.0']
    #allocation2 [shape = 'u8[40960]{0}', space=vmem, size = 0xa000, scoped, tag = 'scoped mem for output reshape']
    #allocation3 [shape = 'u8[4096]{0}', space=vmem, size = 0x1000, scoped, tag = 'scoped mem for input reshape']
    %2 = vsyncpa [#allocation1], 0
    %s4 = sshll.u32 1, 1
    %s5 = ssub.s32 %s4, 1
    %v6 = vld [vmem:[%s0] sm:%s5]
    %7 = vst [vmem:[#allocation3] sm:%s5] %v6
    %v8 = vld [vmem:[#allocation3] sm:$0x1]
    %vm9 = vcmask 39936
    %10 = vst.msk [vmem:[#allocation2] sm:$0x1] %vm9, %v8
    %v11 = vld [vmem:[#allocation3] sm:$0x1]
    %12 = vrot.lane.b32.xlu0 %v11, 123
    %v13 = vpop.permute.xlu0 %12
    %vm14 = vcmask 39936
    %s15 = scalar_lea.vmem [#allocation2], 8
    %16 = vst.msk [vmem:[%s15] sm:$0x1] %vm14, %v13
    %v17 = vld [vmem:[#allocation3] sm:$0x1]
    %18 = vrot.lane.b32.xlu0 %v17, 118
    %v19 = vpop.permute.xlu0 %18
    %vm20 = vcmask 39936
    %s21 = scalar_lea.vmem [#allocation2], 16
    %22 = vst.msk [vmem:[%s21] sm:$0x1] %vm20, %v19
    %v23 = vld [vmem:[#allocation3] sm:$0x1]
    %24 = vrot.lane.b32.xlu0 %v23, 113
    %v25 = vpop.permute.xlu0 %24
    %vm26 = vcmask 39936
    %s27 = scalar_lea.vmem [#allocation2], 24
    %28 = vst.msk [vmem:[%s27] sm:$0x1] %vm26, %v25
    %v29 = vld [vmem:[#allocation3] sm:$0x1]
    %30 = vrot.lane.b32.xlu0 %v29, 108
    %v31 = vpop.permute.xlu0 %30
    %vm32 = vcmask 39936
    %s33 = scalar_lea.vmem [#allocation2], 32
    %34 = vst.msk [vmem:[%s33] sm:$0x1] %vm32, %v31
    %v35 = vld [vmem:[#allocation3] sm:$0x1]
    %36 = vrot.lane.b32.xlu0 %v35, 103
    %v37 = vpop.permute.xlu0 %36
    %vm38 = vcmask 39936
    %s39 = scalar_lea.vmem [#allocation2], 40
    %40 = vst.msk [vmem:[%s39] sm:$0x1] %vm38, %v37
    %v41 = vld [vmem:[#allocation3] sm:$0x1]
    %42 = vrot.lane.b32.xlu0 %v41, 98
    %v43 = vpop.permute.xlu0 %42
    %vm44 = vcmask 39936
    %s45 = scalar_lea.vmem [#allocation2], 48
    %46 = vst.msk [vmem:[%s45] sm:$0x1] %vm44, %v43
    %v47 = vld [vmem:[#allocation3] sm:$0x1]
    %48 = vrot.lane.b32.xlu0 %v47, 93
    %v49 = vpop.permute.xlu0 %48
    %vm50 = vcmask 39936
    %s51 = scalar_lea.vmem [#allocation2], 56
    %52 = vst.msk [vmem:[%s51] sm:$0x1] %vm50, %v49
    %v53 = vld [vmem:[#allocation3] sm:$0x1]
    %54 = vrot.lane.b32.xlu0 %v53, 88
    %v55 = vpop.permute.xlu0 %54
    %vm56 = vcmask 39936
    %s57 = scalar_lea.vmem [#allocation2], 64
    %58 = vst.msk [vmem:[%s57] sm:$0x1] %vm56, %v55
    %v59 = vld [vmem:[#allocation3] sm:$0x1]
    %60 = vrot.lane.b32.xlu0 %v59, 83
    %v61 = vpop.permute.xlu0 %60
    %vm62 = vcmask 39936
    %s63 = scalar_lea.vmem [#allocation2], 72
    %64 = vst.msk [vmem:[%s63] sm:$0x1] %vm62, %v61
    %s66 = sshll.u32 1, 1
    %s67 = ssub.s32 %s66, 1
    %v69 = vld [vmem:[#allocation2] sm:%s67]
    %s70 = sshll.u32 1, 1
    %s71 = ssub.s32 %s70, 1
    %72 = vst [vmem:[#allocation0] sm:%s71] %v69
    %s73 = scalar_lea.vmem [#allocation2], 8
    %v74 = vld [vmem:[%s73] sm:%s67]
    %s75 = sshll.u32 1, 1
    %s76 = ssub.s32 %s75, 1
    %s77 = scalar_lea.vmem [#allocation0], 1
    %78 = vst [vmem:[%s77] sm:%s76] %v74
    %s79 = scalar_lea.vmem [#allocation2], 16
    %v80 = vld [vmem:[%s79] sm:%s67]
    %s81 = sshll.u32 1, 1
    %s82 = ssub.s32 %s81, 1
    %s83 = smul.addr 1, 2
    %s84 = scalar_lea.vmem [#allocation0], %s83
    %85 = vst [vmem:[%s84] sm:%s82] %v80
    %s86 = scalar_lea.vmem [#allocation2], 24
    %v87 = vld [vmem:[%s86] sm:%s67]
    %s88 = sshll.u32 1, 1
    %s89 = ssub.s32 %s88, 1
    %s90 = smul.addr 1, 3
    %s91 = scalar_lea.vmem [#allocation0], %s90
    %92 = vst [vmem:[%s91] sm:%s89] %v87
    %s93 = scalar_lea.vmem [#allocation2], 32
    %v94 = vld [vmem:[%s93] sm:%s67]
    %s95 = sshll.u32 1, 1
    %s96 = ssub.s32 %s95, 1
    %s97 = smul.addr 1, 4
    %s98 = scalar_lea.vmem [#allocation0], %s97
    %99 = vst [vmem:[%s98] sm:%s96] %v94
    %s100 = scalar_lea.vmem [#allocation2], 40
    %v101 = vld [vmem:[%s100] sm:%s67]
    %s102 = sshll.u32 1, 1
    %s103 = ssub.s32 %s102, 1
    %s104 = smul.addr 1, 5
    %s105 = scalar_lea.vmem [#allocation0], %s104
    %106 = vst [vmem:[%s105] sm:%s103] %v101
    %s107 = scalar_lea.vmem [#allocation2], 48
    %v108 = vld [vmem:[%s107] sm:%s67]
    %s109 = sshll.u32 1, 1
    %s110 = ssub.s32 %s109, 1
    %s111 = smul.addr 1, 6
    %s112 = scalar_lea.vmem [#allocation0], %s111
    %113 = vst [vmem:[%s112] sm:%s110] %v108
    %s114 = scalar_lea.vmem [#allocation2], 56
    %v115 = vld [vmem:[%s114] sm:%s67]
    %s116 = sshll.u32 1, 1
    %s117 = ssub.s32 %s116, 1
    %s118 = smul.addr 1, 7
    %s119 = scalar_lea.vmem [#allocation0], %s118
    %120 = vst [vmem:[%s119] sm:%s117] %v115
    %s121 = scalar_lea.vmem [#allocation2], 64
    %v122 = vld [vmem:[%s121] sm:%s67]
    %s123 = sshll.u32 1, 1
    %s124 = ssub.s32 %s123, 1
    %s125 = smul.addr 1, 8
    %s126 = scalar_lea.vmem [#allocation0], %s125
    %127 = vst [vmem:[%s126] sm:%s124] %v122
    %s128 = scalar_lea.vmem [#allocation2], 72
    %v129 = vld [vmem:[%s128] sm:%s67]
    %s130 = sshll.u32 1, 1
    %s131 = ssub.s32 %s130, 1
    %s132 = smul.addr 1, 9
    %s133 = scalar_lea.vmem [#allocation0], %s132
    %134 = vst [vmem:[%s133] sm:%s131] %v129
    %s136 = ssub.s32 160, 160
    %137 = vsyncadd [#allocation1], %s136
    %s139 = sshll.u32 [#allocation0], 4
    %s140 = int_to_ptr.vmem [resolvable:$true] %s139
    %142 = dma.vmem_to_hbm [thread:$0]  %s140, 160, %s1, [#allocation1]
    %143 = dma.done [#allocation1], 160
    %144 = vsyncpa [#allocation1], 1

// kernel: _lambda_.13
$region0: #{_lambda_.13}
  #allocation0 [shape = 'u32[]', space=smem, size = 0x4, offset = 0x4, fixed_abs, tag = 'smem constant byte address 0x4 - core index']
  #allocation1 [shape = 'u32[144,128]{1,0:T(1,128)}', space=vmem, size = 0x12000, scoped, tag = 'internal scratch']
  #allocation2 [shape = 'f32[1,1]{1,0:T(1,128)S(6)}', space=smem, size = 0x200, scoped, tag = 'scoped memory for _lambda_.13']
  %s0 = inlined_call_operand.vmem [shape: bf16[1,512], index: 0, kind: input, shape index: {}]
  %s1 = inlined_call_operand.vmem [shape: bf16[512,128], index: 1, kind: input, shape index: {}]
  %s2 = inlined_call_operand.<no memory space> [shape: f32[1,1], index: 2, kind: input, shape index: {}]
  %s3 = inlined_call_operand.vmem [shape: f32[1,128], index: 3, kind: output, shape index: {}]
  %s4 = sld [smem:[#allocation0]]
  $region22: #{_lambda_.13} parent=0
    _
  %s6 = ssub.s32 1, %s4
  %s7 = scalar_select 0, %s6, %s4
  %8 = sst [smem:[#allocation2]] %s2
  // Predicated region
  $region2: #{_lambda_.13} parent=0 // pred_check
    _
  $region3: #{_lambda_.13} parent=0 // pred_check_branch
    %10 = sbr.rel (0) target = $region5
  $region4: #{_lambda_.13} parent=0 // pred_region
    _
  $region5: #{_lambda_.13} parent=0 // pred_fallthru
    _
  // Predicated region
  $region6: #{_lambda_.13} parent=0 // pred_check
    _
  $region7: #{_lambda_.13} parent=0 // pred_check_branch
    %12 = sbr.rel (0) target = $region9
  $region8: #{_lambda_.13} parent=0 // pred_region
    _
  $region9: #{_lambda_.13} parent=0 // pred_fallthru
    _
  // Predicated region
  $region10: #{_lambda_.13} parent=0 // pred_check
    _
  $region11: #{_lambda_.13} parent=0 // pred_check_branch
    %14 = sbr.rel (0) target = $region13
  $region12: #{_lambda_.13} parent=0 // pred_region
    _
  $region13: #{_lambda_.13} parent=0 // pred_fallthru
    _
  %v16 = vld [vmem:[%s0] sm:$0xf]
  %v17 = vld [vmem:[%s1] sm:$0xf]
  %v18 = vld [vmem:[%s1 + $0x4] sm:$0xf]
  %v19 = vld [vmem:[%s1 + $0x8] sm:$0xf]
  %v20 = vld [vmem:[%s1 + $0xc] sm:$0xf]
  %v21 = vld [vmem:[%s1 + $0x10] sm:$0xf]
  %v22 = vld [vmem:[%s1 + $0x14] sm:$0xf]
  %v23 = vld [vmem:[%s1 + $0x18] sm:$0xf]
  %v24 = vld [vmem:[%s1 + $0x1c] sm:$0xf]
  %v25 = vld [vmem:[%s1 + $0x20] sm:$0xf]
  %v26 = vld [vmem:[%s1 + $0x24] sm:$0xf]
  %v27 = vld [vmem:[%s1 + $0x28] sm:$0xf]
  %v28 = vld [vmem:[%s1 + $0x2c] sm:$0xf]
  %v29 = vld [vmem:[%s1 + $0x30] sm:$0xf]
  %v30 = vld [vmem:[%s1 + $0x34] sm:$0xf]
  %v31 = vld [vmem:[%s1 + $0x38] sm:$0xf]
  %v32 = vld [vmem:[%s1 + $0x3c] sm:$0xf]
  %v33 = vld [vmem:[%s1 + $0x40] sm:$0xf]
  %v34 = vld [vmem:[%s1 + $0x44] sm:$0xf]
  %v35 = vld [vmem:[%s1 + $0x48] sm:$0xf]
  %v36 = vld [vmem:[%s1 + $0x4c] sm:$0xf]
  %v37 = vld [vmem:[%s1 + $0x50] sm:$0xf]
  %v38 = vld [vmem:[%s1 + $0x54] sm:$0xf]
  %v39 = vld [vmem:[%s1 + $0x58] sm:$0xf]
  %v40 = vld [vmem:[%s1 + $0x5c] sm:$0xf]
  %v41 = vld [vmem:[%s1 + $0x60] sm:$0xf]
  %v42 = vld [vmem:[%s1 + $0x64] sm:$0xf]
  %v43 = vld [vmem:[%s1 + $0x68] sm:$0xf]
  %v44 = vld [vmem:[%s1 + $0x6c] sm:$0xf]
  %v45 = vld [vmem:[%s1 + $0x70] sm:$0xf]
  %v46 = vld [vmem:[%s1 + $0x74] sm:$0xf]
  %v47 = vld [vmem:[%s1 + $0x78] sm:$0xf]
  %v48 = vld [vmem:[%s1 + $0x7c] sm:$0xf]
  %v49 = vld [vmem:[%s1 + $0x80] sm:$0xf]
  %v50 = vld [vmem:[%s1 + $0x84] sm:$0xf]
  %v51 = vld [vmem:[%s1 + $0x88] sm:$0xf]
  %v52 = vld [vmem:[%s1 + $0x8c] sm:$0xf]
  %v53 = vld [vmem:[%s1 + $0x90] sm:$0xf]
  %v54 = vld [vmem:[%s1 + $0x94] sm:$0xf]
  %v55 = vld [vmem:[%s1 + $0x98] sm:$0xf]
  %v56 = vld [vmem:[%s1 + $0x9c] sm:$0xf]
  %v57 = vld [vmem:[%s1 + $0xa0] sm:$0xf]
  %v58 = vld [vmem:[%s1 + $0xa4] sm:$0xf]
  %v59 = vld [vmem:[%s1 + $0xa8] sm:$0xf]
  %v60 = vld [vmem:[%s1 + $0xac] sm:$0xf]
  %v61 = vld [vmem:[%s1 + $0xb0] sm:$0xf]
  %v62 = vld [vmem:[%s1 + $0xb4] sm:$0xf]
  %v63 = vld [vmem:[%s1 + $0xb8] sm:$0xf]
  %v64 = vld [vmem:[%s1 + $0xbc] sm:$0xf]
  %v65 = vld [vmem:[%s1 + $0xc0] sm:$0xf]
  %v66 = vld [vmem:[%s1 + $0xc4] sm:$0xf]
  %v67 = vld [vmem:[%s1 + $0xc8] sm:$0xf]
  %v68 = vld [vmem:[%s1 + $0xcc] sm:$0xf]
  %v69 = vld [vmem:[%s1 + $0xd0] sm:$0xf]
  %v70 = vld [vmem:[%s1 + $0xd4] sm:$0xf]
  %v71 = vld [vmem:[%s1 + $0xd8] sm:$0xf]
  %v72 = vld [vmem:[%s1 + $0xdc] sm:$0xf]
  %v73 = vld [vmem:[%s1 + $0xe0] sm:$0xf]
  %v74 = vld [vmem:[%s1 + $0xe4] sm:$0xf]
  %v75 = vld [vmem:[%s1 + $0xe8] sm:$0xf]
  %v76 = vld [vmem:[%s1 + $0xec] sm:$0xf]
  %v77 = vld [vmem:[%s1 + $0xf0] sm:$0xf]
  %v78 = vld [vmem:[%s1 + $0xf4] sm:$0xf]
  %v79 = vld [vmem:[%s1 + $0xf8] sm:$0xf]
  %v80 = vld [vmem:[%s1 + $0xfc] sm:$0xf]
  %s81 = sld [smem:[#allocation2]]
  %v82 = vstv %s81
  %v85 = vunpack.c.l.s4 1966171168
  %v86 = vunpack.c.0.s8 %v85
  %v87 = vlaneseq
  %v88 = vshrl.u32 %v87, 7
  %v89 = vsub.s32 %v86, %v88
  %v90 = vrot.slane %v16, %v89
  %v91 = vcombine.high %v90, %v90
  %v93 = vunpack.c.l.s4 1966171168
  %v94 = vunpack.c.0.s8 %v93
  %v95 = vlaneseq
  %v96 = vshrl.u32 %v95, 7
  %v97 = vsub.s32 %v94, %v96
  %v98 = vrot.slane %v90, %v97
  %v100 = vunpack.c.l.s4 1966171168
  %v101 = vunpack.c.0.s8 %v100
  %v102 = vlaneseq
  %v103 = vshrl.u32 %v102, 7
  %v104 = vsub.s32 %v101, %v103
  %v105 = vrot.slane %v91, %v104
  %v106 = vcombine.high %v98, %v98
  %v107 = vcombine.high %v105, %v105
  %v176 = vunpack.c.l.b16 %v17
  %v177 = vunpack.c.l.b16 %v18
  %v178 = vunpack.c.l.b16 %v19
  %v179 = vunpack.c.l.b16 %v20
  %v180 = vunpack.c.l.b16 %v21
  %v181 = vunpack.c.l.b16 %v22
  %v182 = vunpack.c.l.b16 %v23
  %v183 = vunpack.c.l.b16 %v24
  %v184 = vunpack.c.l.b16 %v25
  %v185 = vunpack.c.l.b16 %v26
  %v186 = vunpack.c.l.b16 %v27
  %v187 = vunpack.c.l.b16 %v28
  %v188 = vunpack.c.l.b16 %v29
  %v189 = vunpack.c.l.b16 %v30
  %v190 = vunpack.c.l.b16 %v31
  %v191 = vunpack.c.l.b16 %v32
  %v192 = vunpack.c.l.b16 %v33
  %v193 = vunpack.c.l.b16 %v34
  %v194 = vunpack.c.l.b16 %v35
  %v195 = vunpack.c.l.b16 %v36
  %v196 = vunpack.c.l.b16 %v37
  %v197 = vunpack.c.l.b16 %v38
  %v198 = vunpack.c.l.b16 %v39
  %v199 = vunpack.c.l.b16 %v40
  %v200 = vunpack.c.l.b16 %v41
  %v201 = vunpack.c.l.b16 %v42
  %v202 = vunpack.c.l.b16 %v43
  %v203 = vunpack.c.l.b16 %v44
  %v204 = vunpack.c.l.b16 %v45
  %v205 = vunpack.c.l.b16 %v46
  %v206 = vunpack.c.l.b16 %v47
  %v207 = vunpack.c.l.b16 %v48
  %v208 = vunpack.c.l.b16 %v49
  %v209 = vunpack.c.l.b16 %v50
  %v210 = vunpack.c.l.b16 %v51
  %v211 = vunpack.c.l.b16 %v52
  %v212 = vunpack.c.l.b16 %v53
  %v213 = vunpack.c.l.b16 %v54
  %v214 = vunpack.c.l.b16 %v55
  %v215 = vunpack.c.l.b16 %v56
  %v216 = vunpack.c.l.b16 %v57
  %v217 = vunpack.c.l.b16 %v58
  %v218 = vunpack.c.l.b16 %v59
  %v219 = vunpack.c.l.b16 %v60
  %v220 = vunpack.c.l.b16 %v61
  %v221 = vunpack.c.l.b16 %v62
  %v222 = vunpack.c.l.b16 %v63
  %v223 = vunpack.c.l.b16 %v64
  %v224 = vunpack.c.l.b16 %v65
  %v225 = vunpack.c.l.b16 %v66
  %v226 = vunpack.c.l.b16 %v67
  %v227 = vunpack.c.l.b16 %v68
  %v228 = vunpack.c.l.b16 %v69
  %v229 = vunpack.c.l.b16 %v70
  %v230 = vunpack.c.l.b16 %v71
  %v231 = vunpack.c.l.b16 %v72
  %v232 = vunpack.c.l.b16 %v73
  %v233 = vunpack.c.l.b16 %v74
  %v234 = vunpack.c.l.b16 %v75
  %v235 = vunpack.c.l.b16 %v76
  %v236 = vunpack.c.l.b16 %v77
  %v237 = vunpack.c.l.b16 %v78
  %v238 = vunpack.c.l.b16 %v79
  %v239 = vunpack.c.l.b16 %v80
  %v240 = vpack.c.b16 %v177, %v176
  %v241 = vpack.c.b16 %v179, %v178
  %v242 = vpack.c.b16 %v181, %v180
  %v243 = vpack.c.b16 %v183, %v182
  %v244 = vpack.c.b16 %v185, %v184
  %v245 = vpack.c.b16 %v187, %v186
  %v246 = vpack.c.b16 %v189, %v188
  %v247 = vpack.c.b16 %v191, %v190
  %v248 = vpack.c.b16 %v193, %v192
  %v249 = vpack.c.b16 %v195, %v194
  %v250 = vpack.c.b16 %v197, %v196
  %v251 = vpack.c.b16 %v199, %v198
  %v252 = vpack.c.b16 %v201, %v200
  %v253 = vpack.c.b16 %v203, %v202
  %v254 = vpack.c.b16 %v205, %v204
  %v255 = vpack.c.b16 %v207, %v206
  %v256 = vpack.c.b16 %v209, %v208
  %v257 = vpack.c.b16 %v211, %v210
  %v258 = vpack.c.b16 %v213, %v212
  %v259 = vpack.c.b16 %v215, %v214
  %v260 = vpack.c.b16 %v217, %v216
  %v261 = vpack.c.b16 %v219, %v218
  %v262 = vpack.c.b16 %v221, %v220
  %v263 = vpack.c.b16 %v223, %v222
  %v264 = vpack.c.b16 %v225, %v224
  %v265 = vpack.c.b16 %v227, %v226
  %v266 = vpack.c.b16 %v229, %v228
  %v267 = vpack.c.b16 %v231, %v230
  %v268 = vpack.c.b16 %v233, %v232
  %v269 = vpack.c.b16 %v235, %v234
  %v270 = vpack.c.b16 %v237, %v236
  %v271 = vpack.c.b16 %v239, %v238
  %304 = vmatprep.subr.bf16.mxu0 0
  %305 = vmatpush1.bf16.msra.mxu0 %v247
  %306 = vmatprep.subr.bf16.mxu0 0
  %307 = vmatpush1.bf16.msra.mxu0 %v246
  %308 = vmatprep.subr.bf16.mxu0 0
  %309 = vmatpush1.bf16.msra.mxu0 %v245
  %310 = vmatprep.subr.bf16.mxu0 0
  %311 = vmatpush1.bf16.msra.mxu0 %v244
  %312 = vmatprep.subr.bf16.mxu0 0
  %313 = vmatpush1.bf16.msra.mxu0 %v243
  %314 = vmatprep.subr.bf16.mxu0 0
  %315 = vmatpush1.bf16.msra.mxu0 %v242
  %316 = vmatprep.subr.bf16.mxu0 0
  %317 = vmatpush1.bf16.msra.mxu0 %v241
  %318 = vmatprep.subr.bf16.mxu0 0
  %319 = vmatpush1.bf16.msra.mxu0 %v240
  %320 = vmatprep.subr.bf16.mxu0 0
  %321 = vmatpush2.bf16.msra.mxu0 %v255
  %322 = vmatprep.subr.bf16.mxu0 0
  %323 = vmatpush2.bf16.msra.mxu0 %v254
  %324 = vmatprep.subr.bf16.mxu0 0
  %325 = vmatpush2.bf16.msra.mxu0 %v253
  %326 = vmatprep.subr.bf16.mxu0 0
  %327 = vmatpush2.bf16.msra.mxu0 %v252
  %328 = vmatprep.subr.bf16.mxu0 0
  %329 = vmatpush2.bf16.msra.mxu0 %v251
  %330 = vmatprep.subr.bf16.mxu0 0
  %331 = vmatpush2.bf16.msra.mxu0 %v250
  %332 = vmatprep.subr.bf16.mxu0 0
  %333 = vmatpush2.bf16.msra.mxu0 %v249
  %334 = vmatprep.subr.bf16.mxu0 0
  %335 = vmatpush2.bf16.msra.mxu0 %v248
  %336 = vmatprep.mubr.bf16.mxu0 %v105
  %337 = vmatmul.mubr.bf16.gmra.mxu0 %v98
  %v338 = vpop.f32.mrf.mxu0
  %v339 = vadd.f32 %v82, %v338
  %v340 = vpop.f32.mrf.mxu0
  %v341 = vpop.f32.mrf.mxu0
  %v342 = vpop.f32.mrf.mxu0
  %343 = vdwg.mxu0
  %344 = vmatprep.subr.bf16.mxu0 0
  %345 = vmatpush1.bf16.msra.mxu0 %v263
  %346 = vmatprep.subr.bf16.mxu0 0
  %347 = vmatpush1.bf16.msra.mxu0 %v262
  %348 = vmatprep.subr.bf16.mxu0 0
  %349 = vmatpush1.bf16.msra.mxu0 %v261
  %350 = vmatprep.subr.bf16.mxu0 0
  %351 = vmatpush1.bf16.msra.mxu0 %v260
  %352 = vmatprep.subr.bf16.mxu0 0
  %353 = vmatpush1.bf16.msra.mxu0 %v259
  %354 = vmatprep.subr.bf16.mxu0 0
  %355 = vmatpush1.bf16.msra.mxu0 %v258
  %356 = vmatprep.subr.bf16.mxu0 0
  %357 = vmatpush1.bf16.msra.mxu0 %v257
  %358 = vmatprep.subr.bf16.mxu0 0
  %359 = vmatpush1.bf16.msra.mxu0 %v256
  %360 = vmatprep.subr.bf16.mxu0 0
  %361 = vmatpush2.bf16.msra.mxu0 %v271
  %362 = vmatprep.subr.bf16.mxu0 0
  %363 = vmatpush2.bf16.msra.mxu0 %v270
  %364 = vmatprep.subr.bf16.mxu0 0
  %365 = vmatpush2.bf16.msra.mxu0 %v269
  %366 = vmatprep.subr.bf16.mxu0 0
  %367 = vmatpush2.bf16.msra.mxu0 %v268
  %368 = vmatprep.subr.bf16.mxu0 0
  %369 = vmatpush2.bf16.msra.mxu0 %v267
  %370 = vmatprep.subr.bf16.mxu0 0
  %371 = vmatpush2.bf16.msra.mxu0 %v266
  %372 = vmatprep.subr.bf16.mxu0 0
  %373 = vmatpush2.bf16.msra.mxu0 %v265
  %374 = vmatprep.subr.bf16.mxu0 0
  %375 = vmatpush2.bf16.msra.mxu0 %v264
  %376 = vmatprep.mubr.bf16.mxu0 %v107
  %377 = vmatmul.mubr.bf16.gmra.mxu0 %v106
  %v378 = vpop.f32.mrf.mxu0
  %v379 = vadd.f32 %v339, %v378
  %v380 = vpop.f32.mrf.mxu0
  %v381 = vpop.f32.mrf.mxu0
  %v382 = vpop.f32.mrf.mxu0
  %383 = vdwg.mxu0
  %384 = vst [vmem:[%s3] sm:$0x1] %v379
  // Predicated region
  $region14: #{_lambda_.13} parent=0 // pred_check
    _
  $region15: #{_lambda_.13} parent=0 // pred_check_branch
    %386 = sbr.rel (0) target = $region17
  $region16: #{_lambda_.13} parent=0 // pred_region
    _
  $region17: #{_lambda_.13} parent=0 // pred_fallthru
    _
  // Predicated region
  $region18: #{_lambda_.13} parent=0 // pred_check
    _
  $region19: #{_lambda_.13} parent=0 // pred_check_branch
    %388 = sbr.rel (0) target = $region21
  $region20: #{_lambda_.13} parent=0 // pred_region
    _
  $region21: #{_lambda_.13} parent=0 // pred_fallthru
    _

</llo_original>
